<compile_context>
chip_gen: v6e
topology: v6e:2x2x1
jax: 0.10.0
libtpu: 0.0.40
codegen_flags: <defaults>
</compile_context>

<pallas_src>
import functools

import jax
import jax.numpy as jnp
from jax import lax
from jax.experimental import pallas as pl
from jax.experimental.pallas import tpu as pltpu


P = 128  # per-gate lane padding: each gate occupies one full 128-lane slab


# ---------------------------------------------------------------------------
# Fused Pallas kernel
# ---------------------------------------------------------------------------
def _autoencoder_kernel(x_ref,
                        wih1_ref, whh1_ref, b1_ref,
                        wih2_ref, whh2_ref, b2_ref,
                        wihd_ref, whhd_ref, bd_ref,
                        wfc_ref, bfc_ref,
                        enc_ref, dec_ref):
    """Fused AutoEncoder forward.

    x_ref:   (T, B, F)   time-major encoder input
    W*_ref:  pre-transposed, per-gate 128-lane padded weights:
             wih1 (F, 4P); whh1/wih2/whh2/wihd/whhd (P, 4P); biases (1, 4P)
             wfc (P, F); bfc (1, F)
    enc_ref: (B, 8)      final hidden of encoder LSTM2
    dec_ref: (B, S, F)   decoded output (S = seq_len)
    Gate order follows PyTorch: i, f, g, o.  Hidden/cell states are carried at
    padded width P; the padded lanes stay exactly zero throughout.
    """
    T, B, _ = x_ref.shape
    S = dec_ref.shape[1]
    Henc = enc_ref.shape[1]
    f32 = jnp.float32

    wih1 = wih1_ref[...]; whh1 = whh1_ref[...]; b1 = b1_ref[...]
    wih2 = wih2_ref[...]; whh2 = whh2_ref[...]; b2 = b2_ref[...]
    wihd = wihd_ref[...]; whhd = whhd_ref[...]; bd = bd_ref[...]
    wfc = wfc_ref[...];  bfc = bfc_ref[...]

    def cell(gx, h, c, whh):
        # gx already contains x@Wih + (b_ih+b_hh); only h@Whh is on the chain.
        gates = gx + jnp.dot(h, whh, preferred_element_type=f32)   # (rows, 4P)
        i = jax.nn.sigmoid(gates[:, 0 * P:1 * P])   # lane-aligned slices
        f = jax.nn.sigmoid(gates[:, 1 * P:2 * P])
        g = jnp.tanh(gates[:, 2 * P:3 * P])
        o = jax.nn.sigmoid(gates[:, 3 * P:4 * P])
        c = f * c + i * g
        h = o * jnp.tanh(c)
        return h, c

    # ---- Encoder: hoist the layer-1 input projection off the serial chain,
    #      then run both LSTM layers step-by-step (fully unrolled).
    gx1 = [jnp.dot(x_ref[t], wih1, preferred_element_type=f32) + b1
           for t in range(T)]

    h1 = jnp.zeros((B, P), f32); c1 = jnp.zeros((B, P), f32)
    h2 = jnp.zeros((B, P), f32); c2 = jnp.zeros((B, P), f32)
    for t in range(T):
        h1, c1 = cell(gx1[t], h1, c1, whh1)
        gx2 = jnp.dot(h1, wih2, preferred_element_type=f32) + b2
        h2, c2 = cell(gx2, h2, c2, whh2)

    # encoded = final hidden state of encoder LSTM2 (valid lanes 0:8)
    enc_ref[...] = h2[:, :Henc]

    # ---- Decoder: batch_first=False quirk -> recurrence over dim 0 (=B),
    #      batch = seq_len.  Input at step b is encoded[b] broadcast over S.
    gxd = jnp.dot(h2, wihd, preferred_element_type=f32) + bd        # (B, 4P)
    hd = jnp.zeros((S, P), f32); cd = jnp.zeros((S, P), f32)
    for b in range(B):
        hd, cd = cell(gxd[b:b + 1, :], hd, cd, whhd)
        # Final FC fused on the VMEM-resident decoder hidden state.
        dec_ref[b] = jnp.dot(hd, wfc, preferred_element_type=f32) + bfc


# ---------------------------------------------------------------------------
# Wrapper
# ---------------------------------------------------------------------------
_VMEM = pl.BlockSpec(memory_space=pltpu.MemorySpace.VMEM)


def autoencoder_forward(packed, x, seq_len):
    """x: (B, seq_len, num_features), matching the PyTorch batch_first input."""
    B, _, F = x.shape
    x_tm = jnp.transpose(x, (1, 0, 2))          # time-major (T, B, F), once

    enc, dec = pl.pallas_call(
        _autoencoder_kernel,
        out_shape=(jax.ShapeDtypeStruct((B, 8), jnp.float32),
                   jax.ShapeDtypeStruct((B, seq_len, F), jnp.float32)),
        in_specs=[_VMEM] * 12,
        out_specs=(_VMEM, _VMEM),
    )(x_tm,
      *packed["enc_lstm1"], *packed["enc_lstm2"], *packed["dec_lstm1"],
      packed["fc_w"], packed["fc_b"])

    encoded = enc.reshape(B, 1, 8)              # == hidden.reshape(-1, 1, 8)
    return encoded, dec


# ---------------------------------------------------------------------------
# One-time parameter packing (transpose, bias-combine, per-gate 128-lane pad)
# ---------------------------------------------------------------------------
def _pack_lstm(w_ih, w_hh, b_ih, b_hh, in_rows=None):
    """PyTorch-layout LSTM weights -> kernel layout.

    Returns wih (rows, 4P), whh (P, 4P), b (1, 4P); gate g lives in columns
    [g*P, g*P+H).  Padded rows/columns are zero, so the padded recurrence is
    numerically identical to the unpadded one.
    """
    H = w_hh.shape[1]
    D = w_ih.shape[1]
    rows = D if in_rows is None else in_rows
    wih_t = jnp.transpose(w_ih)   # (D, 4H)
    whh_t = jnp.transpose(w_hh)   # (H, 4H)
    b = b_ih + b_hh
    wih_p = jnp.zeros((rows, 4 * P), jnp.float32)
    whh_p = jnp.zeros((P, 4 * P), jnp.float32)
    b_p = jnp.zeros((1, 4 * P), jnp.float32)
    for g in range(4):
        wih_p = wih_p.at[:D, g * P:g * P + H].set(wih_t[:, g * H:(g + 1) * H])
        whh_p = whh_p.at[:H, g * P:g * P + H].set(whh_t[:, g * H:(g + 1) * H])
        b_p = b_p.at[0, g * P:g * P + H].set(b[g * H:(g + 1) * H])
    return wih_p, whh_p, b_p


def pack_params(raw):
    """Done once at init time; the jitted forward sees only packed arrays."""
    F, H_fc = raw["fc_w"].shape
    wfc = jnp.zeros((P, F), jnp.float32).at[:H_fc, :].set(
        jnp.transpose(raw["fc_w"]))
    return {
        "enc_lstm1": _pack_lstm(*raw["enc_lstm1"]),              # input rows = F
        "enc_lstm2": _pack_lstm(*raw["enc_lstm2"], in_rows=P),   # input = padded h1
        "dec_lstm1": _pack_lstm(*raw["dec_lstm1"], in_rows=P),   # input = padded h2
        "fc_w": wfc,
        "fc_b": raw["fc_b"].reshape(1, F),
    }


# ---------------------------------------------------------------------------
# Deterministic parameter init (PyTorch-style uniform(-1/sqrt(H), 1/sqrt(H)))
# ---------------------------------------------------------------------------
def _init_lstm(key, input_size, hidden_size):
    k = 1.0 / float(hidden_size) ** 0.5
    ks = jax.random.split(key, 4)
    w_ih = jax.random.uniform(ks[0], (4 * hidden_size, input_size), jnp.float32, -k, k)
    w_hh = jax.random.uniform(ks[1], (4 * hidden_size, hidden_size), jnp.float32, -k, k)
    b_ih = jax.random.uniform(ks[2], (4 * hidden_size,), jnp.float32, -k, k)
    b_hh = jax.random.uniform(ks[3], (4 * hidden_size,), jnp.float32, -k, k)
    return (w_ih, w_hh, b_ih, b_hh)


def init_params(key, num_features):
    k1, k2, k3, k4 = jax.random.split(key, 4)
    kf = 1.0 / 24.0 ** 0.5
    kw, kb = jax.random.split(k4)
    return {
        "enc_lstm1": _init_lstm(k1, num_features, 24),
        "enc_lstm2": _init_lstm(k2, 24, 8),
        "dec_lstm1": _init_lstm(k3, 8, 24),
        "fc_w": jax.random.uniform(kw, (num_features, 24), jnp.float32, -kf, kf),
        "fc_b": jax.random.uniform(kb, (num_features,), jnp.float32, -kf, kf),
    }


# ---------------------------------------------------------------------------
# Pure-JAX reference (mirrors the PyTorch LSTM math) for correctness checking
# ---------------------------------------------------------------------------
def _lstm_ref(x_tbd, w_ih, w_hh, b_ih, b_hh):
    H = w_hh.shape[1]
    B = x_tbd.shape[1]

    def step(carry, x_t):
        h, c = carry
        gates = x_t @ w_ih.T + h @ w_hh.T + b_ih + b_hh
        i, f, g, o = jnp.split(gates, 4, axis=-1)
        i, f, o = jax.nn.sigmoid(i), jax.nn.sigmoid(f), jax.nn.sigmoid(o)
        g = jnp.tanh(g)
        c = f * c + i * g
        h = o * jnp.tanh(c)
        return (h, c), h

    (hT, _), out = lax.scan(step, (jnp.zeros((B, H)), jnp.zeros((B, H))), x_tbd)
    return out, hT


def autoencoder_ref(params, x, seq_len):
    B = x.shape[0]
    out1, _ = _lstm_ref(jnp.transpose(x, (1, 0, 2)), *params["enc_lstm1"])
    _, h2 = _lstm_ref(out1, *params["enc_lstm2"])
    encoded = h2.reshape(B, 1, 8)
    dec_in = jnp.tile(encoded, (1, seq_len, 1))
    dec_out, _ = _lstm_ref(dec_in, *params["dec_lstm1"])
    decoded = dec_out @ params["fc_w"].T + params["fc_b"]
    return encoded, decoded


# ---------------------------------------------------------------------------
if __name__ == "__main__":
    seq_len, num_features, batch = 5, 26, 2
    key = jax.random.PRNGKey(0)
    k_params, k_x = jax.random.split(key)

    raw = init_params(k_params, num_features)
    packed = jax.device_put(pack_params(raw))   # one-time weight prep
    x = jax.random.normal(k_x, (batch, seq_len, num_features), jnp.float32)

    fwd = jax.jit(functools.partial(autoencoder_forward, seq_len=seq_len))
    encoded, decoded = fwd(packed, x)
    jax.block_until_ready((encoded, decoded))

    assert encoded.shape == (batch, 1, 8)
    assert decoded.shape == (batch, seq_len, num_features)

    enc_ref, dec_ref = autoencoder_ref(raw, x, seq_len)
    assert float(jnp.max(jnp.abs(encoded - enc_ref))) < 1e-4
    assert float(jnp.max(jnp.abs(decoded - dec_ref))) < 1e-4

    print("KERNEL_OK")
</pallas_src>

<mosaic_0001>
module attributes {stable_mosaic.version = 11 : i64} {
  func.func @_autoencoder_kernel(%arg0: memref<5x2x26xf32, #tpu.memory_space<vmem>>, %arg1: memref<26x512xf32, #tpu.memory_space<vmem>>, %arg2: memref<128x512xf32, #tpu.memory_space<vmem>>, %arg3: memref<1x512xf32, #tpu.memory_space<vmem>>, %arg4: memref<128x512xf32, #tpu.memory_space<vmem>>, %arg5: memref<128x512xf32, #tpu.memory_space<vmem>>, %arg6: memref<1x512xf32, #tpu.memory_space<vmem>>, %arg7: memref<128x512xf32, #tpu.memory_space<vmem>>, %arg8: memref<128x512xf32, #tpu.memory_space<vmem>>, %arg9: memref<1x512xf32, #tpu.memory_space<vmem>>, %arg10: memref<128x26xf32, #tpu.memory_space<vmem>>, %arg11: memref<1x26xf32, #tpu.memory_space<vmem>>, %arg12: memref<2x8xf32, #tpu.memory_space<vmem>>, %arg13: memref<2x5x26xf32, #tpu.memory_space<vmem>>) attributes {dimension_semantics = [], scalar_prefetch = 0 : i64, scratch_operands = 0 : i64, tpu.core_type = #tpu.core_type<tc>} {
    %c0 = arith.constant 0 : index
    %c0_0 = arith.constant 0 : index
    %0 = vector.load %arg1[%c0, %c0_0] : memref<26x512xf32, #tpu.memory_space<vmem>>, vector<26x512xf32>
    %c0_1 = arith.constant 0 : index
    %c0_2 = arith.constant 0 : index
    %1 = vector.load %arg2[%c0_1, %c0_2] : memref<128x512xf32, #tpu.memory_space<vmem>>, vector<128x512xf32>
    %c0_3 = arith.constant 0 : index
    %c0_4 = arith.constant 0 : index
    %2 = vector.load %arg3[%c0_3, %c0_4] : memref<1x512xf32, #tpu.memory_space<vmem>>, vector<1x512xf32>
    %c0_5 = arith.constant 0 : index
    %c0_6 = arith.constant 0 : index
    %3 = vector.load %arg4[%c0_5, %c0_6] : memref<128x512xf32, #tpu.memory_space<vmem>>, vector<128x512xf32>
    %c0_7 = arith.constant 0 : index
    %c0_8 = arith.constant 0 : index
    %4 = vector.load %arg5[%c0_7, %c0_8] : memref<128x512xf32, #tpu.memory_space<vmem>>, vector<128x512xf32>
    %c0_9 = arith.constant 0 : index
    %c0_10 = arith.constant 0 : index
    %5 = vector.load %arg6[%c0_9, %c0_10] : memref<1x512xf32, #tpu.memory_space<vmem>>, vector<1x512xf32>
    %c0_11 = arith.constant 0 : index
    %c0_12 = arith.constant 0 : index
    %6 = vector.load %arg7[%c0_11, %c0_12] : memref<128x512xf32, #tpu.memory_space<vmem>>, vector<128x512xf32>
    %c0_13 = arith.constant 0 : index
    %c0_14 = arith.constant 0 : index
    %7 = vector.load %arg8[%c0_13, %c0_14] : memref<128x512xf32, #tpu.memory_space<vmem>>, vector<128x512xf32>
    %c0_15 = arith.constant 0 : index
    %c0_16 = arith.constant 0 : index
    %8 = vector.load %arg9[%c0_15, %c0_16] : memref<1x512xf32, #tpu.memory_space<vmem>>, vector<1x512xf32>
    %c0_17 = arith.constant 0 : index
    %c0_18 = arith.constant 0 : index
    %9 = vector.load %arg10[%c0_17, %c0_18] : memref<128x26xf32, #tpu.memory_space<vmem>>, vector<128x26xf32>
    %c0_19 = arith.constant 0 : index
    %c0_20 = arith.constant 0 : index
    %10 = vector.load %arg11[%c0_19, %c0_20] : memref<1x26xf32, #tpu.memory_space<vmem>>, vector<1x26xf32>
    %c0_21 = arith.constant 0 : index
    %c0_22 = arith.constant 0 : index
    %c0_23 = arith.constant 0 : index
    %11 = vector.load %arg0[%c0_21, %c0_22, %c0_23] : memref<5x2x26xf32, #tpu.memory_space<vmem>>, vector<1x2x26xf32>
    %12 = vector.shape_cast %11 : vector<1x2x26xf32> to vector<2x26xf32>
    %cst = arith.constant dense<0.000000e+00> : vector<2x512xf32>
    %13 = tpu.matmul %12, %0, %cst {dimension_numbers = #tpu.dot_dimension_numbers<[1], [0], [0], [1], [0, 0, 1, 1], [], []>} : vector<2x26xf32>, vector<26x512xf32>, vector<2x512xf32> -> vector<2x512xf32>
    %14 = vector.broadcast %2 : vector<1x512xf32> to vector<2x512xf32>
    %15 = arith.addf %13, %14 : vector<2x512xf32>
    %c1 = arith.constant 1 : index
    %c0_24 = arith.constant 0 : index
    %c0_25 = arith.constant 0 : index
    %16 = vector.load %arg0[%c1, %c0_24, %c0_25] : memref<5x2x26xf32, #tpu.memory_space<vmem>>, vector<1x2x26xf32>
    %17 = vector.shape_cast %16 : vector<1x2x26xf32> to vector<2x26xf32>
    %cst_26 = arith.constant dense<0.000000e+00> : vector<2x512xf32>
    %18 = tpu.matmul %17, %0, %cst_26 {dimension_numbers = #tpu.dot_dimension_numbers<[1], [0], [0], [1], [0, 0, 1, 1], [], []>} : vector<2x26xf32>, vector<26x512xf32>, vector<2x512xf32> -> vector<2x512xf32>
    %19 = vector.broadcast %2 : vector<1x512xf32> to vector<2x512xf32>
    %20 = arith.addf %18, %19 : vector<2x512xf32>
    %c2 = arith.constant 2 : index
    %c0_27 = arith.constant 0 : index
    %c0_28 = arith.constant 0 : index
    %21 = vector.load %arg0[%c2, %c0_27, %c0_28] : memref<5x2x26xf32, #tpu.memory_space<vmem>>, vector<1x2x26xf32>
    %22 = vector.shape_cast %21 : vector<1x2x26xf32> to vector<2x26xf32>
    %cst_29 = arith.constant dense<0.000000e+00> : vector<2x512xf32>
    %23 = tpu.matmul %22, %0, %cst_29 {dimension_numbers = #tpu.dot_dimension_numbers<[1], [0], [0], [1], [0, 0, 1, 1], [], []>} : vector<2x26xf32>, vector<26x512xf32>, vector<2x512xf32> -> vector<2x512xf32>
    %24 = vector.broadcast %2 : vector<1x512xf32> to vector<2x512xf32>
    %25 = arith.addf %23, %24 : vector<2x512xf32>
    %c3 = arith.constant 3 : index
    %c0_30 = arith.constant 0 : index
    %c0_31 = arith.constant 0 : index
    %26 = vector.load %arg0[%c3, %c0_30, %c0_31] : memref<5x2x26xf32, #tpu.memory_space<vmem>>, vector<1x2x26xf32>
    %27 = vector.shape_cast %26 : vector<1x2x26xf32> to vector<2x26xf32>
    %cst_32 = arith.constant dense<0.000000e+00> : vector<2x512xf32>
    %28 = tpu.matmul %27, %0, %cst_32 {dimension_numbers = #tpu.dot_dimension_numbers<[1], [0], [0], [1], [0, 0, 1, 1], [], []>} : vector<2x26xf32>, vector<26x512xf32>, vector<2x512xf32> -> vector<2x512xf32>
    %29 = vector.broadcast %2 : vector<1x512xf32> to vector<2x512xf32>
    %30 = arith.addf %28, %29 : vector<2x512xf32>
    %c4 = arith.constant 4 : index
    %c0_33 = arith.constant 0 : index
    %c0_34 = arith.constant 0 : index
    %31 = vector.load %arg0[%c4, %c0_33, %c0_34] : memref<5x2x26xf32, #tpu.memory_space<vmem>>, vector<1x2x26xf32>
    %32 = vector.shape_cast %31 : vector<1x2x26xf32> to vector<2x26xf32>
    %cst_35 = arith.constant dense<0.000000e+00> : vector<2x512xf32>
    %33 = tpu.matmul %32, %0, %cst_35 {dimension_numbers = #tpu.dot_dimension_numbers<[1], [0], [0], [1], [0, 0, 1, 1], [], []>} : vector<2x26xf32>, vector<26x512xf32>, vector<2x512xf32> -> vector<2x512xf32>
    %34 = vector.broadcast %2 : vector<1x512xf32> to vector<2x512xf32>
    %35 = arith.addf %33, %34 : vector<2x512xf32>
    %cst_36 = arith.constant 0.000000e+00 : f32
    %36 = vector.broadcast %cst_36 : f32 to vector<2x128xf32>
    %cst_37 = arith.constant 0.000000e+00 : f32
    %37 = vector.broadcast %cst_37 : f32 to vector<2x128xf32>
    %cst_38 = arith.constant 0.000000e+00 : f32
    %38 = vector.broadcast %cst_38 : f32 to vector<2x128xf32>
    %cst_39 = arith.constant 0.000000e+00 : f32
    %39 = vector.broadcast %cst_39 : f32 to vector<2x128xf32>
    %cst_40 = arith.constant dense<0.000000e+00> : vector<2x512xf32>
    %40 = tpu.matmul %36, %1, %cst_40 {dimension_numbers = #tpu.dot_dimension_numbers<[1], [0], [0], [1], [0, 0, 1, 1], [], []>} : vector<2x128xf32>, vector<128x512xf32>, vector<2x512xf32> -> vector<2x512xf32>
    %41 = arith.addf %15, %40 : vector<2x512xf32>
    %42 = vector.extract_strided_slice %41 {offsets = [0, 0], sizes = [2, 128], strides = [1, 1]} : vector<2x512xf32> to vector<2x128xf32>
    %43 = arith.negf %42 : vector<2x128xf32>
    %44 = math.exp %43 : vector<2x128xf32>
    %cst_41 = arith.constant 1.000000e+00 : f32
    %45 = vector.broadcast %cst_41 : f32 to vector<2x128xf32>
    %46 = arith.addf %45, %44 : vector<2x128xf32>
    %47 = arith.divf %45, %46 : vector<2x128xf32>
    %48 = vector.extract_strided_slice %41 {offsets = [0, 128], sizes = [2, 128], strides = [1, 1]} : vector<2x512xf32> to vector<2x128xf32>
    %49 = arith.negf %48 : vector<2x128xf32>
    %50 = math.exp %49 : vector<2x128xf32>
    %cst_42 = arith.constant 1.000000e+00 : f32
    %51 = vector.broadcast %cst_42 : f32 to vector<2x128xf32>
    %52 = arith.addf %51, %50 : vector<2x128xf32>
    %53 = arith.divf %51, %52 : vector<2x128xf32>
    %54 = vector.extract_strided_slice %41 {offsets = [0, 256], sizes = [2, 128], strides = [1, 1]} : vector<2x512xf32> to vector<2x128xf32>
    %55 = math.tanh %54 : vector<2x128xf32>
    %56 = vector.extract_strided_slice %41 {offsets = [0, 384], sizes = [2, 128], strides = [1, 1]} : vector<2x512xf32> to vector<2x128xf32>
    %57 = arith.negf %56 : vector<2x128xf32>
    %58 = math.exp %57 : vector<2x128xf32>
    %cst_43 = arith.constant 1.000000e+00 : f32
    %59 = vector.broadcast %cst_43 : f32 to vector<2x128xf32>
    %60 = arith.addf %59, %58 : vector<2x128xf32>
    %61 = arith.divf %59, %60 : vector<2x128xf32>
    %62 = arith.mulf %53, %37 : vector<2x128xf32>
    %63 = arith.mulf %47, %55 : vector<2x128xf32>
    %64 = arith.addf %62, %63 : vector<2x128xf32>
    %65 = math.tanh %64 : vector<2x128xf32>
    %66 = arith.mulf %61, %65 : vector<2x128xf32>
    %cst_44 = arith.constant dense<0.000000e+00> : vector<2x512xf32>
    %67 = tpu.matmul %66, %3, %cst_44 {dimension_numbers = #tpu.dot_dimension_numbers<[1], [0], [0], [1], [0, 0, 1, 1], [], []>} : vector<2x128xf32>, vector<128x512xf32>, vector<2x512xf32> -> vector<2x512xf32>
    %68 = vector.broadcast %5 : vector<1x512xf32> to vector<2x512xf32>
    %69 = arith.addf %67, %68 : vector<2x512xf32>
    %cst_45 = arith.constant dense<0.000000e+00> : vector<2x512xf32>
    %70 = tpu.matmul %38, %4, %cst_45 {dimension_numbers = #tpu.dot_dimension_numbers<[1], [0], [0], [1], [0, 0, 1, 1], [], []>} : vector<2x128xf32>, vector<128x512xf32>, vector<2x512xf32> -> vector<2x512xf32>
    %71 = arith.addf %69, %70 : vector<2x512xf32>
    %72 = vector.extract_strided_slice %71 {offsets = [0, 0], sizes = [2, 128], strides = [1, 1]} : vector<2x512xf32> to vector<2x128xf32>
    %73 = arith.negf %72 : vector<2x128xf32>
    %74 = math.exp %73 : vector<2x128xf32>
    %cst_46 = arith.constant 1.000000e+00 : f32
    %75 = vector.broadcast %cst_46 : f32 to vector<2x128xf32>
    %76 = arith.addf %75, %74 : vector<2x128xf32>
    %77 = arith.divf %75, %76 : vector<2x128xf32>
    %78 = vector.extract_strided_slice %71 {offsets = [0, 128], sizes = [2, 128], strides = [1, 1]} : vector<2x512xf32> to vector<2x128xf32>
    %79 = arith.negf %78 : vector<2x128xf32>
    %80 = math.exp %79 : vector<2x128xf32>
    %cst_47 = arith.constant 1.000000e+00 : f32
    %81 = vector.broadcast %cst_47 : f32 to vector<2x128xf32>
    %82 = arith.addf %81, %80 : vector<2x128xf32>
    %83 = arith.divf %81, %82 : vector<2x128xf32>
    %84 = vector.extract_strided_slice %71 {offsets = [0, 256], sizes = [2, 128], strides = [1, 1]} : vector<2x512xf32> to vector<2x128xf32>
    %85 = math.tanh %84 : vector<2x128xf32>
    %86 = vector.extract_strided_slice %71 {offsets = [0, 384], sizes = [2, 128], strides = [1, 1]} : vector<2x512xf32> to vector<2x128xf32>
    %87 = arith.negf %86 : vector<2x128xf32>
    %88 = math.exp %87 : vector<2x128xf32>
    %cst_48 = arith.constant 1.000000e+00 : f32
    %89 = vector.broadcast %cst_48 : f32 to vector<2x128xf32>
    %90 = arith.addf %89, %88 : vector<2x128xf32>
    %91 = arith.divf %89, %90 : vector<2x128xf32>
    %92 = arith.mulf %83, %39 : vector<2x128xf32>
    %93 = arith.mulf %77, %85 : vector<2x128xf32>
    %94 = arith.addf %92, %93 : vector<2x128xf32>
    %95 = math.tanh %94 : vector<2x128xf32>
    %96 = arith.mulf %91, %95 : vector<2x128xf32>
    %cst_49 = arith.constant dense<0.000000e+00> : vector<2x512xf32>
    %97 = tpu.matmul %66, %1, %cst_49 {dimension_numbers = #tpu.dot_dimension_numbers<[1], [0], [0], [1], [0, 0, 1, 1], [], []>} : vector<2x128xf32>, vector<128x512xf32>, vector<2x512xf32> -> vector<2x512xf32>
    %98 = arith.addf %20, %97 : vector<2x512xf32>
    %99 = vector.extract_strided_slice %98 {offsets = [0, 0], sizes = [2, 128], strides = [1, 1]} : vector<2x512xf32> to vector<2x128xf32>
    %100 = arith.negf %99 : vector<2x128xf32>
    %101 = math.exp %100 : vector<2x128xf32>
    %cst_50 = arith.constant 1.000000e+00 : f32
    %102 = vector.broadcast %cst_50 : f32 to vector<2x128xf32>
    %103 = arith.addf %102, %101 : vector<2x128xf32>
    %104 = arith.divf %102, %103 : vector<2x128xf32>
    %105 = vector.extract_strided_slice %98 {offsets = [0, 128], sizes = [2, 128], strides = [1, 1]} : vector<2x512xf32> to vector<2x128xf32>
    %106 = arith.negf %105 : vector<2x128xf32>
    %107 = math.exp %106 : vector<2x128xf32>
    %cst_51 = arith.constant 1.000000e+00 : f32
    %108 = vector.broadcast %cst_51 : f32 to vector<2x128xf32>
    %109 = arith.addf %108, %107 : vector<2x128xf32>
    %110 = arith.divf %108, %109 : vector<2x128xf32>
    %111 = vector.extract_strided_slice %98 {offsets = [0, 256], sizes = [2, 128], strides = [1, 1]} : vector<2x512xf32> to vector<2x128xf32>
    %112 = math.tanh %111 : vector<2x128xf32>
    %113 = vector.extract_strided_slice %98 {offsets = [0, 384], sizes = [2, 128], strides = [1, 1]} : vector<2x512xf32> to vector<2x128xf32>
    %114 = arith.negf %113 : vector<2x128xf32>
    %115 = math.exp %114 : vector<2x128xf32>
    %cst_52 = arith.constant 1.000000e+00 : f32
    %116 = vector.broadcast %cst_52 : f32 to vector<2x128xf32>
    %117 = arith.addf %116, %115 : vector<2x128xf32>
    %118 = arith.divf %116, %117 : vector<2x128xf32>
    %119 = arith.mulf %110, %64 : vector<2x128xf32>
    %120 = arith.mulf %104, %112 : vector<2x128xf32>
    %121 = arith.addf %119, %120 : vector<2x128xf32>
    %122 = math.tanh %121 : vector<2x128xf32>
    %123 = arith.mulf %118, %122 : vector<2x128xf32>
    %cst_53 = arith.constant dense<0.000000e+00> : vector<2x512xf32>
    %124 = tpu.matmul %123, %3, %cst_53 {dimension_numbers = #tpu.dot_dimension_numbers<[1], [0], [0], [1], [0, 0, 1, 1], [], []>} : vector<2x128xf32>, vector<128x512xf32>, vector<2x512xf32> -> vector<2x512xf32>
    %125 = vector.broadcast %5 : vector<1x512xf32> to vector<2x512xf32>
    %126 = arith.addf %124, %125 : vector<2x512xf32>
    %cst_54 = arith.constant dense<0.000000e+00> : vector<2x512xf32>
    %127 = tpu.matmul %96, %4, %cst_54 {dimension_numbers = #tpu.dot_dimension_numbers<[1], [0], [0], [1], [0, 0, 1, 1], [], []>} : vector<2x128xf32>, vector<128x512xf32>, vector<2x512xf32> -> vector<2x512xf32>
    %128 = arith.addf %126, %127 : vector<2x512xf32>
    %129 = vector.extract_strided_slice %128 {offsets = [0, 0], sizes = [2, 128], strides = [1, 1]} : vector<2x512xf32> to vector<2x128xf32>
    %130 = arith.negf %129 : vector<2x128xf32>
    %131 = math.exp %130 : vector<2x128xf32>
    %cst_55 = arith.constant 1.000000e+00 : f32
    %132 = vector.broadcast %cst_55 : f32 to vector<2x128xf32>
    %133 = arith.addf %132, %131 : vector<2x128xf32>
    %134 = arith.divf %132, %133 : vector<2x128xf32>
    %135 = vector.extract_strided_slice %128 {offsets = [0, 128], sizes = [2, 128], strides = [1, 1]} : vector<2x512xf32> to vector<2x128xf32>
    %136 = arith.negf %135 : vector<2x128xf32>
    %137 = math.exp %136 : vector<2x128xf32>
    %cst_56 = arith.constant 1.000000e+00 : f32
    %138 = vector.broadcast %cst_56 : f32 to vector<2x128xf32>
    %139 = arith.addf %138, %137 : vector<2x128xf32>
    %140 = arith.divf %138, %139 : vector<2x128xf32>
    %141 = vector.extract_strided_slice %128 {offsets = [0, 256], sizes = [2, 128], strides = [1, 1]} : vector<2x512xf32> to vector<2x128xf32>
    %142 = math.tanh %141 : vector<2x128xf32>
    %143 = vector.extract_strided_slice %128 {offsets = [0, 384], sizes = [2, 128], strides = [1, 1]} : vector<2x512xf32> to vector<2x128xf32>
    %144 = arith.negf %143 : vector<2x128xf32>
    %145 = math.exp %144 : vector<2x128xf32>
    %cst_57 = arith.constant 1.000000e+00 : f32
    %146 = vector.broadcast %cst_57 : f32 to vector<2x128xf32>
    %147 = arith.addf %146, %145 : vector<2x128xf32>
    %148 = arith.divf %146, %147 : vector<2x128xf32>
    %149 = arith.mulf %140, %94 : vector<2x128xf32>
    %150 = arith.mulf %134, %142 : vector<2x128xf32>
    %151 = arith.addf %149, %150 : vector<2x128xf32>
    %152 = math.tanh %151 : vector<2x128xf32>
    %153 = arith.mulf %148, %152 : vector<2x128xf32>
    %cst_58 = arith.constant dense<0.000000e+00> : vector<2x512xf32>
    %154 = tpu.matmul %123, %1, %cst_58 {dimension_numbers = #tpu.dot_dimension_numbers<[1], [0], [0], [1], [0, 0, 1, 1], [], []>} : vector<2x128xf32>, vector<128x512xf32>, vector<2x512xf32> -> vector<2x512xf32>
    %155 = arith.addf %25, %154 : vector<2x512xf32>
    %156 = vector.extract_strided_slice %155 {offsets = [0, 0], sizes = [2, 128], strides = [1, 1]} : vector<2x512xf32> to vector<2x128xf32>
    %157 = arith.negf %156 : vector<2x128xf32>
    %158 = math.exp %157 : vector<2x128xf32>
    %cst_59 = arith.constant 1.000000e+00 : f32
    %159 = vector.broadcast %cst_59 : f32 to vector<2x128xf32>
    %160 = arith.addf %159, %158 : vector<2x128xf32>
    %161 = arith.divf %159, %160 : vector<2x128xf32>
    %162 = vector.extract_strided_slice %155 {offsets = [0, 128], sizes = [2, 128], strides = [1, 1]} : vector<2x512xf32> to vector<2x128xf32>
    %163 = arith.negf %162 : vector<2x128xf32>
    %164 = math.exp %163 : vector<2x128xf32>
    %cst_60 = arith.constant 1.000000e+00 : f32
    %165 = vector.broadcast %cst_60 : f32 to vector<2x128xf32>
    %166 = arith.addf %165, %164 : vector<2x128xf32>
    %167 = arith.divf %165, %166 : vector<2x128xf32>
    %168 = vector.extract_strided_slice %155 {offsets = [0, 256], sizes = [2, 128], strides = [1, 1]} : vector<2x512xf32> to vector<2x128xf32>
    %169 = math.tanh %168 : vector<2x128xf32>
    %170 = vector.extract_strided_slice %155 {offsets = [0, 384], sizes = [2, 128], strides = [1, 1]} : vector<2x512xf32> to vector<2x128xf32>
    %171 = arith.negf %170 : vector<2x128xf32>
    %172 = math.exp %171 : vector<2x128xf32>
    %cst_61 = arith.constant 1.000000e+00 : f32
    %173 = vector.broadcast %cst_61 : f32 to vector<2x128xf32>
    %174 = arith.addf %173, %172 : vector<2x128xf32>
    %175 = arith.divf %173, %174 : vector<2x128xf32>
    %176 = arith.mulf %167, %121 : vector<2x128xf32>
    %177 = arith.mulf %161, %169 : vector<2x128xf32>
    %178 = arith.addf %176, %177 : vector<2x128xf32>
    %179 = math.tanh %178 : vector<2x128xf32>
    %180 = arith.mulf %175, %179 : vector<2x128xf32>
    %cst_62 = arith.constant dense<0.000000e+00> : vector<2x512xf32>
    %181 = tpu.matmul %180, %3, %cst_62 {dimension_numbers = #tpu.dot_dimension_numbers<[1], [0], [0], [1], [0, 0, 1, 1], [], []>} : vector<2x128xf32>, vector<128x512xf32>, vector<2x512xf32> -> vector<2x512xf32>
    %182 = vector.broadcast %5 : vector<1x512xf32> to vector<2x512xf32>
    %183 = arith.addf %181, %182 : vector<2x512xf32>
    %cst_63 = arith.constant dense<0.000000e+00> : vector<2x512xf32>
    %184 = tpu.matmul %153, %4, %cst_63 {dimension_numbers = #tpu.dot_dimension_numbers<[1], [0], [0], [1], [0, 0, 1, 1], [], []>} : vector<2x128xf32>, vector<128x512xf32>, vector<2x512xf32> -> vector<2x512xf32>
    %185 = arith.addf %183, %184 : vector<2x512xf32>
    %186 = vector.extract_strided_slice %185 {offsets = [0, 0], sizes = [2, 128], strides = [1, 1]} : vector<2x512xf32> to vector<2x128xf32>
    %187 = arith.negf %186 : vector<2x128xf32>
    %188 = math.exp %187 : vector<2x128xf32>
    %cst_64 = arith.constant 1.000000e+00 : f32
    %189 = vector.broadcast %cst_64 : f32 to vector<2x128xf32>
    %190 = arith.addf %189, %188 : vector<2x128xf32>
    %191 = arith.divf %189, %190 : vector<2x128xf32>
    %192 = vector.extract_strided_slice %185 {offsets = [0, 128], sizes = [2, 128], strides = [1, 1]} : vector<2x512xf32> to vector<2x128xf32>
    %193 = arith.negf %192 : vector<2x128xf32>
    %194 = math.exp %193 : vector<2x128xf32>
    %cst_65 = arith.constant 1.000000e+00 : f32
    %195 = vector.broadcast %cst_65 : f32 to vector<2x128xf32>
    %196 = arith.addf %195, %194 : vector<2x128xf32>
    %197 = arith.divf %195, %196 : vector<2x128xf32>
    %198 = vector.extract_strided_slice %185 {offsets = [0, 256], sizes = [2, 128], strides = [1, 1]} : vector<2x512xf32> to vector<2x128xf32>
    %199 = math.tanh %198 : vector<2x128xf32>
    %200 = vector.extract_strided_slice %185 {offsets = [0, 384], sizes = [2, 128], strides = [1, 1]} : vector<2x512xf32> to vector<2x128xf32>
    %201 = arith.negf %200 : vector<2x128xf32>
    %202 = math.exp %201 : vector<2x128xf32>
    %cst_66 = arith.constant 1.000000e+00 : f32
    %203 = vector.broadcast %cst_66 : f32 to vector<2x128xf32>
    %204 = arith.addf %203, %202 : vector<2x128xf32>
    %205 = arith.divf %203, %204 : vector<2x128xf32>
    %206 = arith.mulf %197, %151 : vector<2x128xf32>
    %207 = arith.mulf %191, %199 : vector<2x128xf32>
    %208 = arith.addf %206, %207 : vector<2x128xf32>
    %209 = math.tanh %208 : vector<2x128xf32>
    %210 = arith.mulf %205, %209 : vector<2x128xf32>
    %cst_67 = arith.constant dense<0.000000e+00> : vector<2x512xf32>
    %211 = tpu.matmul %180, %1, %cst_67 {dimension_numbers = #tpu.dot_dimension_numbers<[1], [0], [0], [1], [0, 0, 1, 1], [], []>} : vector<2x128xf32>, vector<128x512xf32>, vector<2x512xf32> -> vector<2x512xf32>
    %212 = arith.addf %30, %211 : vector<2x512xf32>
    %213 = vector.extract_strided_slice %212 {offsets = [0, 0], sizes = [2, 128], strides = [1, 1]} : vector<2x512xf32> to vector<2x128xf32>
    %214 = arith.negf %213 : vector<2x128xf32>
    %215 = math.exp %214 : vector<2x128xf32>
    %cst_68 = arith.constant 1.000000e+00 : f32
    %216 = vector.broadcast %cst_68 : f32 to vector<2x128xf32>
    %217 = arith.addf %216, %215 : vector<2x128xf32>
    %218 = arith.divf %216, %217 : vector<2x128xf32>
    %219 = vector.extract_strided_slice %212 {offsets = [0, 128], sizes = [2, 128], strides = [1, 1]} : vector<2x512xf32> to vector<2x128xf32>
    %220 = arith.negf %219 : vector<2x128xf32>
    %221 = math.exp %220 : vector<2x128xf32>
    %cst_69 = arith.constant 1.000000e+00 : f32
    %222 = vector.broadcast %cst_69 : f32 to vector<2x128xf32>
    %223 = arith.addf %222, %221 : vector<2x128xf32>
    %224 = arith.divf %222, %223 : vector<2x128xf32>
    %225 = vector.extract_strided_slice %212 {offsets = [0, 256], sizes = [2, 128], strides = [1, 1]} : vector<2x512xf32> to vector<2x128xf32>
    %226 = math.tanh %225 : vector<2x128xf32>
    %227 = vector.extract_strided_slice %212 {offsets = [0, 384], sizes = [2, 128], strides = [1, 1]} : vector<2x512xf32> to vector<2x128xf32>
    %228 = arith.negf %227 : vector<2x128xf32>
    %229 = math.exp %228 : vector<2x128xf32>
    %cst_70 = arith.constant 1.000000e+00 : f32
    %230 = vector.broadcast %cst_70 : f32 to vector<2x128xf32>
    %231 = arith.addf %230, %229 : vector<2x128xf32>
    %232 = arith.divf %230, %231 : vector<2x128xf32>
    %233 = arith.mulf %224, %178 : vector<2x128xf32>
    %234 = arith.mulf %218, %226 : vector<2x128xf32>
    %235 = arith.addf %233, %234 : vector<2x128xf32>
    %236 = math.tanh %235 : vector<2x128xf32>
    %237 = arith.mulf %232, %236 : vector<2x128xf32>
    %cst_71 = arith.constant dense<0.000000e+00> : vector<2x512xf32>
    %238 = tpu.matmul %237, %3, %cst_71 {dimension_numbers = #tpu.dot_dimension_numbers<[1], [0], [0], [1], [0, 0, 1, 1], [], []>} : vector<2x128xf32>, vector<128x512xf32>, vector<2x512xf32> -> vector<2x512xf32>
    %239 = vector.broadcast %5 : vector<1x512xf32> to vector<2x512xf32>
    %240 = arith.addf %238, %239 : vector<2x512xf32>
    %cst_72 = arith.constant dense<0.000000e+00> : vector<2x512xf32>
    %241 = tpu.matmul %210, %4, %cst_72 {dimension_numbers = #tpu.dot_dimension_numbers<[1], [0], [0], [1], [0, 0, 1, 1], [], []>} : vector<2x128xf32>, vector<128x512xf32>, vector<2x512xf32> -> vector<2x512xf32>
    %242 = arith.addf %240, %241 : vector<2x512xf32>
    %243 = vector.extract_strided_slice %242 {offsets = [0, 0], sizes = [2, 128], strides = [1, 1]} : vector<2x512xf32> to vector<2x128xf32>
    %244 = arith.negf %243 : vector<2x128xf32>
    %245 = math.exp %244 : vector<2x128xf32>
    %cst_73 = arith.constant 1.000000e+00 : f32
    %246 = vector.broadcast %cst_73 : f32 to vector<2x128xf32>
    %247 = arith.addf %246, %245 : vector<2x128xf32>
    %248 = arith.divf %246, %247 : vector<2x128xf32>
    %249 = vector.extract_strided_slice %242 {offsets = [0, 128], sizes = [2, 128], strides = [1, 1]} : vector<2x512xf32> to vector<2x128xf32>
    %250 = arith.negf %249 : vector<2x128xf32>
    %251 = math.exp %250 : vector<2x128xf32>
    %cst_74 = arith.constant 1.000000e+00 : f32
    %252 = vector.broadcast %cst_74 : f32 to vector<2x128xf32>
    %253 = arith.addf %252, %251 : vector<2x128xf32>
    %254 = arith.divf %252, %253 : vector<2x128xf32>
    %255 = vector.extract_strided_slice %242 {offsets = [0, 256], sizes = [2, 128], strides = [1, 1]} : vector<2x512xf32> to vector<2x128xf32>
    %256 = math.tanh %255 : vector<2x128xf32>
    %257 = vector.extract_strided_slice %242 {offsets = [0, 384], sizes = [2, 128], strides = [1, 1]} : vector<2x512xf32> to vector<2x128xf32>
    %258 = arith.negf %257 : vector<2x128xf32>
    %259 = math.exp %258 : vector<2x128xf32>
    %cst_75 = arith.constant 1.000000e+00 : f32
    %260 = vector.broadcast %cst_75 : f32 to vector<2x128xf32>
    %261 = arith.addf %260, %259 : vector<2x128xf32>
    %262 = arith.divf %260, %261 : vector<2x128xf32>
    %263 = arith.mulf %254, %208 : vector<2x128xf32>
    %264 = arith.mulf %248, %256 : vector<2x128xf32>
    %265 = arith.addf %263, %264 : vector<2x128xf32>
    %266 = math.tanh %265 : vector<2x128xf32>
    %267 = arith.mulf %262, %266 : vector<2x128xf32>
    %cst_76 = arith.constant dense<0.000000e+00> : vector<2x512xf32>
    %268 = tpu.matmul %237, %1, %cst_76 {dimension_numbers = #tpu.dot_dimension_numbers<[1], [0], [0], [1], [0, 0, 1, 1], [], []>} : vector<2x128xf32>, vector<128x512xf32>, vector<2x512xf32> -> vector<2x512xf32>
    %269 = arith.addf %35, %268 : vector<2x512xf32>
    %270 = vector.extract_strided_slice %269 {offsets = [0, 0], sizes = [2, 128], strides = [1, 1]} : vector<2x512xf32> to vector<2x128xf32>
    %271 = arith.negf %270 : vector<2x128xf32>
    %272 = math.exp %271 : vector<2x128xf32>
    %cst_77 = arith.constant 1.000000e+00 : f32
    %273 = vector.broadcast %cst_77 : f32 to vector<2x128xf32>
    %274 = arith.addf %273, %272 : vector<2x128xf32>
    %275 = arith.divf %273, %274 : vector<2x128xf32>
    %276 = vector.extract_strided_slice %269 {offsets = [0, 128], sizes = [2, 128], strides = [1, 1]} : vector<2x512xf32> to vector<2x128xf32>
    %277 = arith.negf %276 : vector<2x128xf32>
    %278 = math.exp %277 : vector<2x128xf32>
    %cst_78 = arith.constant 1.000000e+00 : f32
    %279 = vector.broadcast %cst_78 : f32 to vector<2x128xf32>
    %280 = arith.addf %279, %278 : vector<2x128xf32>
    %281 = arith.divf %279, %280 : vector<2x128xf32>
    %282 = vector.extract_strided_slice %269 {offsets = [0, 256], sizes = [2, 128], strides = [1, 1]} : vector<2x512xf32> to vector<2x128xf32>
    %283 = math.tanh %282 : vector<2x128xf32>
    %284 = vector.extract_strided_slice %269 {offsets = [0, 384], sizes = [2, 128], strides = [1, 1]} : vector<2x512xf32> to vector<2x128xf32>
    %285 = arith.negf %284 : vector<2x128xf32>
    %286 = math.exp %285 : vector<2x128xf32>
    %cst_79 = arith.constant 1.000000e+00 : f32
    %287 = vector.broadcast %cst_79 : f32 to vector<2x128xf32>
    %288 = arith.addf %287, %286 : vector<2x128xf32>
    %289 = arith.divf %287, %288 : vector<2x128xf32>
    %290 = arith.mulf %281, %235 : vector<2x128xf32>
    %291 = arith.mulf %275, %283 : vector<2x128xf32>
    %292 = arith.addf %290, %291 : vector<2x128xf32>
    %293 = math.tanh %292 : vector<2x128xf32>
    %294 = arith.mulf %289, %293 : vector<2x128xf32>
    %cst_80 = arith.constant dense<0.000000e+00> : vector<2x512xf32>
    %295 = tpu.matmul %294, %3, %cst_80 {dimension_numbers = #tpu.dot_dimension_numbers<[1], [0], [0], [1], [0, 0, 1, 1], [], []>} : vector<2x128xf32>, vector<128x512xf32>, vector<2x512xf32> -> vector<2x512xf32>
    %296 = vector.broadcast %5 : vector<1x512xf32> to vector<2x512xf32>
    %297 = arith.addf %295, %296 : vector<2x512xf32>
    %cst_81 = arith.constant dense<0.000000e+00> : vector<2x512xf32>
    %298 = tpu.matmul %267, %4, %cst_81 {dimension_numbers = #tpu.dot_dimension_numbers<[1], [0], [0], [1], [0, 0, 1, 1], [], []>} : vector<2x128xf32>, vector<128x512xf32>, vector<2x512xf32> -> vector<2x512xf32>
    %299 = arith.addf %297, %298 : vector<2x512xf32>
    %300 = vector.extract_strided_slice %299 {offsets = [0, 0], sizes = [2, 128], strides = [1, 1]} : vector<2x512xf32> to vector<2x128xf32>
    %301 = arith.negf %300 : vector<2x128xf32>
    %302 = math.exp %301 : vector<2x128xf32>
    %cst_82 = arith.constant 1.000000e+00 : f32
    %303 = vector.broadcast %cst_82 : f32 to vector<2x128xf32>
    %304 = arith.addf %303, %302 : vector<2x128xf32>
    %305 = arith.divf %303, %304 : vector<2x128xf32>
    %306 = vector.extract_strided_slice %299 {offsets = [0, 128], sizes = [2, 128], strides = [1, 1]} : vector<2x512xf32> to vector<2x128xf32>
    %307 = arith.negf %306 : vector<2x128xf32>
    %308 = math.exp %307 : vector<2x128xf32>
    %cst_83 = arith.constant 1.000000e+00 : f32
    %309 = vector.broadcast %cst_83 : f32 to vector<2x128xf32>
    %310 = arith.addf %309, %308 : vector<2x128xf32>
    %311 = arith.divf %309, %310 : vector<2x128xf32>
    %312 = vector.extract_strided_slice %299 {offsets = [0, 256], sizes = [2, 128], strides = [1, 1]} : vector<2x512xf32> to vector<2x128xf32>
    %313 = math.tanh %312 : vector<2x128xf32>
    %314 = vector.extract_strided_slice %299 {offsets = [0, 384], sizes = [2, 128], strides = [1, 1]} : vector<2x512xf32> to vector<2x128xf32>
    %315 = arith.negf %314 : vector<2x128xf32>
    %316 = math.exp %315 : vector<2x128xf32>
    %cst_84 = arith.constant 1.000000e+00 : f32
    %317 = vector.broadcast %cst_84 : f32 to vector<2x128xf32>
    %318 = arith.addf %317, %316 : vector<2x128xf32>
    %319 = arith.divf %317, %318 : vector<2x128xf32>
    %320 = arith.mulf %311, %265 : vector<2x128xf32>
    %321 = arith.mulf %305, %313 : vector<2x128xf32>
    %322 = arith.addf %320, %321 : vector<2x128xf32>
    %323 = math.tanh %322 : vector<2x128xf32>
    %324 = arith.mulf %319, %323 : vector<2x128xf32>
    %325 = vector.extract_strided_slice %324 {offsets = [0, 0], sizes = [2, 8], strides = [1, 1]} : vector<2x128xf32> to vector<2x8xf32>
    %c0_85 = arith.constant 0 : index
    %c0_86 = arith.constant 0 : index
    %326 = vector.load %arg12[%c0_85, %c0_86] : memref<2x8xf32, #tpu.memory_space<vmem>>, vector<2x8xf32>
    tpu.vector_store %arg12[%c0_85, %c0_86], %325 {strides = array<i32>} : memref<2x8xf32, #tpu.memory_space<vmem>>, vector<2x8xf32>,
    %cst_87 = arith.constant dense<0.000000e+00> : vector<2x512xf32>
    %327 = tpu.matmul %324, %6, %cst_87 {dimension_numbers = #tpu.dot_dimension_numbers<[1], [0], [0], [1], [0, 0, 1, 1], [], []>} : vector<2x128xf32>, vector<128x512xf32>, vector<2x512xf32> -> vector<2x512xf32>
    %328 = vector.broadcast %8 : vector<1x512xf32> to vector<2x512xf32>
    %329 = arith.addf %327, %328 : vector<2x512xf32>
    %cst_88 = arith.constant 0.000000e+00 : f32
    %330 = vector.broadcast %cst_88 : f32 to vector<5x128xf32>
    %cst_89 = arith.constant 0.000000e+00 : f32
    %331 = vector.broadcast %cst_89 : f32 to vector<5x128xf32>
    %332 = vector.extract_strided_slice %329 {offsets = [0, 0], sizes = [1, 512], strides = [1, 1]} : vector<2x512xf32> to vector<1x512xf32>
    %cst_90 = arith.constant dense<0.000000e+00> : vector<5x512xf32>
    %333 = tpu.matmul %330, %7, %cst_90 {dimension_numbers = #tpu.dot_dimension_numbers<[1], [0], [0], [1], [0, 0, 1, 1], [], []>} : vector<5x128xf32>, vector<128x512xf32>, vector<5x512xf32> -> vector<5x512xf32>
    %334 = vector.broadcast %332 : vector<1x512xf32> to vector<5x512xf32>
    %335 = arith.addf %334, %333 : vector<5x512xf32>
    %336 = vector.extract_strided_slice %335 {offsets = [0, 0], sizes = [5, 128], strides = [1, 1]} : vector<5x512xf32> to vector<5x128xf32>
    %337 = arith.negf %336 : vector<5x128xf32>
    %338 = math.exp %337 : vector<5x128xf32>
    %cst_91 = arith.constant 1.000000e+00 : f32
    %339 = vector.broadcast %cst_91 : f32 to vector<5x128xf32>
    %340 = arith.addf %339, %338 : vector<5x128xf32>
    %341 = arith.divf %339, %340 : vector<5x128xf32>
    %342 = vector.extract_strided_slice %335 {offsets = [0, 128], sizes = [5, 128], strides = [1, 1]} : vector<5x512xf32> to vector<5x128xf32>
    %343 = arith.negf %342 : vector<5x128xf32>
    %344 = math.exp %343 : vector<5x128xf32>
    %cst_92 = arith.constant 1.000000e+00 : f32
    %345 = vector.broadcast %cst_92 : f32 to vector<5x128xf32>
    %346 = arith.addf %345, %344 : vector<5x128xf32>
    %347 = arith.divf %345, %346 : vector<5x128xf32>
    %348 = vector.extract_strided_slice %335 {offsets = [0, 256], sizes = [5, 128], strides = [1, 1]} : vector<5x512xf32> to vector<5x128xf32>
    %349 = math.tanh %348 : vector<5x128xf32>
    %350 = vector.extract_strided_slice %335 {offsets = [0, 384], sizes = [5, 128], strides = [1, 1]} : vector<5x512xf32> to vector<5x128xf32>
    %351 = arith.negf %350 : vector<5x128xf32>
    %352 = math.exp %351 : vector<5x128xf32>
    %cst_93 = arith.constant 1.000000e+00 : f32
    %353 = vector.broadcast %cst_93 : f32 to vector<5x128xf32>
    %354 = arith.addf %353, %352 : vector<5x128xf32>
    %355 = arith.divf %353, %354 : vector<5x128xf32>
    %356 = arith.mulf %347, %331 : vector<5x128xf32>
    %357 = arith.mulf %341, %349 : vector<5x128xf32>
    %358 = arith.addf %356, %357 : vector<5x128xf32>
    %359 = math.tanh %358 : vector<5x128xf32>
    %360 = arith.mulf %355, %359 : vector<5x128xf32>
    %cst_94 = arith.constant dense<0.000000e+00> : vector<5x26xf32>
    %361 = tpu.matmul %360, %9, %cst_94 {dimension_numbers = #tpu.dot_dimension_numbers<[1], [0], [0], [1], [0, 0, 1, 1], [], []>} : vector<5x128xf32>, vector<128x26xf32>, vector<5x26xf32> -> vector<5x26xf32>
    %362 = vector.broadcast %10 : vector<1x26xf32> to vector<5x26xf32>
    %363 = arith.addf %361, %362 : vector<5x26xf32>
    %c0_95 = arith.constant 0 : index
    %c0_96 = arith.constant 0 : index
    %c0_97 = arith.constant 0 : index
    %364 = vector.load %arg13[%c0_95, %c0_96, %c0_97] : memref<2x5x26xf32, #tpu.memory_space<vmem>>, vector<1x5x26xf32>
    %365 = vector.shape_cast %364 : vector<1x5x26xf32> to vector<5x26xf32>
    %366 = vector.shape_cast %363 : vector<5x26xf32> to vector<1x5x26xf32>
    tpu.vector_store %arg13[%c0_95, %c0_96, %c0_97], %366 {strides = array<i32>} : memref<2x5x26xf32, #tpu.memory_space<vmem>>, vector<1x5x26xf32>,
    %367 = vector.extract_strided_slice %329 {offsets = [1, 0], sizes = [1, 512], strides = [1, 1]} : vector<2x512xf32> to vector<1x512xf32>
    %cst_98 = arith.constant dense<0.000000e+00> : vector<5x512xf32>
    %368 = tpu.matmul %360, %7, %cst_98 {dimension_numbers = #tpu.dot_dimension_numbers<[1], [0], [0], [1], [0, 0, 1, 1], [], []>} : vector<5x128xf32>, vector<128x512xf32>, vector<5x512xf32> -> vector<5x512xf32>
    %369 = vector.broadcast %367 : vector<1x512xf32> to vector<5x512xf32>
    %370 = arith.addf %369, %368 : vector<5x512xf32>
    %371 = vector.extract_strided_slice %370 {offsets = [0, 0], sizes = [5, 128], strides = [1, 1]} : vector<5x512xf32> to vector<5x128xf32>
    %372 = arith.negf %371 : vector<5x128xf32>
    %373 = math.exp %372 : vector<5x128xf32>
    %cst_99 = arith.constant 1.000000e+00 : f32
    %374 = vector.broadcast %cst_99 : f32 to vector<5x128xf32>
    %375 = arith.addf %374, %373 : vector<5x128xf32>
    %376 = arith.divf %374, %375 : vector<5x128xf32>
    %377 = vector.extract_strided_slice %370 {offsets = [0, 128], sizes = [5, 128], strides = [1, 1]} : vector<5x512xf32> to vector<5x128xf32>
    %378 = arith.negf %377 : vector<5x128xf32>
    %379 = math.exp %378 : vector<5x128xf32>
    %cst_100 = arith.constant 1.000000e+00 : f32
    %380 = vector.broadcast %cst_100 : f32 to vector<5x128xf32>
    %381 = arith.addf %380, %379 : vector<5x128xf32>
    %382 = arith.divf %380, %381 : vector<5x128xf32>
    %383 = vector.extract_strided_slice %370 {offsets = [0, 256], sizes = [5, 128], strides = [1, 1]} : vector<5x512xf32> to vector<5x128xf32>
    %384 = math.tanh %383 : vector<5x128xf32>
    %385 = vector.extract_strided_slice %370 {offsets = [0, 384], sizes = [5, 128], strides = [1, 1]} : vector<5x512xf32> to vector<5x128xf32>
    %386 = arith.negf %385 : vector<5x128xf32>
    %387 = math.exp %386 : vector<5x128xf32>
    %cst_101 = arith.constant 1.000000e+00 : f32
    %388 = vector.broadcast %cst_101 : f32 to vector<5x128xf32>
    %389 = arith.addf %388, %387 : vector<5x128xf32>
    %390 = arith.divf %388, %389 : vector<5x128xf32>
    %391 = arith.mulf %382, %358 : vector<5x128xf32>
    %392 = arith.mulf %376, %384 : vector<5x128xf32>
    %393 = arith.addf %391, %392 : vector<5x128xf32>
    %394 = math.tanh %393 : vector<5x128xf32>
    %395 = arith.mulf %390, %394 : vector<5x128xf32>
    %cst_102 = arith.constant dense<0.000000e+00> : vector<5x26xf32>
    %396 = tpu.matmul %395, %9, %cst_102 {dimension_numbers = #tpu.dot_dimension_numbers<[1], [0], [0], [1], [0, 0, 1, 1], [], []>} : vector<5x128xf32>, vector<128x26xf32>, vector<5x26xf32> -> vector<5x26xf32>
    %397 = vector.broadcast %10 : vector<1x26xf32> to vector<5x26xf32>
    %398 = arith.addf %396, %397 : vector<5x26xf32>
    %c1_103 = arith.constant 1 : index
    %c0_104 = arith.constant 0 : index
    %c0_105 = arith.constant 0 : index
    %399 = vector.load %arg13[%c1_103, %c0_104, %c0_105] : memref<2x5x26xf32, #tpu.memory_space<vmem>>, vector<1x5x26xf32>
    %400 = vector.shape_cast %399 : vector<1x5x26xf32> to vector<5x26xf32>
    %401 = vector.shape_cast %398 : vector<5x26xf32> to vector<1x5x26xf32>
    tpu.vector_store %arg13[%c1_103, %c0_104, %c0_105], %401 {strides = array<i32>} : memref<2x5x26xf32, #tpu.memory_space<vmem>>, vector<1x5x26xf32>,
    return
  }
}

</mosaic_0001>

<llo_original>
// kernel: autoencoder_forward.1
$region0: #{autoencoder_forward.1}
  #allocation0 [shape = 'u32[]', space=smem, size = 0x4, offset = 0x4, fixed_abs, tag = 'smem constant byte address 0x4 - core index']
  #allocation1 [shape = 'u32[144,128]{1,0:T(1,128)}', space=vmem, size = 0x12000, scoped, tag = 'internal scratch']
  %s0 = inlined_call_operand.vmem [shape: f32[5,2,26], index: 0, kind: input, shape index: {}]
  %s1 = inlined_call_operand.vmem [shape: f32[26,512], index: 1, kind: input, shape index: {}]
  %s2 = inlined_call_operand.hbm [shape: f32[128,512], index: 2, kind: input, shape index: {}]
  %s3 = inlined_call_operand.vmem [shape: f32[1,512], index: 3, kind: input, shape index: {}]
  %s4 = inlined_call_operand.hbm [shape: f32[128,512], index: 4, kind: input, shape index: {}]
  %s5 = inlined_call_operand.hbm [shape: f32[128,512], index: 5, kind: input, shape index: {}]
  %s6 = inlined_call_operand.vmem [shape: f32[1,512], index: 6, kind: input, shape index: {}]
  %s7 = inlined_call_operand.hbm [shape: f32[128,512], index: 7, kind: input, shape index: {}]
  %s8 = inlined_call_operand.hbm [shape: f32[128,512], index: 8, kind: input, shape index: {}]
  %s9 = inlined_call_operand.vmem [shape: f32[1,512], index: 9, kind: input, shape index: {}]
  %s10 = inlined_call_operand.vmem [shape: f32[128,26], index: 10, kind: input, shape index: {}]
  %s11 = inlined_call_operand.vmem [shape: f32[1,26], index: 11, kind: input, shape index: {}]
  %s12 = inlined_call_operand.hbm [shape: f32[2,8], index: 12, kind: output, shape index: {0}]
  %s13 = inlined_call_operand.vmem [shape: f32[2,5,26], index: 13, kind: output, shape index: {1}]
  %14 = xla_tuple %s12, %s13
  %s15 = sld [smem:[#allocation0]]
  $region86: #{autoencoder_forward.1} parent=0
    _
  %s17 = ssub.s32 1, %s15
  %s18 = scalar_select 0, %s17, %s15
  $region1: #{autoencoder_forward.1} parent=0
    #allocation2 [shape = 'u8[262144]{0}', space=vmem, size = 0x40000, scoped, tag = 'input window, operand 2, single buffered']
    #allocation3 [shape = 's32[1]{0}', space=sflag, size = 0x4, scoped, tag = 'scoped memory for autoencoder_forward.1']
    #allocation4 [shape = 's32[1]{0}', space=sflag, size = 0x4, scoped, tag = 'scoped memory for autoencoder_forward.1']
    #allocation5 [shape = 'u8[262144]{0}', space=vmem, size = 0x40000, scoped, tag = 'input window, operand 4, single buffered']
    #allocation6 [shape = 's32[1]{0}', space=sflag, size = 0x4, scoped, tag = 'scoped memory for autoencoder_forward.1']
    #allocation7 [shape = 'u8[262144]{0}', space=vmem, size = 0x40000, scoped, tag = 'input window, operand 5, single buffered']
    #allocation8 [shape = 'u8[262144]{0}', space=vmem, size = 0x40000, scoped, tag = 'input window, operand 7, single buffered']
    #allocation9 [shape = 's32[1]{0}', space=sflag, size = 0x4, scoped, tag = 'scoped memory for autoencoder_forward.1']
    #allocation10 [shape = 'u8[262144]{0}', space=vmem, size = 0x40000, scoped, tag = 'input window, operand 8, single buffered']
    #allocation11 [shape = 'u8[1024]{0}', space=vmem, size = 0x400, scoped, tag = 'output window, operand 0, single buffered']
    %19 = vsyncpa [#allocation3], 0
    %20 = vsyncpa [#allocation6], 0
    %21 = vsyncpa [#allocation9], 0
    %22 = vsyncpa [#allocation4], 0
    // Predicated region
    $region2: #{autoencoder_forward.1} parent=1 // pred_check
      _
    $region3: #{autoencoder_forward.1} parent=1 // pred_check_branch
      %24 = sbr.rel (0) target = $region5
    $region4: #{autoencoder_forward.1} parent=1 // pred_region
      _
    $region5: #{autoencoder_forward.1} parent=1 // pred_fallthru
      _
    // Predicated region
    $region6: #{autoencoder_forward.1} parent=1 // pred_check
      _
    $region7: #{autoencoder_forward.1} parent=1 // pred_check_branch
      %26 = sbr.rel (0) target = $region9
    $region8: #{autoencoder_forward.1} parent=1 // pred_region
      _
    $region9: #{autoencoder_forward.1} parent=1 // pred_fallthru
      _
    // Predicated region
    $region10: #{autoencoder_forward.1} parent=1 // pred_check
      _
    $region11: #{autoencoder_forward.1} parent=1 // pred_check_branch
      %28 = sbr.rel (0) target = $region13
    $region12: #{autoencoder_forward.1} parent=1 // pred_region
      %s30 = ssub.s32 8192, 8192
      %31 = vsyncadd [#allocation3], %s30
      %s32 = sshll.u32 [#allocation2], 4
      %s33 = int_to_ptr.vmem [resolvable:$true] %s32
      %38 = dma.hbm_to_vmem [thread:$0]  %s2, 8192, %s33, [#allocation3], 512, 512, 32
    $region13: #{autoencoder_forward.1} parent=1 // pred_fallthru
      _
    // Predicated region
    $region14: #{autoencoder_forward.1} parent=1 // pred_check
      _
    $region15: #{autoencoder_forward.1} parent=1 // pred_check_branch
      %40 = sbr.rel (0) target = $region17
    $region16: #{autoencoder_forward.1} parent=1 // pred_region
      _
    $region17: #{autoencoder_forward.1} parent=1 // pred_fallthru
      _
    // Predicated region
    $region18: #{autoencoder_forward.1} parent=1 // pred_check
      _
    $region19: #{autoencoder_forward.1} parent=1 // pred_check_branch
      %42 = sbr.rel (0) target = $region21
    $region20: #{autoencoder_forward.1} parent=1 // pred_region
      %s44 = ssub.s32 8192, 8192
      %45 = vsyncadd [#allocation6], %s44
      %s46 = sshll.u32 [#allocation5], 4
      %s47 = int_to_ptr.vmem [resolvable:$true] %s46
      %52 = dma.hbm_to_vmem [thread:$0]  %s4, 8192, %s47, [#allocation6], 512, 512, 32
    $region21: #{autoencoder_forward.1} parent=1 // pred_fallthru
      _
    // Predicated region
    $region22: #{autoencoder_forward.1} parent=1 // pred_check
      _
    $region23: #{autoencoder_forward.1} parent=1 // pred_check_branch
      %54 = sbr.rel (0) target = $region25
    $region24: #{autoencoder_forward.1} parent=1 // pred_region
      %s56 = ssub.s32 8192, 8192
      %57 = vsyncadd [#allocation6], %s56
      %s58 = sshll.u32 [#allocation7], 4
      %s59 = int_to_ptr.vmem [resolvable:$true] %s58
      %64 = dma.hbm_to_vmem [thread:$0]  %s5, 8192, %s59, [#allocation6], 512, 512, 32
    $region25: #{autoencoder_forward.1} parent=1 // pred_fallthru
      _
    // Predicated region
    $region26: #{autoencoder_forward.1} parent=1 // pred_check
      _
    $region27: #{autoencoder_forward.1} parent=1 // pred_check_branch
      %66 = sbr.rel (0) target = $region29
    $region28: #{autoencoder_forward.1} parent=1 // pred_region
      _
    $region29: #{autoencoder_forward.1} parent=1 // pred_fallthru
      _
    // Predicated region
    $region30: #{autoencoder_forward.1} parent=1 // pred_check
      _
    $region31: #{autoencoder_forward.1} parent=1 // pred_check_branch
      %68 = sbr.rel (0) target = $region33
    $region32: #{autoencoder_forward.1} parent=1 // pred_region
      %s70 = ssub.s32 8192, 8192
      %71 = vsyncadd [#allocation9], %s70
      %s72 = sshll.u32 [#allocation8], 4
      %s73 = int_to_ptr.vmem [resolvable:$true] %s72
      %78 = dma.hbm_to_vmem [thread:$0]  %s7, 8192, %s73, [#allocation9], 512, 512, 32
    $region33: #{autoencoder_forward.1} parent=1 // pred_fallthru
      _
    // Predicated region
    $region34: #{autoencoder_forward.1} parent=1 // pred_check
      _
    $region35: #{autoencoder_forward.1} parent=1 // pred_check_branch
      %80 = sbr.rel (0) target = $region37
    $region36: #{autoencoder_forward.1} parent=1 // pred_region
      %s82 = ssub.s32 8192, 8192
      %83 = vsyncadd [#allocation9], %s82
      %s84 = sshll.u32 [#allocation10], 4
      %s85 = int_to_ptr.vmem [resolvable:$true] %s84
      %90 = dma.hbm_to_vmem [thread:$0]  %s8, 8192, %s85, [#allocation9], 512, 512, 32
    $region37: #{autoencoder_forward.1} parent=1 // pred_fallthru
      _
    // Predicated region
    $region38: #{autoencoder_forward.1} parent=1 // pred_check
      _
    $region39: #{autoencoder_forward.1} parent=1 // pred_check_branch
      %92 = sbr.rel (0) target = $region41
    $region40: #{autoencoder_forward.1} parent=1 // pred_region
      _
    $region41: #{autoencoder_forward.1} parent=1 // pred_fallthru
      _
    // Predicated region
    $region42: #{autoencoder_forward.1} parent=1 // pred_check
      _
    $region43: #{autoencoder_forward.1} parent=1 // pred_check_branch
      %94 = sbr.rel (0) target = $region45
    $region44: #{autoencoder_forward.1} parent=1 // pred_region
      _
    $region45: #{autoencoder_forward.1} parent=1 // pred_fallthru
      _
    // Predicated region
    $region46: #{autoencoder_forward.1} parent=1 // pred_check
      _
    $region47: #{autoencoder_forward.1} parent=1 // pred_check_branch
      %96 = sbr.rel (0) target = $region49
    $region48: #{autoencoder_forward.1} parent=1 // pred_region
      _
    $region49: #{autoencoder_forward.1} parent=1 // pred_fallthru
      _
    // Predicated region
    $region50: #{autoencoder_forward.1} parent=1 // pred_check
      _
    $region51: #{autoencoder_forward.1} parent=1 // pred_check_branch
      %98 = sbr.rel (0) target = $region53
    $region52: #{autoencoder_forward.1} parent=1 // pred_region
      %99 = dma.done [#allocation3], 8192
    $region53: #{autoencoder_forward.1} parent=1 // pred_fallthru
      _
    // Predicated region
    $region54: #{autoencoder_forward.1} parent=1 // pred_check
      _
    $region55: #{autoencoder_forward.1} parent=1 // pred_check_branch
      %101 = sbr.rel (0) target = $region57
    $region56: #{autoencoder_forward.1} parent=1 // pred_region
      %102 = dma.done [#allocation6], 8192
    $region57: #{autoencoder_forward.1} parent=1 // pred_fallthru
      _
    // Predicated region
    $region58: #{autoencoder_forward.1} parent=1 // pred_check
      _
    $region59: #{autoencoder_forward.1} parent=1 // pred_check_branch
      %104 = sbr.rel (0) target = $region61
    $region60: #{autoencoder_forward.1} parent=1 // pred_region
      %105 = dma.done [#allocation6], 8192
    $region61: #{autoencoder_forward.1} parent=1 // pred_fallthru
      _
    // Predicated region
    $region62: #{autoencoder_forward.1} parent=1 // pred_check
      _
    $region63: #{autoencoder_forward.1} parent=1 // pred_check_branch
      %107 = sbr.rel (0) target = $region65
    $region64: #{autoencoder_forward.1} parent=1 // pred_region
      %108 = dma.done [#allocation9], 8192
    $region65: #{autoencoder_forward.1} parent=1 // pred_fallthru
      _
    // Predicated region
    $region66: #{autoencoder_forward.1} parent=1 // pred_check
      _
    $region67: #{autoencoder_forward.1} parent=1 // pred_check_branch
      %110 = sbr.rel (0) target = $region69
    $region68: #{autoencoder_forward.1} parent=1 // pred_region
      %111 = dma.done [#allocation9], 8192
    $region69: #{autoencoder_forward.1} parent=1 // pred_fallthru
      _
    %v112 = vld [vmem:[%s1] sm:$0xff]
    %v113 = vld [vmem:[%s1 + $0x8] sm:$0xff]
    %v114 = vld [vmem:[%s1 + $0x10] sm:$0xff]
    %v115 = vld [vmem:[%s1 + $0x18] sm:$0xff]
    %v116 = vld [vmem:[%s1 + $0x20] sm:$0xff]
    %v117 = vld [vmem:[%s1 + $0x28] sm:$0xff]
    %v118 = vld [vmem:[%s1 + $0x30] sm:$0xff]
    %v119 = vld [vmem:[%s1 + $0x38] sm:$0xff]
    %v120 = vld [vmem:[%s1 + $0x40] sm:$0xff]
    %v121 = vld [vmem:[%s1 + $0x48] sm:$0xff]
    %v122 = vld [vmem:[%s1 + $0x50] sm:$0xff]
    %v123 = vld [vmem:[%s1 + $0x58] sm:$0xff]
    %v124 = vld [vmem:[%s1 + $0x60] sm:$0x3]
    %v125 = vld [vmem:[%s1 + $0x68] sm:$0x3]
    %v126 = vld [vmem:[%s1 + $0x70] sm:$0x3]
    %v127 = vld [vmem:[%s1 + $0x78] sm:$0x3]
    %v128 = vld [vmem:[#allocation2] sm:$0xff]
    %v129 = vld [vmem:[#allocation2 + $0x8] sm:$0xff]
    %v130 = vld [vmem:[#allocation2 + $0x10] sm:$0xff]
    %v131 = vld [vmem:[#allocation2 + $0x18] sm:$0xff]
    %v132 = vld [vmem:[#allocation2 + $0x20] sm:$0xff]
    %v133 = vld [vmem:[#allocation2 + $0x28] sm:$0xff]
    %v134 = vld [vmem:[#allocation2 + $0x30] sm:$0xff]
    %v135 = vld [vmem:[#allocation2 + $0x38] sm:$0xff]
    %v136 = vld [vmem:[#allocation2 + $0x40] sm:$0xff]
    %v137 = vld [vmem:[#allocation2 + $0x48] sm:$0xff]
    %v138 = vld [vmem:[#allocation2 + $0x50] sm:$0xff]
    %v139 = vld [vmem:[#allocation2 + $0x58] sm:$0xff]
    %v140 = vld [vmem:[#allocation2 + $0x60] sm:$0xff]
    %v141 = vld [vmem:[#allocation2 + $0x68] sm:$0xff]
    %v142 = vld [vmem:[#allocation2 + $0x70] sm:$0xff]
    %v143 = vld [vmem:[#allocation2 + $0x78] sm:$0xff]
    %v144 = vld [vmem:[#allocation2 + $0x80] sm:$0xff]
    %v145 = vld [vmem:[#allocation2 + $0x88] sm:$0xff]
    %v146 = vld [vmem:[#allocation2 + $0x90] sm:$0xff]
    %v147 = vld [vmem:[#allocation2 + $0x98] sm:$0xff]
    %v148 = vld [vmem:[#allocation2 + $0xa0] sm:$0xff]
    %v149 = vld [vmem:[#allocation2 + $0xa8] sm:$0xff]
    %v150 = vld [vmem:[#allocation2 + $0xb0] sm:$0xff]
    %v151 = vld [vmem:[#allocation2 + $0xb8] sm:$0xff]
    %v152 = vld [vmem:[#allocation2 + $0xc0] sm:$0xff]
    %v153 = vld [vmem:[#allocation2 + $0xc8] sm:$0xff]
    %v154 = vld [vmem:[#allocation2 + $0xd0] sm:$0xff]
    %v155 = vld [vmem:[#allocation2 + $0xd8] sm:$0xff]
    %v156 = vld [vmem:[#allocation2 + $0xe0] sm:$0xff]
    %v157 = vld [vmem:[#allocation2 + $0xe8] sm:$0xff]
    %v158 = vld [vmem:[#allocation2 + $0xf0] sm:$0xff]
    %v159 = vld [vmem:[#allocation2 + $0xf8] sm:$0xff]
    %v160 = vld [vmem:[#allocation2 + $0x100] sm:$0xff]
    %v161 = vld [vmem:[#allocation2 + $0x108] sm:$0xff]
    %v162 = vld [vmem:[#allocation2 + $0x110] sm:$0xff]
    %v163 = vld [vmem:[#allocation2 + $0x118] sm:$0xff]
    %v164 = vld [vmem:[#allocation2 + $0x120] sm:$0xff]
    %v165 = vld [vmem:[#allocation2 + $0x128] sm:$0xff]
    %v166 = vld [vmem:[#allocation2 + $0x130] sm:$0xff]
    %v167 = vld [vmem:[#allocation2 + $0x138] sm:$0xff]
    %v168 = vld [vmem:[#allocation2 + $0x140] sm:$0xff]
    %v169 = vld [vmem:[#allocation2 + $0x148] sm:$0xff]
    %v170 = vld [vmem:[#allocation2 + $0x150] sm:$0xff]
    %v171 = vld [vmem:[#allocation2 + $0x158] sm:$0xff]
    %v172 = vld [vmem:[#allocation2 + $0x160] sm:$0xff]
    %v173 = vld [vmem:[#allocation2 + $0x168] sm:$0xff]
    %v174 = vld [vmem:[#allocation2 + $0x170] sm:$0xff]
    %v175 = vld [vmem:[#allocation2 + $0x178] sm:$0xff]
    %v176 = vld [vmem:[#allocation2 + $0x180] sm:$0xff]
    %v177 = vld [vmem:[#allocation2 + $0x188] sm:$0xff]
    %v178 = vld [vmem:[#allocation2 + $0x190] sm:$0xff]
    %v179 = vld [vmem:[#allocation2 + $0x198] sm:$0xff]
    %v180 = vld [vmem:[#allocation2 + $0x1a0] sm:$0xff]
    %v181 = vld [vmem:[#allocation2 + $0x1a8] sm:$0xff]
    %v182 = vld [vmem:[#allocation2 + $0x1b0] sm:$0xff]
    %v183 = vld [vmem:[#allocation2 + $0x1b8] sm:$0xff]
    %v184 = vld [vmem:[#allocation2 + $0x1c0] sm:$0xff]
    %v185 = vld [vmem:[#allocation2 + $0x1c8] sm:$0xff]
    %v186 = vld [vmem:[#allocation2 + $0x1d0] sm:$0xff]
    %v187 = vld [vmem:[#allocation2 + $0x1d8] sm:$0xff]
    %v188 = vld [vmem:[#allocation2 + $0x1e0] sm:$0xff]
    %v189 = vld [vmem:[#allocation2 + $0x1e8] sm:$0xff]
    %v190 = vld [vmem:[#allocation2 + $0x1f0] sm:$0xff]
    %v191 = vld [vmem:[#allocation2 + $0x1f8] sm:$0xff]
    %v192 = vld [vmem:[%s3] sm:$0xf]
    %v193 = vld [vmem:[#allocation5] sm:$0xff]
    %v194 = vld [vmem:[#allocation5 + $0x8] sm:$0xff]
    %v195 = vld [vmem:[#allocation5 + $0x10] sm:$0xff]
    %v196 = vld [vmem:[#allocation5 + $0x18] sm:$0xff]
    %v197 = vld [vmem:[#allocation5 + $0x20] sm:$0xff]
    %v198 = vld [vmem:[#allocation5 + $0x28] sm:$0xff]
    %v199 = vld [vmem:[#allocation5 + $0x30] sm:$0xff]
    %v200 = vld [vmem:[#allocation5 + $0x38] sm:$0xff]
    %v201 = vld [vmem:[#allocation5 + $0x40] sm:$0xff]
    %v202 = vld [vmem:[#allocation5 + $0x48] sm:$0xff]
    %v203 = vld [vmem:[#allocation5 + $0x50] sm:$0xff]
    %v204 = vld [vmem:[#allocation5 + $0x58] sm:$0xff]
    %v205 = vld [vmem:[#allocation5 + $0x60] sm:$0xff]
    %v206 = vld [vmem:[#allocation5 + $0x68] sm:$0xff]
    %v207 = vld [vmem:[#allocation5 + $0x70] sm:$0xff]
    %v208 = vld [vmem:[#allocation5 + $0x78] sm:$0xff]
    %v209 = vld [vmem:[#allocation5 + $0x80] sm:$0xff]
    %v210 = vld [vmem:[#allocation5 + $0x88] sm:$0xff]
    %v211 = vld [vmem:[#allocation5 + $0x90] sm:$0xff]
    %v212 = vld [vmem:[#allocation5 + $0x98] sm:$0xff]
    %v213 = vld [vmem:[#allocation5 + $0xa0] sm:$0xff]
    %v214 = vld [vmem:[#allocation5 + $0xa8] sm:$0xff]
    %v215 = vld [vmem:[#allocation5 + $0xb0] sm:$0xff]
    %v216 = vld [vmem:[#allocation5 + $0xb8] sm:$0xff]
    %v217 = vld [vmem:[#allocation5 + $0xc0] sm:$0xff]
    %v218 = vld [vmem:[#allocation5 + $0xc8] sm:$0xff]
    %v219 = vld [vmem:[#allocation5 + $0xd0] sm:$0xff]
    %v220 = vld [vmem:[#allocation5 + $0xd8] sm:$0xff]
    %v221 = vld [vmem:[#allocation5 + $0xe0] sm:$0xff]
    %v222 = vld [vmem:[#allocation5 + $0xe8] sm:$0xff]
    %v223 = vld [vmem:[#allocation5 + $0xf0] sm:$0xff]
    %v224 = vld [vmem:[#allocation5 + $0xf8] sm:$0xff]
    %v225 = vld [vmem:[#allocation5 + $0x100] sm:$0xff]
    %v226 = vld [vmem:[#allocation5 + $0x108] sm:$0xff]
    %v227 = vld [vmem:[#allocation5 + $0x110] sm:$0xff]
    %v228 = vld [vmem:[#allocation5 + $0x118] sm:$0xff]
    %v229 = vld [vmem:[#allocation5 + $0x120] sm:$0xff]
    %v230 = vld [vmem:[#allocation5 + $0x128] sm:$0xff]
    %v231 = vld [vmem:[#allocation5 + $0x130] sm:$0xff]
    %v232 = vld [vmem:[#allocation5 + $0x138] sm:$0xff]
    %v233 = vld [vmem:[#allocation5 + $0x140] sm:$0xff]
    %v234 = vld [vmem:[#allocation5 + $0x148] sm:$0xff]
    %v235 = vld [vmem:[#allocation5 + $0x150] sm:$0xff]
    %v236 = vld [vmem:[#allocation5 + $0x158] sm:$0xff]
    %v237 = vld [vmem:[#allocation5 + $0x160] sm:$0xff]
    %v238 = vld [vmem:[#allocation5 + $0x168] sm:$0xff]
    %v239 = vld [vmem:[#allocation5 + $0x170] sm:$0xff]
    %v240 = vld [vmem:[#allocation5 + $0x178] sm:$0xff]
    %v241 = vld [vmem:[#allocation5 + $0x180] sm:$0xff]
    %v242 = vld [vmem:[#allocation5 + $0x188] sm:$0xff]
    %v243 = vld [vmem:[#allocation5 + $0x190] sm:$0xff]
    %v244 = vld [vmem:[#allocation5 + $0x198] sm:$0xff]
    %v245 = vld [vmem:[#allocation5 + $0x1a0] sm:$0xff]
    %v246 = vld [vmem:[#allocation5 + $0x1a8] sm:$0xff]
    %v247 = vld [vmem:[#allocation5 + $0x1b0] sm:$0xff]
    %v248 = vld [vmem:[#allocation5 + $0x1b8] sm:$0xff]
    %v249 = vld [vmem:[#allocation5 + $0x1c0] sm:$0xff]
    %v250 = vld [vmem:[#allocation5 + $0x1c8] sm:$0xff]
    %v251 = vld [vmem:[#allocation5 + $0x1d0] sm:$0xff]
    %v252 = vld [vmem:[#allocation5 + $0x1d8] sm:$0xff]
    %v253 = vld [vmem:[#allocation5 + $0x1e0] sm:$0xff]
    %v254 = vld [vmem:[#allocation5 + $0x1e8] sm:$0xff]
    %v255 = vld [vmem:[#allocation5 + $0x1f0] sm:$0xff]
    %v256 = vld [vmem:[#allocation5 + $0x1f8] sm:$0xff]
    %v257 = vld [vmem:[#allocation7] sm:$0xff]
    %v258 = vld [vmem:[#allocation7 + $0x8] sm:$0xff]
    %v259 = vld [vmem:[#allocation7 + $0x10] sm:$0xff]
    %v260 = vld [vmem:[#allocation7 + $0x18] sm:$0xff]
    %v261 = vld [vmem:[#allocation7 + $0x20] sm:$0xff]
    %v262 = vld [vmem:[#allocation7 + $0x28] sm:$0xff]
    %v263 = vld [vmem:[#allocation7 + $0x30] sm:$0xff]
    %v264 = vld [vmem:[#allocation7 + $0x38] sm:$0xff]
    %v265 = vld [vmem:[#allocation7 + $0x40] sm:$0xff]
    %v266 = vld [vmem:[#allocation7 + $0x48] sm:$0xff]
    %v267 = vld [vmem:[#allocation7 + $0x50] sm:$0xff]
    %v268 = vld [vmem:[#allocation7 + $0x58] sm:$0xff]
    %v269 = vld [vmem:[#allocation7 + $0x60] sm:$0xff]
    %v270 = vld [vmem:[#allocation7 + $0x68] sm:$0xff]
    %v271 = vld [vmem:[#allocation7 + $0x70] sm:$0xff]
    %v272 = vld [vmem:[#allocation7 + $0x78] sm:$0xff]
    %v273 = vld [vmem:[#allocation7 + $0x80] sm:$0xff]
    %v274 = vld [vmem:[#allocation7 + $0x88] sm:$0xff]
    %v275 = vld [vmem:[#allocation7 + $0x90] sm:$0xff]
    %v276 = vld [vmem:[#allocation7 + $0x98] sm:$0xff]
    %v277 = vld [vmem:[#allocation7 + $0xa0] sm:$0xff]
    %v278 = vld [vmem:[#allocation7 + $0xa8] sm:$0xff]
    %v279 = vld [vmem:[#allocation7 + $0xb0] sm:$0xff]
    %v280 = vld [vmem:[#allocation7 + $0xb8] sm:$0xff]
    %v281 = vld [vmem:[#allocation7 + $0xc0] sm:$0xff]
    %v282 = vld [vmem:[#allocation7 + $0xc8] sm:$0xff]
    %v283 = vld [vmem:[#allocation7 + $0xd0] sm:$0xff]
    %v284 = vld [vmem:[#allocation7 + $0xd8] sm:$0xff]
    %v285 = vld [vmem:[#allocation7 + $0xe0] sm:$0xff]
    %v286 = vld [vmem:[#allocation7 + $0xe8] sm:$0xff]
    %v287 = vld [vmem:[#allocation7 + $0xf0] sm:$0xff]
    %v288 = vld [vmem:[#allocation7 + $0xf8] sm:$0xff]
    %v289 = vld [vmem:[#allocation7 + $0x100] sm:$0xff]
    %v290 = vld [vmem:[#allocation7 + $0x108] sm:$0xff]
    %v291 = vld [vmem:[#allocation7 + $0x110] sm:$0xff]
    %v292 = vld [vmem:[#allocation7 + $0x118] sm:$0xff]
    %v293 = vld [vmem:[#allocation7 + $0x120] sm:$0xff]
    %v294 = vld [vmem:[#allocation7 + $0x128] sm:$0xff]
    %v295 = vld [vmem:[#allocation7 + $0x130] sm:$0xff]
    %v296 = vld [vmem:[#allocation7 + $0x138] sm:$0xff]
    %v297 = vld [vmem:[#allocation7 + $0x140] sm:$0xff]
    %v298 = vld [vmem:[#allocation7 + $0x148] sm:$0xff]
    %v299 = vld [vmem:[#allocation7 + $0x150] sm:$0xff]
    %v300 = vld [vmem:[#allocation7 + $0x158] sm:$0xff]
    %v301 = vld [vmem:[#allocation7 + $0x160] sm:$0xff]
    %v302 = vld [vmem:[#allocation7 + $0x168] sm:$0xff]
    %v303 = vld [vmem:[#allocation7 + $0x170] sm:$0xff]
    %v304 = vld [vmem:[#allocation7 + $0x178] sm:$0xff]
    %v305 = vld [vmem:[#allocation7 + $0x180] sm:$0xff]
    %v306 = vld [vmem:[#allocation7 + $0x188] sm:$0xff]
    %v307 = vld [vmem:[#allocation7 + $0x190] sm:$0xff]
    %v308 = vld [vmem:[#allocation7 + $0x198] sm:$0xff]
    %v309 = vld [vmem:[#allocation7 + $0x1a0] sm:$0xff]
    %v310 = vld [vmem:[#allocation7 + $0x1a8] sm:$0xff]
    %v311 = vld [vmem:[#allocation7 + $0x1b0] sm:$0xff]
    %v312 = vld [vmem:[#allocation7 + $0x1b8] sm:$0xff]
    %v313 = vld [vmem:[#allocation7 + $0x1c0] sm:$0xff]
    %v314 = vld [vmem:[#allocation7 + $0x1c8] sm:$0xff]
    %v315 = vld [vmem:[#allocation7 + $0x1d0] sm:$0xff]
    %v316 = vld [vmem:[#allocation7 + $0x1d8] sm:$0xff]
    %v317 = vld [vmem:[#allocation7 + $0x1e0] sm:$0xff]
    %v318 = vld [vmem:[#allocation7 + $0x1e8] sm:$0xff]
    %v319 = vld [vmem:[#allocation7 + $0x1f0] sm:$0xff]
    %v320 = vld [vmem:[#allocation7 + $0x1f8] sm:$0xff]
    %v321 = vld [vmem:[%s6] sm:$0xf]
    %v322 = vld [vmem:[#allocation8] sm:$0xff]
    %v323 = vld [vmem:[#allocation8 + $0x8] sm:$0xff]
    %v324 = vld [vmem:[#allocation8 + $0x10] sm:$0xff]
    %v325 = vld [vmem:[#allocation8 + $0x18] sm:$0xff]
    %v326 = vld [vmem:[#allocation8 + $0x20] sm:$0xff]
    %v327 = vld [vmem:[#allocation8 + $0x28] sm:$0xff]
    %v328 = vld [vmem:[#allocation8 + $0x30] sm:$0xff]
    %v329 = vld [vmem:[#allocation8 + $0x38] sm:$0xff]
    %v330 = vld [vmem:[#allocation8 + $0x40] sm:$0xff]
    %v331 = vld [vmem:[#allocation8 + $0x48] sm:$0xff]
    %v332 = vld [vmem:[#allocation8 + $0x50] sm:$0xff]
    %v333 = vld [vmem:[#allocation8 + $0x58] sm:$0xff]
    %v334 = vld [vmem:[#allocation8 + $0x60] sm:$0xff]
    %v335 = vld [vmem:[#allocation8 + $0x68] sm:$0xff]
    %v336 = vld [vmem:[#allocation8 + $0x70] sm:$0xff]
    %v337 = vld [vmem:[#allocation8 + $0x78] sm:$0xff]
    %v338 = vld [vmem:[#allocation8 + $0x80] sm:$0xff]
    %v339 = vld [vmem:[#allocation8 + $0x88] sm:$0xff]
    %v340 = vld [vmem:[#allocation8 + $0x90] sm:$0xff]
    %v341 = vld [vmem:[#allocation8 + $0x98] sm:$0xff]
    %v342 = vld [vmem:[#allocation8 + $0xa0] sm:$0xff]
    %v343 = vld [vmem:[#allocation8 + $0xa8] sm:$0xff]
    %v344 = vld [vmem:[#allocation8 + $0xb0] sm:$0xff]
    %v345 = vld [vmem:[#allocation8 + $0xb8] sm:$0xff]
    %v346 = vld [vmem:[#allocation8 + $0xc0] sm:$0xff]
    %v347 = vld [vmem:[#allocation8 + $0xc8] sm:$0xff]
    %v348 = vld [vmem:[#allocation8 + $0xd0] sm:$0xff]
    %v349 = vld [vmem:[#allocation8 + $0xd8] sm:$0xff]
    %v350 = vld [vmem:[#allocation8 + $0xe0] sm:$0xff]
    %v351 = vld [vmem:[#allocation8 + $0xe8] sm:$0xff]
    %v352 = vld [vmem:[#allocation8 + $0xf0] sm:$0xff]
    %v353 = vld [vmem:[#allocation8 + $0xf8] sm:$0xff]
    %v354 = vld [vmem:[#allocation8 + $0x100] sm:$0xff]
    %v355 = vld [vmem:[#allocation8 + $0x108] sm:$0xff]
    %v356 = vld [vmem:[#allocation8 + $0x110] sm:$0xff]
    %v357 = vld [vmem:[#allocation8 + $0x118] sm:$0xff]
    %v358 = vld [vmem:[#allocation8 + $0x120] sm:$0xff]
    %v359 = vld [vmem:[#allocation8 + $0x128] sm:$0xff]
    %v360 = vld [vmem:[#allocation8 + $0x130] sm:$0xff]
    %v361 = vld [vmem:[#allocation8 + $0x138] sm:$0xff]
    %v362 = vld [vmem:[#allocation8 + $0x140] sm:$0xff]
    %v363 = vld [vmem:[#allocation8 + $0x148] sm:$0xff]
    %v364 = vld [vmem:[#allocation8 + $0x150] sm:$0xff]
    %v365 = vld [vmem:[#allocation8 + $0x158] sm:$0xff]
    %v366 = vld [vmem:[#allocation8 + $0x160] sm:$0xff]
    %v367 = vld [vmem:[#allocation8 + $0x168] sm:$0xff]
    %v368 = vld [vmem:[#allocation8 + $0x170] sm:$0xff]
    %v369 = vld [vmem:[#allocation8 + $0x178] sm:$0xff]
    %v370 = vld [vmem:[#allocation8 + $0x180] sm:$0xff]
    %v371 = vld [vmem:[#allocation8 + $0x188] sm:$0xff]
    %v372 = vld [vmem:[#allocation8 + $0x190] sm:$0xff]
    %v373 = vld [vmem:[#allocation8 + $0x198] sm:$0xff]
    %v374 = vld [vmem:[#allocation8 + $0x1a0] sm:$0xff]
    %v375 = vld [vmem:[#allocation8 + $0x1a8] sm:$0xff]
    %v376 = vld [vmem:[#allocation8 + $0x1b0] sm:$0xff]
    %v377 = vld [vmem:[#allocation8 + $0x1b8] sm:$0xff]
    %v378 = vld [vmem:[#allocation8 + $0x1c0] sm:$0xff]
    %v379 = vld [vmem:[#allocation8 + $0x1c8] sm:$0xff]
    %v380 = vld [vmem:[#allocation8 + $0x1d0] sm:$0xff]
    %v381 = vld [vmem:[#allocation8 + $0x1d8] sm:$0xff]
    %v382 = vld [vmem:[#allocation8 + $0x1e0] sm:$0xff]
    %v383 = vld [vmem:[#allocation8 + $0x1e8] sm:$0xff]
    %v384 = vld [vmem:[#allocation8 + $0x1f0] sm:$0xff]
    %v385 = vld [vmem:[#allocation8 + $0x1f8] sm:$0xff]
    %v386 = vld [vmem:[#allocation10] sm:$0xff]
    %v387 = vld [vmem:[#allocation10 + $0x8] sm:$0xff]
    %v388 = vld [vmem:[#allocation10 + $0x10] sm:$0xff]
    %v389 = vld [vmem:[#allocation10 + $0x18] sm:$0xff]
    %v390 = vld [vmem:[#allocation10 + $0x20] sm:$0xff]
    %v391 = vld [vmem:[#allocation10 + $0x28] sm:$0xff]
    %v392 = vld [vmem:[#allocation10 + $0x30] sm:$0xff]
    %v393 = vld [vmem:[#allocation10 + $0x38] sm:$0xff]
    %v394 = vld [vmem:[#allocation10 + $0x40] sm:$0xff]
    %v395 = vld [vmem:[#allocation10 + $0x48] sm:$0xff]
    %v396 = vld [vmem:[#allocation10 + $0x50] sm:$0xff]
    %v397 = vld [vmem:[#allocation10 + $0x58] sm:$0xff]
    %v398 = vld [vmem:[#allocation10 + $0x60] sm:$0xff]
    %v399 = vld [vmem:[#allocation10 + $0x68] sm:$0xff]
    %v400 = vld [vmem:[#allocation10 + $0x70] sm:$0xff]
    %v401 = vld [vmem:[#allocation10 + $0x78] sm:$0xff]
    %v402 = vld [vmem:[#allocation10 + $0x80] sm:$0xff]
    %v403 = vld [vmem:[#allocation10 + $0x88] sm:$0xff]
    %v404 = vld [vmem:[#allocation10 + $0x90] sm:$0xff]
    %v405 = vld [vmem:[#allocation10 + $0x98] sm:$0xff]
    %v406 = vld [vmem:[#allocation10 + $0xa0] sm:$0xff]
    %v407 = vld [vmem:[#allocation10 + $0xa8] sm:$0xff]
    %v408 = vld [vmem:[#allocation10 + $0xb0] sm:$0xff]
    %v409 = vld [vmem:[#allocation10 + $0xb8] sm:$0xff]
    %v410 = vld [vmem:[#allocation10 + $0xc0] sm:$0xff]
    %v411 = vld [vmem:[#allocation10 + $0xc8] sm:$0xff]
    %v412 = vld [vmem:[#allocation10 + $0xd0] sm:$0xff]
    %v413 = vld [vmem:[#allocation10 + $0xd8] sm:$0xff]
    %v414 = vld [vmem:[#allocation10 + $0xe0] sm:$0xff]
    %v415 = vld [vmem:[#allocation10 + $0xe8] sm:$0xff]
    %v416 = vld [vmem:[#allocation10 + $0xf0] sm:$0xff]
    %v417 = vld [vmem:[#allocation10 + $0xf8] sm:$0xff]
    %v418 = vld [vmem:[#allocation10 + $0x100] sm:$0xff]
    %v419 = vld [vmem:[#allocation10 + $0x108] sm:$0xff]
    %v420 = vld [vmem:[#allocation10 + $0x110] sm:$0xff]
    %v421 = vld [vmem:[#allocation10 + $0x118] sm:$0xff]
    %v422 = vld [vmem:[#allocation10 + $0x120] sm:$0xff]
    %v423 = vld [vmem:[#allocation10 + $0x128] sm:$0xff]
    %v424 = vld [vmem:[#allocation10 + $0x130] sm:$0xff]
    %v425 = vld [vmem:[#allocation10 + $0x138] sm:$0xff]
    %v426 = vld [vmem:[#allocation10 + $0x140] sm:$0xff]
    %v427 = vld [vmem:[#allocation10 + $0x148] sm:$0xff]
    %v428 = vld [vmem:[#allocation10 + $0x150] sm:$0xff]
    %v429 = vld [vmem:[#allocation10 + $0x158] sm:$0xff]
    %v430 = vld [vmem:[#allocation10 + $0x160] sm:$0xff]
    %v431 = vld [vmem:[#allocation10 + $0x168] sm:$0xff]
    %v432 = vld [vmem:[#allocation10 + $0x170] sm:$0xff]
    %v433 = vld [vmem:[#allocation10 + $0x178] sm:$0xff]
    %v434 = vld [vmem:[#allocation10 + $0x180] sm:$0xff]
    %v435 = vld [vmem:[#allocation10 + $0x188] sm:$0xff]
    %v436 = vld [vmem:[#allocation10 + $0x190] sm:$0xff]
    %v437 = vld [vmem:[#allocation10 + $0x198] sm:$0xff]
    %v438 = vld [vmem:[#allocation10 + $0x1a0] sm:$0xff]
    %v439 = vld [vmem:[#allocation10 + $0x1a8] sm:$0xff]
    %v440 = vld [vmem:[#allocation10 + $0x1b0] sm:$0xff]
    %v441 = vld [vmem:[#allocation10 + $0x1b8] sm:$0xff]
    %v442 = vld [vmem:[#allocation10 + $0x1c0] sm:$0xff]
    %v443 = vld [vmem:[#allocation10 + $0x1c8] sm:$0xff]
    %v444 = vld [vmem:[#allocation10 + $0x1d0] sm:$0xff]
    %v445 = vld [vmem:[#allocation10 + $0x1d8] sm:$0xff]
    %v446 = vld [vmem:[#allocation10 + $0x1e0] sm:$0xff]
    %v447 = vld [vmem:[#allocation10 + $0x1e8] sm:$0xff]
    %v448 = vld [vmem:[#allocation10 + $0x1f0] sm:$0xff]
    %v449 = vld [vmem:[#allocation10 + $0x1f8] sm:$0xff]
    %v450 = vld [vmem:[%s9] sm:$0xf]
    %v451 = vld [vmem:[%s10] sm:$0xff]
    %v452 = vld [vmem:[%s10 + $0x8] sm:$0xff]
    %v453 = vld [vmem:[%s10 + $0x10] sm:$0xff]
    %v454 = vld [vmem:[%s10 + $0x18] sm:$0xff]
    %v455 = vld [vmem:[%s10 + $0x20] sm:$0xff]
    %v456 = vld [vmem:[%s10 + $0x28] sm:$0xff]
    %v457 = vld [vmem:[%s10 + $0x30] sm:$0xff]
    %v458 = vld [vmem:[%s10 + $0x38] sm:$0xff]
    %v459 = vld [vmem:[%s10 + $0x40] sm:$0xff]
    %v460 = vld [vmem:[%s10 + $0x48] sm:$0xff]
    %v461 = vld [vmem:[%s10 + $0x50] sm:$0xff]
    %v462 = vld [vmem:[%s10 + $0x58] sm:$0xff]
    %v463 = vld [vmem:[%s10 + $0x60] sm:$0xff]
    %v464 = vld [vmem:[%s10 + $0x68] sm:$0xff]
    %v465 = vld [vmem:[%s10 + $0x70] sm:$0xff]
    %v466 = vld [vmem:[%s10 + $0x78] sm:$0xff]
    %v467 = vld [vmem:[%s11] sm:$0x1]
    %v468 = vld [vmem:[%s0] sm:$0x3]
    %v470 = vlaneseq
    %v471 = vshrl.u32 %v470, 7
    %v472 = vsub.s32 0, %v471
    %v473 = vrot.slane %v192, %v472
    %v474 = vlaneseq
    %v475 = vshrl.u32 %v474, 7
    %v476 = vsub.s32 1, %v475
    %v477 = vrot.slane %v192, %v476
    %v478 = vlaneseq
    %v479 = vshrl.u32 %v478, 7
    %v480 = vsub.s32 2, %v479
    %v481 = vrot.slane %v192, %v480
    %v482 = vlaneseq
    %v483 = vshrl.u32 %v482, 7
    %v484 = vsub.s32 3, %v483
    %v485 = vrot.slane %v192, %v484
    %vm490 = vcmask 211968
    %v492 = vsel %vm490, %v468, 0
    %vm494 = vcmask 1041408
    %v496 = vsel %vm494, %v124, 0
    %v499 = vsel %vm494, %v125, 0
    %v502 = vsel %vm494, %v126, 0
    %v505 = vsel %vm494, %v127, 0
    %507 = vmatprep.subr.mxu0 0.0
    %508 = vmatpush1.msra.mxu0 0.0
    %509 = vmatprep.subr.mxu0 0.0
    %510 = vmatpush1.msra.mxu0 0.0
    %511 = vmatprep.subr.mxu0 0.0
    %512 = vmatpush1.msra.mxu0 0.0
    %513 = vmatprep.subr.mxu0 0.0
    %514 = vmatpush1.msra.mxu0 0.0
    %515 = vmatprep.subr.mxu0 0.0
    %516 = vmatpush1.msra.mxu0 0.0
    %517 = vmatprep.subr.mxu0 0.0
    %518 = vmatpush1.msra.mxu0 0.0
    %519 = vmatprep.subr.mxu0 0.0
    %520 = vmatpush1.msra.mxu0 0.0
    %521 = vmatprep.subr.mxu0 0.0
    %522 = vmatpush1.msra.mxu0 0.0
    %523 = vmatprep.subr.mxu0 0.0
    %524 = vmatpush1.msra.mxu0 0.0
    %525 = vmatprep.subr.mxu0 0.0
    %526 = vmatpush1.msra.mxu0 0.0
    %527 = vmatprep.subr.mxu0 0.0
    %528 = vmatpush1.msra.mxu0 0.0
    %529 = vmatprep.subr.mxu0 0.0
    %530 = vmatpush1.msra.mxu0 0.0
    %531 = vmatprep.subr.mxu0 %v499
    %532 = vmatpush1.msra.mxu0 %v496
    %533 = vmatprep.subr.mxu0 %v121
    %534 = vmatpush1.msra.mxu0 %v120
    %535 = vmatprep.subr.mxu0 %v117
    %536 = vmatpush1.msra.mxu0 %v116
    %537 = vmatprep.subr.mxu0 %v113
    %538 = vmatpush1.msra.mxu0 %v112
    %539 = vmatprep.subr.mxu0 0.0
    %540 = vmatpush2.msra.mxu0 0.0
    %541 = vmatprep.subr.mxu0 0.0
    %542 = vmatpush2.msra.mxu0 0.0
    %543 = vmatprep.subr.mxu0 0.0
    %544 = vmatpush2.msra.mxu0 0.0
    %545 = vmatprep.subr.mxu0 0.0
    %546 = vmatpush2.msra.mxu0 0.0
    %547 = vmatprep.subr.mxu0 0.0
    %548 = vmatpush2.msra.mxu0 0.0
    %549 = vmatprep.subr.mxu0 0.0
    %550 = vmatpush2.msra.mxu0 0.0
    %551 = vmatprep.subr.mxu0 0.0
    %552 = vmatpush2.msra.mxu0 0.0
    %553 = vmatprep.subr.mxu0 0.0
    %554 = vmatpush2.msra.mxu0 0.0
    %555 = vmatprep.subr.mxu0 0.0
    %556 = vmatpush2.msra.mxu0 0.0
    %557 = vmatprep.subr.mxu0 0.0
    %558 = vmatpush2.msra.mxu0 0.0
    %559 = vmatprep.subr.mxu0 0.0
    %560 = vmatpush2.msra.mxu0 0.0
    %561 = vmatprep.subr.mxu0 0.0
    %562 = vmatpush2.msra.mxu0 0.0
    %563 = vmatprep.subr.mxu0 0.0
    %564 = vmatpush2.msra.mxu0 0.0
    %565 = vmatprep.subr.mxu0 0.0
    %566 = vmatpush2.msra.mxu0 0.0
    %567 = vmatprep.subr.mxu0 0.0
    %568 = vmatpush2.msra.mxu0 0.0
    %569 = vmatprep.subr.mxu0 0.0
    %570 = vmatpush2.msra.mxu0 0.0
    %571 = vmatprep.mubr.f32.mxu0 0.0
    %572 = vmatmul.mubr.f32.gmra.mxu0 %v492
    %v573 = vpop.f32.mrf.mxu0
    %v574 = vadd.f32 %v473, %v573
    %v575 = vpop.f32.mrf.mxu0
    %v576 = vadd.f32 %v477, %v575
    %577 = vdwg.mxu0
    %578 = vmatprep.subr.mxu0 0.0
    %579 = vmatpush1.msra.mxu0 0.0
    %580 = vmatprep.subr.mxu0 0.0
    %581 = vmatpush1.msra.mxu0 0.0
    %582 = vmatprep.subr.mxu0 0.0
    %583 = vmatpush1.msra.mxu0 0.0
    %584 = vmatprep.subr.mxu0 0.0
    %585 = vmatpush1.msra.mxu0 0.0
    %586 = vmatprep.subr.mxu0 0.0
    %587 = vmatpush1.msra.mxu0 0.0
    %588 = vmatprep.subr.mxu0 0.0
    %589 = vmatpush1.msra.mxu0 0.0
    %590 = vmatprep.subr.mxu0 0.0
    %591 = vmatpush1.msra.mxu0 0.0
    %592 = vmatprep.subr.mxu0 0.0
    %593 = vmatpush1.msra.mxu0 0.0
    %594 = vmatprep.subr.mxu0 0.0
    %595 = vmatpush1.msra.mxu0 0.0
    %596 = vmatprep.subr.mxu0 0.0
    %597 = vmatpush1.msra.mxu0 0.0
    %598 = vmatprep.subr.mxu0 0.0
    %599 = vmatpush1.msra.mxu0 0.0
    %600 = vmatprep.subr.mxu0 0.0
    %601 = vmatpush1.msra.mxu0 0.0
    %602 = vmatprep.subr.mxu0 %v505
    %603 = vmatpush1.msra.mxu0 %v502
    %604 = vmatprep.subr.mxu0 %v123
    %605 = vmatpush1.msra.mxu0 %v122
    %606 = vmatprep.subr.mxu0 %v119
    %607 = vmatpush1.msra.mxu0 %v118
    %608 = vmatprep.subr.mxu0 %v115
    %609 = vmatpush1.msra.mxu0 %v114
    %610 = vmatprep.subr.mxu0 0.0
    %611 = vmatpush2.msra.mxu0 0.0
    %612 = vmatprep.subr.mxu0 0.0
    %613 = vmatpush2.msra.mxu0 0.0
    %614 = vmatprep.subr.mxu0 0.0
    %615 = vmatpush2.msra.mxu0 0.0
    %616 = vmatprep.subr.mxu0 0.0
    %617 = vmatpush2.msra.mxu0 0.0
    %618 = vmatprep.subr.mxu0 0.0
    %619 = vmatpush2.msra.mxu0 0.0
    %620 = vmatprep.subr.mxu0 0.0
    %621 = vmatpush2.msra.mxu0 0.0
    %622 = vmatprep.subr.mxu0 0.0
    %623 = vmatpush2.msra.mxu0 0.0
    %624 = vmatprep.subr.mxu0 0.0
    %625 = vmatpush2.msra.mxu0 0.0
    %626 = vmatprep.subr.mxu0 0.0
    %627 = vmatpush2.msra.mxu0 0.0
    %628 = vmatprep.subr.mxu0 0.0
    %629 = vmatpush2.msra.mxu0 0.0
    %630 = vmatprep.subr.mxu0 0.0
    %631 = vmatpush2.msra.mxu0 0.0
    %632 = vmatprep.subr.mxu0 0.0
    %633 = vmatpush2.msra.mxu0 0.0
    %634 = vmatprep.subr.mxu0 0.0
    %635 = vmatpush2.msra.mxu0 0.0
    %636 = vmatprep.subr.mxu0 0.0
    %637 = vmatpush2.msra.mxu0 0.0
    %638 = vmatprep.subr.mxu0 0.0
    %639 = vmatpush2.msra.mxu0 0.0
    %640 = vmatprep.subr.mxu0 0.0
    %641 = vmatpush2.msra.mxu0 0.0
    %642 = vmatprep.mubr.f32.mxu0 0.0
    %643 = vmatmul.mubr.f32.gmra.mxu0 %v492
    %v644 = vpop.f32.mrf.mxu0
    %v645 = vadd.f32 %v481, %v644
    %v646 = vpop.f32.mrf.mxu0
    %v647 = vadd.f32 %v485, %v646
    %648 = vdwg.mxu0
    %s649 = scalar_lea.vmem %s0, 2
    %v650 = vld [vmem:[%s649] sm:$0x3]
    %v652 = vsel %vm490, %v650, 0
    %654 = vmatprep.subr.mxu0 0.0
    %655 = vmatpush1.msra.mxu0 0.0
    %656 = vmatprep.subr.mxu0 0.0
    %657 = vmatpush1.msra.mxu0 0.0
    %658 = vmatprep.subr.mxu0 0.0
    %659 = vmatpush1.msra.mxu0 0.0
    %660 = vmatprep.subr.mxu0 0.0
    %661 = vmatpush1.msra.mxu0 0.0
    %662 = vmatprep.subr.mxu0 0.0
    %663 = vmatpush1.msra.mxu0 0.0
    %664 = vmatprep.subr.mxu0 0.0
    %665 = vmatpush1.msra.mxu0 0.0
    %666 = vmatprep.subr.mxu0 0.0
    %667 = vmatpush1.msra.mxu0 0.0
    %668 = vmatprep.subr.mxu0 0.0
    %669 = vmatpush1.msra.mxu0 0.0
    %670 = vmatprep.subr.mxu0 0.0
    %671 = vmatpush1.msra.mxu0 0.0
    %672 = vmatprep.subr.mxu0 0.0
    %673 = vmatpush1.msra.mxu0 0.0
    %674 = vmatprep.subr.mxu0 0.0
    %675 = vmatpush1.msra.mxu0 0.0
    %676 = vmatprep.subr.mxu0 0.0
    %677 = vmatpush1.msra.mxu0 0.0
    %678 = vmatprep.subr.mxu0 %v499
    %679 = vmatpush1.msra.mxu0 %v496
    %680 = vmatprep.subr.mxu0 %v121
    %681 = vmatpush1.msra.mxu0 %v120
    %682 = vmatprep.subr.mxu0 %v117
    %683 = vmatpush1.msra.mxu0 %v116
    %684 = vmatprep.subr.mxu0 %v113
    %685 = vmatpush1.msra.mxu0 %v112
    %686 = vmatprep.subr.mxu0 0.0
    %687 = vmatpush2.msra.mxu0 0.0
    %688 = vmatprep.subr.mxu0 0.0
    %689 = vmatpush2.msra.mxu0 0.0
    %690 = vmatprep.subr.mxu0 0.0
    %691 = vmatpush2.msra.mxu0 0.0
    %692 = vmatprep.subr.mxu0 0.0
    %693 = vmatpush2.msra.mxu0 0.0
    %694 = vmatprep.subr.mxu0 0.0
    %695 = vmatpush2.msra.mxu0 0.0
    %696 = vmatprep.subr.mxu0 0.0
    %697 = vmatpush2.msra.mxu0 0.0
    %698 = vmatprep.subr.mxu0 0.0
    %699 = vmatpush2.msra.mxu0 0.0
    %700 = vmatprep.subr.mxu0 0.0
    %701 = vmatpush2.msra.mxu0 0.0
    %702 = vmatprep.subr.mxu0 0.0
    %703 = vmatpush2.msra.mxu0 0.0
    %704 = vmatprep.subr.mxu0 0.0
    %705 = vmatpush2.msra.mxu0 0.0
    %706 = vmatprep.subr.mxu0 0.0
    %707 = vmatpush2.msra.mxu0 0.0
    %708 = vmatprep.subr.mxu0 0.0
    %709 = vmatpush2.msra.mxu0 0.0
    %710 = vmatprep.subr.mxu0 0.0
    %711 = vmatpush2.msra.mxu0 0.0
    %712 = vmatprep.subr.mxu0 0.0
    %713 = vmatpush2.msra.mxu0 0.0
    %714 = vmatprep.subr.mxu0 0.0
    %715 = vmatpush2.msra.mxu0 0.0
    %716 = vmatprep.subr.mxu0 0.0
    %717 = vmatpush2.msra.mxu0 0.0
    %718 = vmatprep.mubr.f32.mxu0 0.0
    %719 = vmatmul.mubr.f32.gmra.mxu0 %v652
    %v720 = vpop.f32.mrf.mxu0
    %v721 = vadd.f32 %v473, %v720
    %v722 = vpop.f32.mrf.mxu0
    %v723 = vadd.f32 %v477, %v722
    %724 = vdwg.mxu0
    %725 = vmatprep.subr.mxu0 0.0
    %726 = vmatpush1.msra.mxu0 0.0
    %727 = vmatprep.subr.mxu0 0.0
    %728 = vmatpush1.msra.mxu0 0.0
    %729 = vmatprep.subr.mxu0 0.0
    %730 = vmatpush1.msra.mxu0 0.0
    %731 = vmatprep.subr.mxu0 0.0
    %732 = vmatpush1.msra.mxu0 0.0
    %733 = vmatprep.subr.mxu0 0.0
    %734 = vmatpush1.msra.mxu0 0.0
    %735 = vmatprep.subr.mxu0 0.0
    %736 = vmatpush1.msra.mxu0 0.0
    %737 = vmatprep.subr.mxu0 0.0
    %738 = vmatpush1.msra.mxu0 0.0
    %739 = vmatprep.subr.mxu0 0.0
    %740 = vmatpush1.msra.mxu0 0.0
    %741 = vmatprep.subr.mxu0 0.0
    %742 = vmatpush1.msra.mxu0 0.0
    %743 = vmatprep.subr.mxu0 0.0
    %744 = vmatpush1.msra.mxu0 0.0
    %745 = vmatprep.subr.mxu0 0.0
    %746 = vmatpush1.msra.mxu0 0.0
    %747 = vmatprep.subr.mxu0 0.0
    %748 = vmatpush1.msra.mxu0 0.0
    %749 = vmatprep.subr.mxu0 %v505
    %750 = vmatpush1.msra.mxu0 %v502
    %751 = vmatprep.subr.mxu0 %v123
    %752 = vmatpush1.msra.mxu0 %v122
    %753 = vmatprep.subr.mxu0 %v119
    %754 = vmatpush1.msra.mxu0 %v118
    %755 = vmatprep.subr.mxu0 %v115
    %756 = vmatpush1.msra.mxu0 %v114
    %757 = vmatprep.subr.mxu0 0.0
    %758 = vmatpush2.msra.mxu0 0.0
    %759 = vmatprep.subr.mxu0 0.0
    %760 = vmatpush2.msra.mxu0 0.0
    %761 = vmatprep.subr.mxu0 0.0
    %762 = vmatpush2.msra.mxu0 0.0
    %763 = vmatprep.subr.mxu0 0.0
    %764 = vmatpush2.msra.mxu0 0.0
    %765 = vmatprep.subr.mxu0 0.0
    %766 = vmatpush2.msra.mxu0 0.0
    %767 = vmatprep.subr.mxu0 0.0
    %768 = vmatpush2.msra.mxu0 0.0
    %769 = vmatprep.subr.mxu0 0.0
    %770 = vmatpush2.msra.mxu0 0.0
    %771 = vmatprep.subr.mxu0 0.0
    %772 = vmatpush2.msra.mxu0 0.0
    %773 = vmatprep.subr.mxu0 0.0
    %774 = vmatpush2.msra.mxu0 0.0
    %775 = vmatprep.subr.mxu0 0.0
    %776 = vmatpush2.msra.mxu0 0.0
    %777 = vmatprep.subr.mxu0 0.0
    %778 = vmatpush2.msra.mxu0 0.0
    %779 = vmatprep.subr.mxu0 0.0
    %780 = vmatpush2.msra.mxu0 0.0
    %781 = vmatprep.subr.mxu0 0.0
    %782 = vmatpush2.msra.mxu0 0.0
    %783 = vmatprep.subr.mxu0 0.0
    %784 = vmatpush2.msra.mxu0 0.0
    %785 = vmatprep.subr.mxu0 0.0
    %786 = vmatpush2.msra.mxu0 0.0
    %787 = vmatprep.subr.mxu0 0.0
    %788 = vmatpush2.msra.mxu0 0.0
    %789 = vmatprep.mubr.f32.mxu0 0.0
    %790 = vmatmul.mubr.f32.gmra.mxu0 %v652
    %v791 = vpop.f32.mrf.mxu0
    %v792 = vadd.f32 %v481, %v791
    %v793 = vpop.f32.mrf.mxu0
    %v794 = vadd.f32 %v485, %v793
    %795 = vdwg.mxu0
    %s796 = scalar_lea.vmem %s0, 4
    %v797 = vld [vmem:[%s796] sm:$0x3]
    %v799 = vsel %vm490, %v797, 0
    %801 = vmatprep.subr.mxu0 0.0
    %802 = vmatpush1.msra.mxu0 0.0
    %803 = vmatprep.subr.mxu0 0.0
    %804 = vmatpush1.msra.mxu0 0.0
    %805 = vmatprep.subr.mxu0 0.0
    %806 = vmatpush1.msra.mxu0 0.0
    %807 = vmatprep.subr.mxu0 0.0
    %808 = vmatpush1.msra.mxu0 0.0
    %809 = vmatprep.subr.mxu0 0.0
    %810 = vmatpush1.msra.mxu0 0.0
    %811 = vmatprep.subr.mxu0 0.0
    %812 = vmatpush1.msra.mxu0 0.0
    %813 = vmatprep.subr.mxu0 0.0
    %814 = vmatpush1.msra.mxu0 0.0
    %815 = vmatprep.subr.mxu0 0.0
    %816 = vmatpush1.msra.mxu0 0.0
    %817 = vmatprep.subr.mxu0 0.0
    %818 = vmatpush1.msra.mxu0 0.0
    %819 = vmatprep.subr.mxu0 0.0
    %820 = vmatpush1.msra.mxu0 0.0
    %821 = vmatprep.subr.mxu0 0.0
    %822 = vmatpush1.msra.mxu0 0.0
    %823 = vmatprep.subr.mxu0 0.0
    %824 = vmatpush1.msra.mxu0 0.0
    %825 = vmatprep.subr.mxu0 %v499
    %826 = vmatpush1.msra.mxu0 %v496
    %827 = vmatprep.subr.mxu0 %v121
    %828 = vmatpush1.msra.mxu0 %v120
    %829 = vmatprep.subr.mxu0 %v117
    %830 = vmatpush1.msra.mxu0 %v116
    %831 = vmatprep.subr.mxu0 %v113
    %832 = vmatpush1.msra.mxu0 %v112
    %833 = vmatprep.subr.mxu0 0.0
    %834 = vmatpush2.msra.mxu0 0.0
    %835 = vmatprep.subr.mxu0 0.0
    %836 = vmatpush2.msra.mxu0 0.0
    %837 = vmatprep.subr.mxu0 0.0
    %838 = vmatpush2.msra.mxu0 0.0
    %839 = vmatprep.subr.mxu0 0.0
    %840 = vmatpush2.msra.mxu0 0.0
    %841 = vmatprep.subr.mxu0 0.0
    %842 = vmatpush2.msra.mxu0 0.0
    %843 = vmatprep.subr.mxu0 0.0
    %844 = vmatpush2.msra.mxu0 0.0
    %845 = vmatprep.subr.mxu0 0.0
    %846 = vmatpush2.msra.mxu0 0.0
    %847 = vmatprep.subr.mxu0 0.0
    %848 = vmatpush2.msra.mxu0 0.0
    %849 = vmatprep.subr.mxu0 0.0
    %850 = vmatpush2.msra.mxu0 0.0
    %851 = vmatprep.subr.mxu0 0.0
    %852 = vmatpush2.msra.mxu0 0.0
    %853 = vmatprep.subr.mxu0 0.0
    %854 = vmatpush2.msra.mxu0 0.0
    %855 = vmatprep.subr.mxu0 0.0
    %856 = vmatpush2.msra.mxu0 0.0
    %857 = vmatprep.subr.mxu0 0.0
    %858 = vmatpush2.msra.mxu0 0.0
    %859 = vmatprep.subr.mxu0 0.0
    %860 = vmatpush2.msra.mxu0 0.0
    %861 = vmatprep.subr.mxu0 0.0
    %862 = vmatpush2.msra.mxu0 0.0
    %863 = vmatprep.subr.mxu0 0.0
    %864 = vmatpush2.msra.mxu0 0.0
    %865 = vmatprep.mubr.f32.mxu0 0.0
    %866 = vmatmul.mubr.f32.gmra.mxu0 %v799
    %v867 = vpop.f32.mrf.mxu0
    %v868 = vadd.f32 %v473, %v867
    %v869 = vpop.f32.mrf.mxu0
    %v870 = vadd.f32 %v477, %v869
    %871 = vdwg.mxu0
    %872 = vmatprep.subr.mxu0 0.0
    %873 = vmatpush1.msra.mxu0 0.0
    %874 = vmatprep.subr.mxu0 0.0
    %875 = vmatpush1.msra.mxu0 0.0
    %876 = vmatprep.subr.mxu0 0.0
    %877 = vmatpush1.msra.mxu0 0.0
    %878 = vmatprep.subr.mxu0 0.0
    %879 = vmatpush1.msra.mxu0 0.0
    %880 = vmatprep.subr.mxu0 0.0
    %881 = vmatpush1.msra.mxu0 0.0
    %882 = vmatprep.subr.mxu0 0.0
    %883 = vmatpush1.msra.mxu0 0.0
    %884 = vmatprep.subr.mxu0 0.0
    %885 = vmatpush1.msra.mxu0 0.0
    %886 = vmatprep.subr.mxu0 0.0
    %887 = vmatpush1.msra.mxu0 0.0
    %888 = vmatprep.subr.mxu0 0.0
    %889 = vmatpush1.msra.mxu0 0.0
    %890 = vmatprep.subr.mxu0 0.0
    %891 = vmatpush1.msra.mxu0 0.0
    %892 = vmatprep.subr.mxu0 0.0
    %893 = vmatpush1.msra.mxu0 0.0
    %894 = vmatprep.subr.mxu0 0.0
    %895 = vmatpush1.msra.mxu0 0.0
    %896 = vmatprep.subr.mxu0 %v505
    %897 = vmatpush1.msra.mxu0 %v502
    %898 = vmatprep.subr.mxu0 %v123
    %899 = vmatpush1.msra.mxu0 %v122
    %900 = vmatprep.subr.mxu0 %v119
    %901 = vmatpush1.msra.mxu0 %v118
    %902 = vmatprep.subr.mxu0 %v115
    %903 = vmatpush1.msra.mxu0 %v114
    %904 = vmatprep.subr.mxu0 0.0
    %905 = vmatpush2.msra.mxu0 0.0
    %906 = vmatprep.subr.mxu0 0.0
    %907 = vmatpush2.msra.mxu0 0.0
    %908 = vmatprep.subr.mxu0 0.0
    %909 = vmatpush2.msra.mxu0 0.0
    %910 = vmatprep.subr.mxu0 0.0
    %911 = vmatpush2.msra.mxu0 0.0
    %912 = vmatprep.subr.mxu0 0.0
    %913 = vmatpush2.msra.mxu0 0.0
    %914 = vmatprep.subr.mxu0 0.0
    %915 = vmatpush2.msra.mxu0 0.0
    %916 = vmatprep.subr.mxu0 0.0
    %917 = vmatpush2.msra.mxu0 0.0
    %918 = vmatprep.subr.mxu0 0.0
    %919 = vmatpush2.msra.mxu0 0.0
    %920 = vmatprep.subr.mxu0 0.0
    %921 = vmatpush2.msra.mxu0 0.0
    %922 = vmatprep.subr.mxu0 0.0
    %923 = vmatpush2.msra.mxu0 0.0
    %924 = vmatprep.subr.mxu0 0.0
    %925 = vmatpush2.msra.mxu0 0.0
    %926 = vmatprep.subr.mxu0 0.0
    %927 = vmatpush2.msra.mxu0 0.0
    %928 = vmatprep.subr.mxu0 0.0
    %929 = vmatpush2.msra.mxu0 0.0
    %930 = vmatprep.subr.mxu0 0.0
    %931 = vmatpush2.msra.mxu0 0.0
    %932 = vmatprep.subr.mxu0 0.0
    %933 = vmatpush2.msra.mxu0 0.0
    %934 = vmatprep.subr.mxu0 0.0
    %935 = vmatpush2.msra.mxu0 0.0
    %936 = vmatprep.mubr.f32.mxu0 0.0
    %937 = vmatmul.mubr.f32.gmra.mxu0 %v799
    %v938 = vpop.f32.mrf.mxu0
    %v939 = vadd.f32 %v481, %v938
    %v940 = vpop.f32.mrf.mxu0
    %v941 = vadd.f32 %v485, %v940
    %942 = vdwg.mxu0
    %s943 = scalar_lea.vmem %s0, 6
    %v944 = vld [vmem:[%s943] sm:$0x3]
    %v946 = vsel %vm490, %v944, 0
    %948 = vmatprep.subr.mxu0 0.0
    %949 = vmatpush1.msra.mxu0 0.0
    %950 = vmatprep.subr.mxu0 0.0
    %951 = vmatpush1.msra.mxu0 0.0
    %952 = vmatprep.subr.mxu0 0.0
    %953 = vmatpush1.msra.mxu0 0.0
    %954 = vmatprep.subr.mxu0 0.0
    %955 = vmatpush1.msra.mxu0 0.0
    %956 = vmatprep.subr.mxu0 0.0
    %957 = vmatpush1.msra.mxu0 0.0
    %958 = vmatprep.subr.mxu0 0.0
    %959 = vmatpush1.msra.mxu0 0.0
    %960 = vmatprep.subr.mxu0 0.0
    %961 = vmatpush1.msra.mxu0 0.0
    %962 = vmatprep.subr.mxu0 0.0
    %963 = vmatpush1.msra.mxu0 0.0
    %964 = vmatprep.subr.mxu0 0.0
    %965 = vmatpush1.msra.mxu0 0.0
    %966 = vmatprep.subr.mxu0 0.0
    %967 = vmatpush1.msra.mxu0 0.0
    %968 = vmatprep.subr.mxu0 0.0
    %969 = vmatpush1.msra.mxu0 0.0
    %970 = vmatprep.subr.mxu0 0.0
    %971 = vmatpush1.msra.mxu0 0.0
    %972 = vmatprep.subr.mxu0 %v499
    %973 = vmatpush1.msra.mxu0 %v496
    %974 = vmatprep.subr.mxu0 %v121
    %975 = vmatpush1.msra.mxu0 %v120
    %976 = vmatprep.subr.mxu0 %v117
    %977 = vmatpush1.msra.mxu0 %v116
    %978 = vmatprep.subr.mxu0 %v113
    %979 = vmatpush1.msra.mxu0 %v112
    %980 = vmatprep.subr.mxu0 0.0
    %981 = vmatpush2.msra.mxu0 0.0
    %982 = vmatprep.subr.mxu0 0.0
    %983 = vmatpush2.msra.mxu0 0.0
    %984 = vmatprep.subr.mxu0 0.0
    %985 = vmatpush2.msra.mxu0 0.0
    %986 = vmatprep.subr.mxu0 0.0
    %987 = vmatpush2.msra.mxu0 0.0
    %988 = vmatprep.subr.mxu0 0.0
    %989 = vmatpush2.msra.mxu0 0.0
    %990 = vmatprep.subr.mxu0 0.0
    %991 = vmatpush2.msra.mxu0 0.0
    %992 = vmatprep.subr.mxu0 0.0
    %993 = vmatpush2.msra.mxu0 0.0
    %994 = vmatprep.subr.mxu0 0.0
    %995 = vmatpush2.msra.mxu0 0.0
    %996 = vmatprep.subr.mxu0 0.0
    %997 = vmatpush2.msra.mxu0 0.0
    %998 = vmatprep.subr.mxu0 0.0
    %999 = vmatpush2.msra.mxu0 0.0
    %1000 = vmatprep.subr.mxu0 0.0
    %1001 = vmatpush2.msra.mxu0 0.0
    %1002 = vmatprep.subr.mxu0 0.0
    %1003 = vmatpush2.msra.mxu0 0.0
    %1004 = vmatprep.subr.mxu0 0.0
    %1005 = vmatpush2.msra.mxu0 0.0
    %1006 = vmatprep.subr.mxu0 0.0
    %1007 = vmatpush2.msra.mxu0 0.0
    %1008 = vmatprep.subr.mxu0 0.0
    %1009 = vmatpush2.msra.mxu0 0.0
    %1010 = vmatprep.subr.mxu0 0.0
    %1011 = vmatpush2.msra.mxu0 0.0
    %1012 = vmatprep.mubr.f32.mxu0 0.0
    %1013 = vmatmul.mubr.f32.gmra.mxu0 %v946
    %v1014 = vpop.f32.mrf.mxu0
    %v1015 = vadd.f32 %v473, %v1014
    %v1016 = vpop.f32.mrf.mxu0
    %v1017 = vadd.f32 %v477, %v1016
    %1018 = vdwg.mxu0
    %1019 = vmatprep.subr.mxu0 0.0
    %1020 = vmatpush1.msra.mxu0 0.0
    %1021 = vmatprep.subr.mxu0 0.0
    %1022 = vmatpush1.msra.mxu0 0.0
    %1023 = vmatprep.subr.mxu0 0.0
    %1024 = vmatpush1.msra.mxu0 0.0
    %1025 = vmatprep.subr.mxu0 0.0
    %1026 = vmatpush1.msra.mxu0 0.0
    %1027 = vmatprep.subr.mxu0 0.0
    %1028 = vmatpush1.msra.mxu0 0.0
    %1029 = vmatprep.subr.mxu0 0.0
    %1030 = vmatpush1.msra.mxu0 0.0
    %1031 = vmatprep.subr.mxu0 0.0
    %1032 = vmatpush1.msra.mxu0 0.0
    %1033 = vmatprep.subr.mxu0 0.0
    %1034 = vmatpush1.msra.mxu0 0.0
    %1035 = vmatprep.subr.mxu0 0.0
    %1036 = vmatpush1.msra.mxu0 0.0
    %1037 = vmatprep.subr.mxu0 0.0
    %1038 = vmatpush1.msra.mxu0 0.0
    %1039 = vmatprep.subr.mxu0 0.0
    %1040 = vmatpush1.msra.mxu0 0.0
    %1041 = vmatprep.subr.mxu0 0.0
    %1042 = vmatpush1.msra.mxu0 0.0
    %1043 = vmatprep.subr.mxu0 %v505
    %1044 = vmatpush1.msra.mxu0 %v502
    %1045 = vmatprep.subr.mxu0 %v123
    %1046 = vmatpush1.msra.mxu0 %v122
    %1047 = vmatprep.subr.mxu0 %v119
    %1048 = vmatpush1.msra.mxu0 %v118
    %1049 = vmatprep.subr.mxu0 %v115
    %1050 = vmatpush1.msra.mxu0 %v114
    %1051 = vmatprep.subr.mxu0 0.0
    %1052 = vmatpush2.msra.mxu0 0.0
    %1053 = vmatprep.subr.mxu0 0.0
    %1054 = vmatpush2.msra.mxu0 0.0
    %1055 = vmatprep.subr.mxu0 0.0
    %1056 = vmatpush2.msra.mxu0 0.0
    %1057 = vmatprep.subr.mxu0 0.0
    %1058 = vmatpush2.msra.mxu0 0.0
    %1059 = vmatprep.subr.mxu0 0.0
    %1060 = vmatpush2.msra.mxu0 0.0
    %1061 = vmatprep.subr.mxu0 0.0
    %1062 = vmatpush2.msra.mxu0 0.0
    %1063 = vmatprep.subr.mxu0 0.0
    %1064 = vmatpush2.msra.mxu0 0.0
    %1065 = vmatprep.subr.mxu0 0.0
    %1066 = vmatpush2.msra.mxu0 0.0
    %1067 = vmatprep.subr.mxu0 0.0
    %1068 = vmatpush2.msra.mxu0 0.0
    %1069 = vmatprep.subr.mxu0 0.0
    %1070 = vmatpush2.msra.mxu0 0.0
    %1071 = vmatprep.subr.mxu0 0.0
    %1072 = vmatpush2.msra.mxu0 0.0
    %1073 = vmatprep.subr.mxu0 0.0
    %1074 = vmatpush2.msra.mxu0 0.0
    %1075 = vmatprep.subr.mxu0 0.0
    %1076 = vmatpush2.msra.mxu0 0.0
    %1077 = vmatprep.subr.mxu0 0.0
    %1078 = vmatpush2.msra.mxu0 0.0
    %1079 = vmatprep.subr.mxu0 0.0
    %1080 = vmatpush2.msra.mxu0 0.0
    %1081 = vmatprep.subr.mxu0 0.0
    %1082 = vmatpush2.msra.mxu0 0.0
    %1083 = vmatprep.mubr.f32.mxu0 0.0
    %1084 = vmatmul.mubr.f32.gmra.mxu0 %v946
    %v1085 = vpop.f32.mrf.mxu0
    %v1086 = vadd.f32 %v481, %v1085
    %v1087 = vpop.f32.mrf.mxu0
    %v1088 = vadd.f32 %v485, %v1087
    %1089 = vdwg.mxu0
    %s1090 = scalar_lea.vmem %s0, 8
    %v1091 = vld [vmem:[%s1090] sm:$0x3]
    %v1093 = vsel %vm490, %v1091, 0
    %1095 = vmatprep.subr.mxu0 0.0
    %1096 = vmatpush1.msra.mxu0 0.0
    %1097 = vmatprep.subr.mxu0 0.0
    %1098 = vmatpush1.msra.mxu0 0.0
    %1099 = vmatprep.subr.mxu0 0.0
    %1100 = vmatpush1.msra.mxu0 0.0
    %1101 = vmatprep.subr.mxu0 0.0
    %1102 = vmatpush1.msra.mxu0 0.0
    %1103 = vmatprep.subr.mxu0 0.0
    %1104 = vmatpush1.msra.mxu0 0.0
    %1105 = vmatprep.subr.mxu0 0.0
    %1106 = vmatpush1.msra.mxu0 0.0
    %1107 = vmatprep.subr.mxu0 0.0
    %1108 = vmatpush1.msra.mxu0 0.0
    %1109 = vmatprep.subr.mxu0 0.0
    %1110 = vmatpush1.msra.mxu0 0.0
    %1111 = vmatprep.subr.mxu0 0.0
    %1112 = vmatpush1.msra.mxu0 0.0
    %1113 = vmatprep.subr.mxu0 0.0
    %1114 = vmatpush1.msra.mxu0 0.0
    %1115 = vmatprep.subr.mxu0 0.0
    %1116 = vmatpush1.msra.mxu0 0.0
    %1117 = vmatprep.subr.mxu0 0.0
    %1118 = vmatpush1.msra.mxu0 0.0
    %1119 = vmatprep.subr.mxu0 %v499
    %1120 = vmatpush1.msra.mxu0 %v496
    %1121 = vmatprep.subr.mxu0 %v121
    %1122 = vmatpush1.msra.mxu0 %v120
    %1123 = vmatprep.subr.mxu0 %v117
    %1124 = vmatpush1.msra.mxu0 %v116
    %1125 = vmatprep.subr.mxu0 %v113
    %1126 = vmatpush1.msra.mxu0 %v112
    %1127 = vmatprep.subr.mxu0 0.0
    %1128 = vmatpush2.msra.mxu0 0.0
    %1129 = vmatprep.subr.mxu0 0.0
    %1130 = vmatpush2.msra.mxu0 0.0
    %1131 = vmatprep.subr.mxu0 0.0
    %1132 = vmatpush2.msra.mxu0 0.0
    %1133 = vmatprep.subr.mxu0 0.0
    %1134 = vmatpush2.msra.mxu0 0.0
    %1135 = vmatprep.subr.mxu0 0.0
    %1136 = vmatpush2.msra.mxu0 0.0
    %1137 = vmatprep.subr.mxu0 0.0
    %1138 = vmatpush2.msra.mxu0 0.0
    %1139 = vmatprep.subr.mxu0 0.0
    %1140 = vmatpush2.msra.mxu0 0.0
    %1141 = vmatprep.subr.mxu0 0.0
    %1142 = vmatpush2.msra.mxu0 0.0
    %1143 = vmatprep.subr.mxu0 0.0
    %1144 = vmatpush2.msra.mxu0 0.0
    %1145 = vmatprep.subr.mxu0 0.0
    %1146 = vmatpush2.msra.mxu0 0.0
    %1147 = vmatprep.subr.mxu0 0.0
    %1148 = vmatpush2.msra.mxu0 0.0
    %1149 = vmatprep.subr.mxu0 0.0
    %1150 = vmatpush2.msra.mxu0 0.0
    %1151 = vmatprep.subr.mxu0 0.0
    %1152 = vmatpush2.msra.mxu0 0.0
    %1153 = vmatprep.subr.mxu0 0.0
    %1154 = vmatpush2.msra.mxu0 0.0
    %1155 = vmatprep.subr.mxu0 0.0
    %1156 = vmatpush2.msra.mxu0 0.0
    %1157 = vmatprep.subr.mxu0 0.0
    %1158 = vmatpush2.msra.mxu0 0.0
    %1159 = vmatprep.mubr.f32.mxu0 0.0
    %1160 = vmatmul.mubr.f32.gmra.mxu0 %v1093
    %v1161 = vpop.f32.mrf.mxu0
    %v1162 = vadd.f32 %v473, %v1161
    %v1163 = vpop.f32.mrf.mxu0
    %v1164 = vadd.f32 %v477, %v1163
    %1165 = vdwg.mxu0
    %1166 = vmatprep.subr.mxu0 0.0
    %1167 = vmatpush1.msra.mxu0 0.0
    %1168 = vmatprep.subr.mxu0 0.0
    %1169 = vmatpush1.msra.mxu0 0.0
    %1170 = vmatprep.subr.mxu0 0.0
    %1171 = vmatpush1.msra.mxu0 0.0
    %1172 = vmatprep.subr.mxu0 0.0
    %1173 = vmatpush1.msra.mxu0 0.0
    %1174 = vmatprep.subr.mxu0 0.0
    %1175 = vmatpush1.msra.mxu0 0.0
    %1176 = vmatprep.subr.mxu0 0.0
    %1177 = vmatpush1.msra.mxu0 0.0
    %1178 = vmatprep.subr.mxu0 0.0
    %1179 = vmatpush1.msra.mxu0 0.0
    %1180 = vmatprep.subr.mxu0 0.0
    %1181 = vmatpush1.msra.mxu0 0.0
    %1182 = vmatprep.subr.mxu0 0.0
    %1183 = vmatpush1.msra.mxu0 0.0
    %1184 = vmatprep.subr.mxu0 0.0
    %1185 = vmatpush1.msra.mxu0 0.0
    %1186 = vmatprep.subr.mxu0 0.0
    %1187 = vmatpush1.msra.mxu0 0.0
    %1188 = vmatprep.subr.mxu0 0.0
    %1189 = vmatpush1.msra.mxu0 0.0
    %1190 = vmatprep.subr.mxu0 %v505
    %1191 = vmatpush1.msra.mxu0 %v502
    %1192 = vmatprep.subr.mxu0 %v123
    %1193 = vmatpush1.msra.mxu0 %v122
    %1194 = vmatprep.subr.mxu0 %v119
    %1195 = vmatpush1.msra.mxu0 %v118
    %1196 = vmatprep.subr.mxu0 %v115
    %1197 = vmatpush1.msra.mxu0 %v114
    %1198 = vmatprep.subr.mxu0 0.0
    %1199 = vmatpush2.msra.mxu0 0.0
    %1200 = vmatprep.subr.mxu0 0.0
    %1201 = vmatpush2.msra.mxu0 0.0
    %1202 = vmatprep.subr.mxu0 0.0
    %1203 = vmatpush2.msra.mxu0 0.0
    %1204 = vmatprep.subr.mxu0 0.0
    %1205 = vmatpush2.msra.mxu0 0.0
    %1206 = vmatprep.subr.mxu0 0.0
    %1207 = vmatpush2.msra.mxu0 0.0
    %1208 = vmatprep.subr.mxu0 0.0
    %1209 = vmatpush2.msra.mxu0 0.0
    %1210 = vmatprep.subr.mxu0 0.0
    %1211 = vmatpush2.msra.mxu0 0.0
    %1212 = vmatprep.subr.mxu0 0.0
    %1213 = vmatpush2.msra.mxu0 0.0
    %1214 = vmatprep.subr.mxu0 0.0
    %1215 = vmatpush2.msra.mxu0 0.0
    %1216 = vmatprep.subr.mxu0 0.0
    %1217 = vmatpush2.msra.mxu0 0.0
    %1218 = vmatprep.subr.mxu0 0.0
    %1219 = vmatpush2.msra.mxu0 0.0
    %1220 = vmatprep.subr.mxu0 0.0
    %1221 = vmatpush2.msra.mxu0 0.0
    %1222 = vmatprep.subr.mxu0 0.0
    %1223 = vmatpush2.msra.mxu0 0.0
    %1224 = vmatprep.subr.mxu0 0.0
    %1225 = vmatpush2.msra.mxu0 0.0
    %1226 = vmatprep.subr.mxu0 0.0
    %1227 = vmatpush2.msra.mxu0 0.0
    %1228 = vmatprep.subr.mxu0 0.0
    %1229 = vmatpush2.msra.mxu0 0.0
    %1230 = vmatprep.mubr.f32.mxu0 0.0
    %1231 = vmatmul.mubr.f32.gmra.mxu0 %v1093
    %v1232 = vpop.f32.mrf.mxu0
    %v1233 = vadd.f32 %v481, %v1232
    %v1234 = vpop.f32.mrf.mxu0
    %v1235 = vadd.f32 %v485, %v1234
    %1236 = vdwg.mxu0
    %1237 = vmatprep.subr.mxu0 %v189
    %1238 = vmatpush1.msra.mxu0 %v188
    %1239 = vmatprep.subr.mxu0 %v185
    %1240 = vmatpush1.msra.mxu0 %v184
    %1241 = vmatprep.subr.mxu0 %v181
    %1242 = vmatpush1.msra.mxu0 %v180
    %1243 = vmatprep.subr.mxu0 %v177
    %1244 = vmatpush1.msra.mxu0 %v176
    %1245 = vmatprep.subr.mxu0 %v173
    %1246 = vmatpush1.msra.mxu0 %v172
    %1247 = vmatprep.subr.mxu0 %v169
    %1248 = vmatpush1.msra.mxu0 %v168
    %1249 = vmatprep.subr.mxu0 %v165
    %1250 = vmatpush1.msra.mxu0 %v164
    %1251 = vmatprep.subr.mxu0 %v161
    %1252 = vmatpush1.msra.mxu0 %v160
    %1253 = vmatprep.subr.mxu0 %v157
    %1254 = vmatpush1.msra.mxu0 %v156
    %1255 = vmatprep.subr.mxu0 %v153
    %1256 = vmatpush1.msra.mxu0 %v152
    %1257 = vmatprep.subr.mxu0 %v149
    %1258 = vmatpush1.msra.mxu0 %v148
    %1259 = vmatprep.subr.mxu0 %v145
    %1260 = vmatpush1.msra.mxu0 %v144
    %1261 = vmatprep.subr.mxu0 %v141
    %1262 = vmatpush1.msra.mxu0 %v140
    %1263 = vmatprep.subr.mxu0 %v137
    %1264 = vmatpush1.msra.mxu0 %v136
    %1265 = vmatprep.subr.mxu0 %v133
    %1266 = vmatpush1.msra.mxu0 %v132
    %1267 = vmatprep.subr.mxu0 %v129
    %1268 = vmatpush1.msra.mxu0 %v128
    %1269 = vmatprep.subr.mxu0 0.0
    %1270 = vmatpush2.msra.mxu0 0.0
    %1271 = vmatprep.subr.mxu0 0.0
    %1272 = vmatpush2.msra.mxu0 0.0
    %1273 = vmatprep.subr.mxu0 0.0
    %1274 = vmatpush2.msra.mxu0 0.0
    %1275 = vmatprep.subr.mxu0 0.0
    %1276 = vmatpush2.msra.mxu0 0.0
    %1277 = vmatprep.subr.mxu0 0.0
    %1278 = vmatpush2.msra.mxu0 0.0
    %1279 = vmatprep.subr.mxu0 0.0
    %1280 = vmatpush2.msra.mxu0 0.0
    %1281 = vmatprep.subr.mxu0 0.0
    %1282 = vmatpush2.msra.mxu0 0.0
    %1283 = vmatprep.subr.mxu0 0.0
    %1284 = vmatpush2.msra.mxu0 0.0
    %1285 = vmatprep.subr.mxu0 0.0
    %1286 = vmatpush2.msra.mxu0 0.0
    %1287 = vmatprep.subr.mxu0 0.0
    %1288 = vmatpush2.msra.mxu0 0.0
    %1289 = vmatprep.subr.mxu0 0.0
    %1290 = vmatpush2.msra.mxu0 0.0
    %1291 = vmatprep.subr.mxu0 0.0
    %1292 = vmatpush2.msra.mxu0 0.0
    %1293 = vmatprep.subr.mxu0 0.0
    %1294 = vmatpush2.msra.mxu0 0.0
    %1295 = vmatprep.subr.mxu0 0.0
    %1296 = vmatpush2.msra.mxu0 0.0
    %1297 = vmatprep.subr.mxu0 0.0
    %1298 = vmatpush2.msra.mxu0 0.0
    %1299 = vmatprep.subr.mxu0 0.0
    %1300 = vmatpush2.msra.mxu0 0.0
    %1301 = vmatprep.mubr.f32.mxu0 0.0
    %1302 = vmatmul.mubr.f32.gmra.mxu0 0.0
    %v1303 = vpop.f32.mrf.mxu0
    %v1304 = vadd.f32 0.0, %v1303
    %v1305 = vpop.f32.mrf.mxu0
    %v1306 = vadd.f32 0.0, %v1305
    %1307 = vdwg.mxu0
    %1308 = vmatprep.subr.mxu0 %v191
    %1309 = vmatpush1.msra.mxu0 %v190
    %1310 = vmatprep.subr.mxu0 %v187
    %1311 = vmatpush1.msra.mxu0 %v186
    %1312 = vmatprep.subr.mxu0 %v183
    %1313 = vmatpush1.msra.mxu0 %v182
    %1314 = vmatprep.subr.mxu0 %v179
    %1315 = vmatpush1.msra.mxu0 %v178
    %1316 = vmatprep.subr.mxu0 %v175
    %1317 = vmatpush1.msra.mxu0 %v174
    %1318 = vmatprep.subr.mxu0 %v171
    %1319 = vmatpush1.msra.mxu0 %v170
    %1320 = vmatprep.subr.mxu0 %v167
    %1321 = vmatpush1.msra.mxu0 %v166
    %1322 = vmatprep.subr.mxu0 %v163
    %1323 = vmatpush1.msra.mxu0 %v162
    %1324 = vmatprep.subr.mxu0 %v159
    %1325 = vmatpush1.msra.mxu0 %v158
    %1326 = vmatprep.subr.mxu0 %v155
    %1327 = vmatpush1.msra.mxu0 %v154
    %1328 = vmatprep.subr.mxu0 %v151
    %1329 = vmatpush1.msra.mxu0 %v150
    %1330 = vmatprep.subr.mxu0 %v147
    %1331 = vmatpush1.msra.mxu0 %v146
    %1332 = vmatprep.subr.mxu0 %v143
    %1333 = vmatpush1.msra.mxu0 %v142
    %1334 = vmatprep.subr.mxu0 %v139
    %1335 = vmatpush1.msra.mxu0 %v138
    %1336 = vmatprep.subr.mxu0 %v135
    %1337 = vmatpush1.msra.mxu0 %v134
    %1338 = vmatprep.subr.mxu0 %v131
    %1339 = vmatpush1.msra.mxu0 %v130
    %1340 = vmatprep.subr.mxu0 0.0
    %1341 = vmatpush2.msra.mxu0 0.0
    %1342 = vmatprep.subr.mxu0 0.0
    %1343 = vmatpush2.msra.mxu0 0.0
    %1344 = vmatprep.subr.mxu0 0.0
    %1345 = vmatpush2.msra.mxu0 0.0
    %1346 = vmatprep.subr.mxu0 0.0
    %1347 = vmatpush2.msra.mxu0 0.0
    %1348 = vmatprep.subr.mxu0 0.0
    %1349 = vmatpush2.msra.mxu0 0.0
    %1350 = vmatprep.subr.mxu0 0.0
    %1351 = vmatpush2.msra.mxu0 0.0
    %1352 = vmatprep.subr.mxu0 0.0
    %1353 = vmatpush2.msra.mxu0 0.0
    %1354 = vmatprep.subr.mxu0 0.0
    %1355 = vmatpush2.msra.mxu0 0.0
    %1356 = vmatprep.subr.mxu0 0.0
    %1357 = vmatpush2.msra.mxu0 0.0
    %1358 = vmatprep.subr.mxu0 0.0
    %1359 = vmatpush2.msra.mxu0 0.0
    %1360 = vmatprep.subr.mxu0 0.0
    %1361 = vmatpush2.msra.mxu0 0.0
    %1362 = vmatprep.subr.mxu0 0.0
    %1363 = vmatpush2.msra.mxu0 0.0
    %1364 = vmatprep.subr.mxu0 0.0
    %1365 = vmatpush2.msra.mxu0 0.0
    %1366 = vmatprep.subr.mxu0 0.0
    %1367 = vmatpush2.msra.mxu0 0.0
    %1368 = vmatprep.subr.mxu0 0.0
    %1369 = vmatpush2.msra.mxu0 0.0
    %1370 = vmatprep.subr.mxu0 0.0
    %1371 = vmatpush2.msra.mxu0 0.0
    %1372 = vmatprep.mubr.f32.mxu0 0.0
    %1373 = vmatmul.mubr.f32.gmra.mxu0 0.0
    %v1374 = vpop.f32.mrf.mxu0
    %v1375 = vadd.f32 0.0, %v1374
    %v1376 = vpop.f32.mrf.mxu0
    %v1377 = vadd.f32 0.0, %v1376
    %1378 = vdwg.mxu0
    %v1379 = vadd.f32 %v574, %v1304
    %v1380 = vadd.f32 %v576, %v1306
    %v1381 = vadd.f32 %v645, %v1375
    %v1382 = vadd.f32 %v647, %v1377
    %v1383 = vxor.u32 %v1379, 2147483648
    %v1384 = vmul.f32 %v1383, 1.442695
    %v1385 = vpow.pop %v1384
    %v1386 = vadd.f32 %v1385, 1.0
    %v1387 = vrcp.pop %v1386
    %v1388 = vmul.f32 1.0, %v1387
    %v1389 = vxor.u32 %v1380, 2147483648
    %v1390 = vmul.f32 %v1389, 1.442695
    %v1391 = vpow.pop %v1390
    %v1392 = vadd.f32 %v1391, 1.0
    %v1393 = vrcp.pop %v1392
    %v1394 = vmul.f32 1.0, %v1393
    %v1395 = vtanh.pop %v1381
    %v1396 = vxor.u32 %v1382, 2147483648
    %v1397 = vmul.f32 %v1396, 1.442695
    %v1398 = vpow.pop %v1397
    %v1399 = vadd.f32 %v1398, 1.0
    %v1400 = vrcp.pop %v1399
    %v1401 = vmul.f32 1.0, %v1400
    %v1402 = vmul.f32 %v1394, 0.0
    %v1403 = vmul.f32 %v1388, %v1395
    %v1404 = vadd.f32 %v1402, %v1403
    %v1405 = vtanh.pop %v1404
    %v1406 = vmul.f32 %v1401, %v1405
    %v1408 = vlaneseq
    %v1409 = vshrl.u32 %v1408, 7
    %v1410 = vsub.s32 0, %v1409
    %v1411 = vrot.slane %v321, %v1410
    %v1412 = vlaneseq
    %v1413 = vshrl.u32 %v1412, 7
    %v1414 = vsub.s32 1, %v1413
    %v1415 = vrot.slane %v321, %v1414
    %v1416 = vlaneseq
    %v1417 = vshrl.u32 %v1416, 7
    %v1418 = vsub.s32 2, %v1417
    %v1419 = vrot.slane %v321, %v1418
    %v1420 = vlaneseq
    %v1421 = vshrl.u32 %v1420, 7
    %v1422 = vsub.s32 3, %v1421
    %v1423 = vrot.slane %v321, %v1422
    %1428 = vmatprep.subr.mxu0 %v254
    %1429 = vmatpush1.msra.mxu0 %v253
    %1430 = vmatprep.subr.mxu0 %v250
    %1431 = vmatpush1.msra.mxu0 %v249
    %1432 = vmatprep.subr.mxu0 %v246
    %1433 = vmatpush1.msra.mxu0 %v245
    %1434 = vmatprep.subr.mxu0 %v242
    %1435 = vmatpush1.msra.mxu0 %v241
    %1436 = vmatprep.subr.mxu0 %v238
    %1437 = vmatpush1.msra.mxu0 %v237
    %1438 = vmatprep.subr.mxu0 %v234
    %1439 = vmatpush1.msra.mxu0 %v233
    %1440 = vmatprep.subr.mxu0 %v230
    %1441 = vmatpush1.msra.mxu0 %v229
    %1442 = vmatprep.subr.mxu0 %v226
    %1443 = vmatpush1.msra.mxu0 %v225
    %1444 = vmatprep.subr.mxu0 %v222
    %1445 = vmatpush1.msra.mxu0 %v221
    %1446 = vmatprep.subr.mxu0 %v218
    %1447 = vmatpush1.msra.mxu0 %v217
    %1448 = vmatprep.subr.mxu0 %v214
    %1449 = vmatpush1.msra.mxu0 %v213
    %1450 = vmatprep.subr.mxu0 %v210
    %1451 = vmatpush1.msra.mxu0 %v209
    %1452 = vmatprep.subr.mxu0 %v206
    %1453 = vmatpush1.msra.mxu0 %v205
    %1454 = vmatprep.subr.mxu0 %v202
    %1455 = vmatpush1.msra.mxu0 %v201
    %1456 = vmatprep.subr.mxu0 %v198
    %1457 = vmatpush1.msra.mxu0 %v197
    %1458 = vmatprep.subr.mxu0 %v194
    %1459 = vmatpush1.msra.mxu0 %v193
    %1460 = vmatprep.subr.mxu0 0.0
    %1461 = vmatpush2.msra.mxu0 0.0
    %1462 = vmatprep.subr.mxu0 0.0
    %1463 = vmatpush2.msra.mxu0 0.0
    %1464 = vmatprep.subr.mxu0 0.0
    %1465 = vmatpush2.msra.mxu0 0.0
    %1466 = vmatprep.subr.mxu0 0.0
    %1467 = vmatpush2.msra.mxu0 0.0
    %1468 = vmatprep.subr.mxu0 0.0
    %1469 = vmatpush2.msra.mxu0 0.0
    %1470 = vmatprep.subr.mxu0 0.0
    %1471 = vmatpush2.msra.mxu0 0.0
    %1472 = vmatprep.subr.mxu0 0.0
    %1473 = vmatpush2.msra.mxu0 0.0
    %1474 = vmatprep.subr.mxu0 0.0
    %1475 = vmatpush2.msra.mxu0 0.0
    %1476 = vmatprep.subr.mxu0 0.0
    %1477 = vmatpush2.msra.mxu0 0.0
    %1478 = vmatprep.subr.mxu0 0.0
    %1479 = vmatpush2.msra.mxu0 0.0
    %1480 = vmatprep.subr.mxu0 0.0
    %1481 = vmatpush2.msra.mxu0 0.0
    %1482 = vmatprep.subr.mxu0 0.0
    %1483 = vmatpush2.msra.mxu0 0.0
    %1484 = vmatprep.subr.mxu0 0.0
    %1485 = vmatpush2.msra.mxu0 0.0
    %1486 = vmatprep.subr.mxu0 0.0
    %1487 = vmatpush2.msra.mxu0 0.0
    %1488 = vmatprep.subr.mxu0 0.0
    %1489 = vmatpush2.msra.mxu0 0.0
    %1490 = vmatprep.subr.mxu0 0.0
    %1491 = vmatpush2.msra.mxu0 0.0
    %1492 = vmatprep.mubr.f32.mxu0 0.0
    %1493 = vmatmul.mubr.f32.gmra.mxu0 %v1406
    %v1494 = vpop.f32.mrf.mxu0
    %v1495 = vadd.f32 %v1411, %v1494
    %v1496 = vpop.f32.mrf.mxu0
    %v1497 = vadd.f32 %v1415, %v1496
    %1498 = vdwg.mxu0
    %1499 = vmatprep.subr.mxu0 %v256
    %1500 = vmatpush1.msra.mxu0 %v255
    %1501 = vmatprep.subr.mxu0 %v252
    %1502 = vmatpush1.msra.mxu0 %v251
    %1503 = vmatprep.subr.mxu0 %v248
    %1504 = vmatpush1.msra.mxu0 %v247
    %1505 = vmatprep.subr.mxu0 %v244
    %1506 = vmatpush1.msra.mxu0 %v243
    %1507 = vmatprep.subr.mxu0 %v240
    %1508 = vmatpush1.msra.mxu0 %v239
    %1509 = vmatprep.subr.mxu0 %v236
    %1510 = vmatpush1.msra.mxu0 %v235
    %1511 = vmatprep.subr.mxu0 %v232
    %1512 = vmatpush1.msra.mxu0 %v231
    %1513 = vmatprep.subr.mxu0 %v228
    %1514 = vmatpush1.msra.mxu0 %v227
    %1515 = vmatprep.subr.mxu0 %v224
    %1516 = vmatpush1.msra.mxu0 %v223
    %1517 = vmatprep.subr.mxu0 %v220
    %1518 = vmatpush1.msra.mxu0 %v219
    %1519 = vmatprep.subr.mxu0 %v216
    %1520 = vmatpush1.msra.mxu0 %v215
    %1521 = vmatprep.subr.mxu0 %v212
    %1522 = vmatpush1.msra.mxu0 %v211
    %1523 = vmatprep.subr.mxu0 %v208
    %1524 = vmatpush1.msra.mxu0 %v207
    %1525 = vmatprep.subr.mxu0 %v204
    %1526 = vmatpush1.msra.mxu0 %v203
    %1527 = vmatprep.subr.mxu0 %v200
    %1528 = vmatpush1.msra.mxu0 %v199
    %1529 = vmatprep.subr.mxu0 %v196
    %1530 = vmatpush1.msra.mxu0 %v195
    %1531 = vmatprep.subr.mxu0 0.0
    %1532 = vmatpush2.msra.mxu0 0.0
    %1533 = vmatprep.subr.mxu0 0.0
    %1534 = vmatpush2.msra.mxu0 0.0
    %1535 = vmatprep.subr.mxu0 0.0
    %1536 = vmatpush2.msra.mxu0 0.0
    %1537 = vmatprep.subr.mxu0 0.0
    %1538 = vmatpush2.msra.mxu0 0.0
    %1539 = vmatprep.subr.mxu0 0.0
    %1540 = vmatpush2.msra.mxu0 0.0
    %1541 = vmatprep.subr.mxu0 0.0
    %1542 = vmatpush2.msra.mxu0 0.0
    %1543 = vmatprep.subr.mxu0 0.0
    %1544 = vmatpush2.msra.mxu0 0.0
    %1545 = vmatprep.subr.mxu0 0.0
    %1546 = vmatpush2.msra.mxu0 0.0
    %1547 = vmatprep.subr.mxu0 0.0
    %1548 = vmatpush2.msra.mxu0 0.0
    %1549 = vmatprep.subr.mxu0 0.0
    %1550 = vmatpush2.msra.mxu0 0.0
    %1551 = vmatprep.subr.mxu0 0.0
    %1552 = vmatpush2.msra.mxu0 0.0
    %1553 = vmatprep.subr.mxu0 0.0
    %1554 = vmatpush2.msra.mxu0 0.0
    %1555 = vmatprep.subr.mxu0 0.0
    %1556 = vmatpush2.msra.mxu0 0.0
    %1557 = vmatprep.subr.mxu0 0.0
    %1558 = vmatpush2.msra.mxu0 0.0
    %1559 = vmatprep.subr.mxu0 0.0
    %1560 = vmatpush2.msra.mxu0 0.0
    %1561 = vmatprep.subr.mxu0 0.0
    %1562 = vmatpush2.msra.mxu0 0.0
    %1563 = vmatprep.mubr.f32.mxu0 0.0
    %1564 = vmatmul.mubr.f32.gmra.mxu0 %v1406
    %v1565 = vpop.f32.mrf.mxu0
    %v1566 = vadd.f32 %v1419, %v1565
    %v1567 = vpop.f32.mrf.mxu0
    %v1568 = vadd.f32 %v1423, %v1567
    %1569 = vdwg.mxu0
    %1570 = vmatprep.subr.mxu0 %v318
    %1571 = vmatpush1.msra.mxu0 %v317
    %1572 = vmatprep.subr.mxu0 %v314
    %1573 = vmatpush1.msra.mxu0 %v313
    %1574 = vmatprep.subr.mxu0 %v310
    %1575 = vmatpush1.msra.mxu0 %v309
    %1576 = vmatprep.subr.mxu0 %v306
    %1577 = vmatpush1.msra.mxu0 %v305
    %1578 = vmatprep.subr.mxu0 %v302
    %1579 = vmatpush1.msra.mxu0 %v301
    %1580 = vmatprep.subr.mxu0 %v298
    %1581 = vmatpush1.msra.mxu0 %v297
    %1582 = vmatprep.subr.mxu0 %v294
    %1583 = vmatpush1.msra.mxu0 %v293
    %1584 = vmatprep.subr.mxu0 %v290
    %1585 = vmatpush1.msra.mxu0 %v289
    %1586 = vmatprep.subr.mxu0 %v286
    %1587 = vmatpush1.msra.mxu0 %v285
    %1588 = vmatprep.subr.mxu0 %v282
    %1589 = vmatpush1.msra.mxu0 %v281
    %1590 = vmatprep.subr.mxu0 %v278
    %1591 = vmatpush1.msra.mxu0 %v277
    %1592 = vmatprep.subr.mxu0 %v274
    %1593 = vmatpush1.msra.mxu0 %v273
    %1594 = vmatprep.subr.mxu0 %v270
    %1595 = vmatpush1.msra.mxu0 %v269
    %1596 = vmatprep.subr.mxu0 %v266
    %1597 = vmatpush1.msra.mxu0 %v265
    %1598 = vmatprep.subr.mxu0 %v262
    %1599 = vmatpush1.msra.mxu0 %v261
    %1600 = vmatprep.subr.mxu0 %v258
    %1601 = vmatpush1.msra.mxu0 %v257
    %1602 = vmatprep.subr.mxu0 0.0
    %1603 = vmatpush2.msra.mxu0 0.0
    %1604 = vmatprep.subr.mxu0 0.0
    %1605 = vmatpush2.msra.mxu0 0.0
    %1606 = vmatprep.subr.mxu0 0.0
    %1607 = vmatpush2.msra.mxu0 0.0
    %1608 = vmatprep.subr.mxu0 0.0
    %1609 = vmatpush2.msra.mxu0 0.0
    %1610 = vmatprep.subr.mxu0 0.0
    %1611 = vmatpush2.msra.mxu0 0.0
    %1612 = vmatprep.subr.mxu0 0.0
    %1613 = vmatpush2.msra.mxu0 0.0
    %1614 = vmatprep.subr.mxu0 0.0
    %1615 = vmatpush2.msra.mxu0 0.0
    %1616 = vmatprep.subr.mxu0 0.0
    %1617 = vmatpush2.msra.mxu0 0.0
    %1618 = vmatprep.subr.mxu0 0.0
    %1619 = vmatpush2.msra.mxu0 0.0
    %1620 = vmatprep.subr.mxu0 0.0
    %1621 = vmatpush2.msra.mxu0 0.0
    %1622 = vmatprep.subr.mxu0 0.0
    %1623 = vmatpush2.msra.mxu0 0.0
    %1624 = vmatprep.subr.mxu0 0.0
    %1625 = vmatpush2.msra.mxu0 0.0
    %1626 = vmatprep.subr.mxu0 0.0
    %1627 = vmatpush2.msra.mxu0 0.0
    %1628 = vmatprep.subr.mxu0 0.0
    %1629 = vmatpush2.msra.mxu0 0.0
    %1630 = vmatprep.subr.mxu0 0.0
    %1631 = vmatpush2.msra.mxu0 0.0
    %1632 = vmatprep.subr.mxu0 0.0
    %1633 = vmatpush2.msra.mxu0 0.0
    %1634 = vmatprep.mubr.f32.mxu0 0.0
    %1635 = vmatmul.mubr.f32.gmra.mxu0 0.0
    %v1636 = vpop.f32.mrf.mxu0
    %v1637 = vadd.f32 0.0, %v1636
    %v1638 = vpop.f32.mrf.mxu0
    %v1639 = vadd.f32 0.0, %v1638
    %1640 = vdwg.mxu0
    %1641 = vmatprep.subr.mxu0 %v320
    %1642 = vmatpush1.msra.mxu0 %v319
    %1643 = vmatprep.subr.mxu0 %v316
    %1644 = vmatpush1.msra.mxu0 %v315
    %1645 = vmatprep.subr.mxu0 %v312
    %1646 = vmatpush1.msra.mxu0 %v311
    %1647 = vmatprep.subr.mxu0 %v308
    %1648 = vmatpush1.msra.mxu0 %v307
    %1649 = vmatprep.subr.mxu0 %v304
    %1650 = vmatpush1.msra.mxu0 %v303
    %1651 = vmatprep.subr.mxu0 %v300
    %1652 = vmatpush1.msra.mxu0 %v299
    %1653 = vmatprep.subr.mxu0 %v296
    %1654 = vmatpush1.msra.mxu0 %v295
    %1655 = vmatprep.subr.mxu0 %v292
    %1656 = vmatpush1.msra.mxu0 %v291
    %1657 = vmatprep.subr.mxu0 %v288
    %1658 = vmatpush1.msra.mxu0 %v287
    %1659 = vmatprep.subr.mxu0 %v284
    %1660 = vmatpush1.msra.mxu0 %v283
    %1661 = vmatprep.subr.mxu0 %v280
    %1662 = vmatpush1.msra.mxu0 %v279
    %1663 = vmatprep.subr.mxu0 %v276
    %1664 = vmatpush1.msra.mxu0 %v275
    %1665 = vmatprep.subr.mxu0 %v272
    %1666 = vmatpush1.msra.mxu0 %v271
    %1667 = vmatprep.subr.mxu0 %v268
    %1668 = vmatpush1.msra.mxu0 %v267
    %1669 = vmatprep.subr.mxu0 %v264
    %1670 = vmatpush1.msra.mxu0 %v263
    %1671 = vmatprep.subr.mxu0 %v260
    %1672 = vmatpush1.msra.mxu0 %v259
    %1673 = vmatprep.subr.mxu0 0.0
    %1674 = vmatpush2.msra.mxu0 0.0
    %1675 = vmatprep.subr.mxu0 0.0
    %1676 = vmatpush2.msra.mxu0 0.0
    %1677 = vmatprep.subr.mxu0 0.0
    %1678 = vmatpush2.msra.mxu0 0.0
    %1679 = vmatprep.subr.mxu0 0.0
    %1680 = vmatpush2.msra.mxu0 0.0
    %1681 = vmatprep.subr.mxu0 0.0
    %1682 = vmatpush2.msra.mxu0 0.0
    %1683 = vmatprep.subr.mxu0 0.0
    %1684 = vmatpush2.msra.mxu0 0.0
    %1685 = vmatprep.subr.mxu0 0.0
    %1686 = vmatpush2.msra.mxu0 0.0
    %1687 = vmatprep.subr.mxu0 0.0
    %1688 = vmatpush2.msra.mxu0 0.0
    %1689 = vmatprep.subr.mxu0 0.0
    %1690 = vmatpush2.msra.mxu0 0.0
    %1691 = vmatprep.subr.mxu0 0.0
    %1692 = vmatpush2.msra.mxu0 0.0
    %1693 = vmatprep.subr.mxu0 0.0
    %1694 = vmatpush2.msra.mxu0 0.0
    %1695 = vmatprep.subr.mxu0 0.0
    %1696 = vmatpush2.msra.mxu0 0.0
    %1697 = vmatprep.subr.mxu0 0.0
    %1698 = vmatpush2.msra.mxu0 0.0
    %1699 = vmatprep.subr.mxu0 0.0
    %1700 = vmatpush2.msra.mxu0 0.0
    %1701 = vmatprep.subr.mxu0 0.0
    %1702 = vmatpush2.msra.mxu0 0.0
    %1703 = vmatprep.subr.mxu0 0.0
    %1704 = vmatpush2.msra.mxu0 0.0
    %1705 = vmatprep.mubr.f32.mxu0 0.0
    %1706 = vmatmul.mubr.f32.gmra.mxu0 0.0
    %v1707 = vpop.f32.mrf.mxu0
    %v1708 = vadd.f32 0.0, %v1707
    %v1709 = vpop.f32.mrf.mxu0
    %v1710 = vadd.f32 0.0, %v1709
    %1711 = vdwg.mxu0
    %v1712 = vadd.f32 %v1495, %v1637
    %v1713 = vadd.f32 %v1497, %v1639
    %v1714 = vadd.f32 %v1566, %v1708
    %v1715 = vadd.f32 %v1568, %v1710
    %v1716 = vxor.u32 %v1712, 2147483648
    %v1717 = vmul.f32 %v1716, 1.442695
    %v1718 = vpow.pop %v1717
    %v1719 = vadd.f32 %v1718, 1.0
    %v1720 = vrcp.pop %v1719
    %v1721 = vmul.f32 1.0, %v1720
    %v1722 = vxor.u32 %v1713, 2147483648
    %v1723 = vmul.f32 %v1722, 1.442695
    %v1724 = vpow.pop %v1723
    %v1725 = vadd.f32 %v1724, 1.0
    %v1726 = vrcp.pop %v1725
    %v1727 = vmul.f32 1.0, %v1726
    %v1728 = vtanh.pop %v1714
    %v1729 = vxor.u32 %v1715, 2147483648
    %v1730 = vmul.f32 %v1729, 1.442695
    %v1731 = vpow.pop %v1730
    %v1732 = vadd.f32 %v1731, 1.0
    %v1733 = vrcp.pop %v1732
    %v1734 = vmul.f32 1.0, %v1733
    %v1735 = vmul.f32 %v1727, 0.0
    %v1736 = vmul.f32 %v1721, %v1728
    %v1737 = vadd.f32 %v1735, %v1736
    %v1738 = vtanh.pop %v1737
    %v1739 = vmul.f32 %v1734, %v1738
    %1740 = vmatprep.subr.mxu0 %v189
    %1741 = vmatpush1.msra.mxu0 %v188
    %1742 = vmatprep.subr.mxu0 %v185
    %1743 = vmatpush1.msra.mxu0 %v184
    %1744 = vmatprep.subr.mxu0 %v181
    %1745 = vmatpush1.msra.mxu0 %v180
    %1746 = vmatprep.subr.mxu0 %v177
    %1747 = vmatpush1.msra.mxu0 %v176
    %1748 = vmatprep.subr.mxu0 %v173
    %1749 = vmatpush1.msra.mxu0 %v172
    %1750 = vmatprep.subr.mxu0 %v169
    %1751 = vmatpush1.msra.mxu0 %v168
    %1752 = vmatprep.subr.mxu0 %v165
    %1753 = vmatpush1.msra.mxu0 %v164
    %1754 = vmatprep.subr.mxu0 %v161
    %1755 = vmatpush1.msra.mxu0 %v160
    %1756 = vmatprep.subr.mxu0 %v157
    %1757 = vmatpush1.msra.mxu0 %v156
    %1758 = vmatprep.subr.mxu0 %v153
    %1759 = vmatpush1.msra.mxu0 %v152
    %1760 = vmatprep.subr.mxu0 %v149
    %1761 = vmatpush1.msra.mxu0 %v148
    %1762 = vmatprep.subr.mxu0 %v145
    %1763 = vmatpush1.msra.mxu0 %v144
    %1764 = vmatprep.subr.mxu0 %v141
    %1765 = vmatpush1.msra.mxu0 %v140
    %1766 = vmatprep.subr.mxu0 %v137
    %1767 = vmatpush1.msra.mxu0 %v136
    %1768 = vmatprep.subr.mxu0 %v133
    %1769 = vmatpush1.msra.mxu0 %v132
    %1770 = vmatprep.subr.mxu0 %v129
    %1771 = vmatpush1.msra.mxu0 %v128
    %1772 = vmatprep.subr.mxu0 0.0
    %1773 = vmatpush2.msra.mxu0 0.0
    %1774 = vmatprep.subr.mxu0 0.0
    %1775 = vmatpush2.msra.mxu0 0.0
    %1776 = vmatprep.subr.mxu0 0.0
    %1777 = vmatpush2.msra.mxu0 0.0
    %1778 = vmatprep.subr.mxu0 0.0
    %1779 = vmatpush2.msra.mxu0 0.0
    %1780 = vmatprep.subr.mxu0 0.0
    %1781 = vmatpush2.msra.mxu0 0.0
    %1782 = vmatprep.subr.mxu0 0.0
    %1783 = vmatpush2.msra.mxu0 0.0
    %1784 = vmatprep.subr.mxu0 0.0
    %1785 = vmatpush2.msra.mxu0 0.0
    %1786 = vmatprep.subr.mxu0 0.0
    %1787 = vmatpush2.msra.mxu0 0.0
    %1788 = vmatprep.subr.mxu0 0.0
    %1789 = vmatpush2.msra.mxu0 0.0
    %1790 = vmatprep.subr.mxu0 0.0
    %1791 = vmatpush2.msra.mxu0 0.0
    %1792 = vmatprep.subr.mxu0 0.0
    %1793 = vmatpush2.msra.mxu0 0.0
    %1794 = vmatprep.subr.mxu0 0.0
    %1795 = vmatpush2.msra.mxu0 0.0
    %1796 = vmatprep.subr.mxu0 0.0
    %1797 = vmatpush2.msra.mxu0 0.0
    %1798 = vmatprep.subr.mxu0 0.0
    %1799 = vmatpush2.msra.mxu0 0.0
    %1800 = vmatprep.subr.mxu0 0.0
    %1801 = vmatpush2.msra.mxu0 0.0
    %1802 = vmatprep.subr.mxu0 0.0
    %1803 = vmatpush2.msra.mxu0 0.0
    %1804 = vmatprep.mubr.f32.mxu0 0.0
    %1805 = vmatmul.mubr.f32.gmra.mxu0 %v1406
    %v1806 = vpop.f32.mrf.mxu0
    %v1807 = vadd.f32 0.0, %v1806
    %v1808 = vpop.f32.mrf.mxu0
    %v1809 = vadd.f32 0.0, %v1808
    %1810 = vdwg.mxu0
    %1811 = vmatprep.subr.mxu0 %v191
    %1812 = vmatpush1.msra.mxu0 %v190
    %1813 = vmatprep.subr.mxu0 %v187
    %1814 = vmatpush1.msra.mxu0 %v186
    %1815 = vmatprep.subr.mxu0 %v183
    %1816 = vmatpush1.msra.mxu0 %v182
    %1817 = vmatprep.subr.mxu0 %v179
    %1818 = vmatpush1.msra.mxu0 %v178
    %1819 = vmatprep.subr.mxu0 %v175
    %1820 = vmatpush1.msra.mxu0 %v174
    %1821 = vmatprep.subr.mxu0 %v171
    %1822 = vmatpush1.msra.mxu0 %v170
    %1823 = vmatprep.subr.mxu0 %v167
    %1824 = vmatpush1.msra.mxu0 %v166
    %1825 = vmatprep.subr.mxu0 %v163
    %1826 = vmatpush1.msra.mxu0 %v162
    %1827 = vmatprep.subr.mxu0 %v159
    %1828 = vmatpush1.msra.mxu0 %v158
    %1829 = vmatprep.subr.mxu0 %v155
    %1830 = vmatpush1.msra.mxu0 %v154
    %1831 = vmatprep.subr.mxu0 %v151
    %1832 = vmatpush1.msra.mxu0 %v150
    %1833 = vmatprep.subr.mxu0 %v147
    %1834 = vmatpush1.msra.mxu0 %v146
    %1835 = vmatprep.subr.mxu0 %v143
    %1836 = vmatpush1.msra.mxu0 %v142
    %1837 = vmatprep.subr.mxu0 %v139
    %1838 = vmatpush1.msra.mxu0 %v138
    %1839 = vmatprep.subr.mxu0 %v135
    %1840 = vmatpush1.msra.mxu0 %v134
    %1841 = vmatprep.subr.mxu0 %v131
    %1842 = vmatpush1.msra.mxu0 %v130
    %1843 = vmatprep.subr.mxu0 0.0
    %1844 = vmatpush2.msra.mxu0 0.0
    %1845 = vmatprep.subr.mxu0 0.0
    %1846 = vmatpush2.msra.mxu0 0.0
    %1847 = vmatprep.subr.mxu0 0.0
    %1848 = vmatpush2.msra.mxu0 0.0
    %1849 = vmatprep.subr.mxu0 0.0
    %1850 = vmatpush2.msra.mxu0 0.0
    %1851 = vmatprep.subr.mxu0 0.0
    %1852 = vmatpush2.msra.mxu0 0.0
    %1853 = vmatprep.subr.mxu0 0.0
    %1854 = vmatpush2.msra.mxu0 0.0
    %1855 = vmatprep.subr.mxu0 0.0
    %1856 = vmatpush2.msra.mxu0 0.0
    %1857 = vmatprep.subr.mxu0 0.0
    %1858 = vmatpush2.msra.mxu0 0.0
    %1859 = vmatprep.subr.mxu0 0.0
    %1860 = vmatpush2.msra.mxu0 0.0
    %1861 = vmatprep.subr.mxu0 0.0
    %1862 = vmatpush2.msra.mxu0 0.0
    %1863 = vmatprep.subr.mxu0 0.0
    %1864 = vmatpush2.msra.mxu0 0.0
    %1865 = vmatprep.subr.mxu0 0.0
    %1866 = vmatpush2.msra.mxu0 0.0
    %1867 = vmatprep.subr.mxu0 0.0
    %1868 = vmatpush2.msra.mxu0 0.0
    %1869 = vmatprep.subr.mxu0 0.0
    %1870 = vmatpush2.msra.mxu0 0.0
    %1871 = vmatprep.subr.mxu0 0.0
    %1872 = vmatpush2.msra.mxu0 0.0
    %1873 = vmatprep.subr.mxu0 0.0
    %1874 = vmatpush2.msra.mxu0 0.0
    %1875 = vmatprep.mubr.f32.mxu0 0.0
    %1876 = vmatmul.mubr.f32.gmra.mxu0 %v1406
    %v1877 = vpop.f32.mrf.mxu0
    %v1878 = vadd.f32 0.0, %v1877
    %v1879 = vpop.f32.mrf.mxu0
    %v1880 = vadd.f32 0.0, %v1879
    %1881 = vdwg.mxu0
    %v1882 = vadd.f32 %v721, %v1807
    %v1883 = vadd.f32 %v723, %v1809
    %v1884 = vadd.f32 %v792, %v1878
    %v1885 = vadd.f32 %v794, %v1880
    %v1886 = vxor.u32 %v1882, 2147483648
    %v1887 = vmul.f32 %v1886, 1.442695
    %v1888 = vpow.pop %v1887
    %v1889 = vadd.f32 %v1888, 1.0
    %v1890 = vrcp.pop %v1889
    %v1891 = vmul.f32 1.0, %v1890
    %v1892 = vxor.u32 %v1883, 2147483648
    %v1893 = vmul.f32 %v1892, 1.442695
    %v1894 = vpow.pop %v1893
    %v1895 = vadd.f32 %v1894, 1.0
    %v1896 = vrcp.pop %v1895
    %v1897 = vmul.f32 1.0, %v1896
    %v1898 = vtanh.pop %v1884
    %v1899 = vxor.u32 %v1885, 2147483648
    %v1900 = vmul.f32 %v1899, 1.442695
    %v1901 = vpow.pop %v1900
    %v1902 = vadd.f32 %v1901, 1.0
    %v1903 = vrcp.pop %v1902
    %v1904 = vmul.f32 1.0, %v1903
    %v1905 = vmul.f32 %v1897, %v1404
    %v1906 = vmul.f32 %v1891, %v1898
    %v1907 = vadd.f32 %v1905, %v1906
    %v1908 = vtanh.pop %v1907
    %v1909 = vmul.f32 %v1904, %v1908
    %1910 = vmatprep.subr.mxu0 %v254
    %1911 = vmatpush1.msra.mxu0 %v253
    %1912 = vmatprep.subr.mxu0 %v250
    %1913 = vmatpush1.msra.mxu0 %v249
    %1914 = vmatprep.subr.mxu0 %v246
    %1915 = vmatpush1.msra.mxu0 %v245
    %1916 = vmatprep.subr.mxu0 %v242
    %1917 = vmatpush1.msra.mxu0 %v241
    %1918 = vmatprep.subr.mxu0 %v238
    %1919 = vmatpush1.msra.mxu0 %v237
    %1920 = vmatprep.subr.mxu0 %v234
    %1921 = vmatpush1.msra.mxu0 %v233
    %1922 = vmatprep.subr.mxu0 %v230
    %1923 = vmatpush1.msra.mxu0 %v229
    %1924 = vmatprep.subr.mxu0 %v226
    %1925 = vmatpush1.msra.mxu0 %v225
    %1926 = vmatprep.subr.mxu0 %v222
    %1927 = vmatpush1.msra.mxu0 %v221
    %1928 = vmatprep.subr.mxu0 %v218
    %1929 = vmatpush1.msra.mxu0 %v217
    %1930 = vmatprep.subr.mxu0 %v214
    %1931 = vmatpush1.msra.mxu0 %v213
    %1932 = vmatprep.subr.mxu0 %v210
    %1933 = vmatpush1.msra.mxu0 %v209
    %1934 = vmatprep.subr.mxu0 %v206
    %1935 = vmatpush1.msra.mxu0 %v205
    %1936 = vmatprep.subr.mxu0 %v202
    %1937 = vmatpush1.msra.mxu0 %v201
    %1938 = vmatprep.subr.mxu0 %v198
    %1939 = vmatpush1.msra.mxu0 %v197
    %1940 = vmatprep.subr.mxu0 %v194
    %1941 = vmatpush1.msra.mxu0 %v193
    %1942 = vmatprep.subr.mxu0 0.0
    %1943 = vmatpush2.msra.mxu0 0.0
    %1944 = vmatprep.subr.mxu0 0.0
    %1945 = vmatpush2.msra.mxu0 0.0
    %1946 = vmatprep.subr.mxu0 0.0
    %1947 = vmatpush2.msra.mxu0 0.0
    %1948 = vmatprep.subr.mxu0 0.0
    %1949 = vmatpush2.msra.mxu0 0.0
    %1950 = vmatprep.subr.mxu0 0.0
    %1951 = vmatpush2.msra.mxu0 0.0
    %1952 = vmatprep.subr.mxu0 0.0
    %1953 = vmatpush2.msra.mxu0 0.0
    %1954 = vmatprep.subr.mxu0 0.0
    %1955 = vmatpush2.msra.mxu0 0.0
    %1956 = vmatprep.subr.mxu0 0.0
    %1957 = vmatpush2.msra.mxu0 0.0
    %1958 = vmatprep.subr.mxu0 0.0
    %1959 = vmatpush2.msra.mxu0 0.0
    %1960 = vmatprep.subr.mxu0 0.0
    %1961 = vmatpush2.msra.mxu0 0.0
    %1962 = vmatprep.subr.mxu0 0.0
    %1963 = vmatpush2.msra.mxu0 0.0
    %1964 = vmatprep.subr.mxu0 0.0
    %1965 = vmatpush2.msra.mxu0 0.0
    %1966 = vmatprep.subr.mxu0 0.0
    %1967 = vmatpush2.msra.mxu0 0.0
    %1968 = vmatprep.subr.mxu0 0.0
    %1969 = vmatpush2.msra.mxu0 0.0
    %1970 = vmatprep.subr.mxu0 0.0
    %1971 = vmatpush2.msra.mxu0 0.0
    %1972 = vmatprep.subr.mxu0 0.0
    %1973 = vmatpush2.msra.mxu0 0.0
    %1974 = vmatprep.mubr.f32.mxu0 0.0
    %1975 = vmatmul.mubr.f32.gmra.mxu0 %v1909
    %v1976 = vpop.f32.mrf.mxu0
    %v1977 = vadd.f32 %v1411, %v1976
    %v1978 = vpop.f32.mrf.mxu0
    %v1979 = vadd.f32 %v1415, %v1978
    %1980 = vdwg.mxu0
    %1981 = vmatprep.subr.mxu0 %v256
    %1982 = vmatpush1.msra.mxu0 %v255
    %1983 = vmatprep.subr.mxu0 %v252
    %1984 = vmatpush1.msra.mxu0 %v251
    %1985 = vmatprep.subr.mxu0 %v248
    %1986 = vmatpush1.msra.mxu0 %v247
    %1987 = vmatprep.subr.mxu0 %v244
    %1988 = vmatpush1.msra.mxu0 %v243
    %1989 = vmatprep.subr.mxu0 %v240
    %1990 = vmatpush1.msra.mxu0 %v239
    %1991 = vmatprep.subr.mxu0 %v236
    %1992 = vmatpush1.msra.mxu0 %v235
    %1993 = vmatprep.subr.mxu0 %v232
    %1994 = vmatpush1.msra.mxu0 %v231
    %1995 = vmatprep.subr.mxu0 %v228
    %1996 = vmatpush1.msra.mxu0 %v227
    %1997 = vmatprep.subr.mxu0 %v224
    %1998 = vmatpush1.msra.mxu0 %v223
    %1999 = vmatprep.subr.mxu0 %v220
    %2000 = vmatpush1.msra.mxu0 %v219
    %2001 = vmatprep.subr.mxu0 %v216
    %2002 = vmatpush1.msra.mxu0 %v215
    %2003 = vmatprep.subr.mxu0 %v212
    %2004 = vmatpush1.msra.mxu0 %v211
    %2005 = vmatprep.subr.mxu0 %v208
    %2006 = vmatpush1.msra.mxu0 %v207
    %2007 = vmatprep.subr.mxu0 %v204
    %2008 = vmatpush1.msra.mxu0 %v203
    %2009 = vmatprep.subr.mxu0 %v200
    %2010 = vmatpush1.msra.mxu0 %v199
    %2011 = vmatprep.subr.mxu0 %v196
    %2012 = vmatpush1.msra.mxu0 %v195
    %2013 = vmatprep.subr.mxu0 0.0
    %2014 = vmatpush2.msra.mxu0 0.0
    %2015 = vmatprep.subr.mxu0 0.0
    %2016 = vmatpush2.msra.mxu0 0.0
    %2017 = vmatprep.subr.mxu0 0.0
    %2018 = vmatpush2.msra.mxu0 0.0
    %2019 = vmatprep.subr.mxu0 0.0
    %2020 = vmatpush2.msra.mxu0 0.0
    %2021 = vmatprep.subr.mxu0 0.0
    %2022 = vmatpush2.msra.mxu0 0.0
    %2023 = vmatprep.subr.mxu0 0.0
    %2024 = vmatpush2.msra.mxu0 0.0
    %2025 = vmatprep.subr.mxu0 0.0
    %2026 = vmatpush2.msra.mxu0 0.0
    %2027 = vmatprep.subr.mxu0 0.0
    %2028 = vmatpush2.msra.mxu0 0.0
    %2029 = vmatprep.subr.mxu0 0.0
    %2030 = vmatpush2.msra.mxu0 0.0
    %2031 = vmatprep.subr.mxu0 0.0
    %2032 = vmatpush2.msra.mxu0 0.0
    %2033 = vmatprep.subr.mxu0 0.0
    %2034 = vmatpush2.msra.mxu0 0.0
    %2035 = vmatprep.subr.mxu0 0.0
    %2036 = vmatpush2.msra.mxu0 0.0
    %2037 = vmatprep.subr.mxu0 0.0
    %2038 = vmatpush2.msra.mxu0 0.0
    %2039 = vmatprep.subr.mxu0 0.0
    %2040 = vmatpush2.msra.mxu0 0.0
    %2041 = vmatprep.subr.mxu0 0.0
    %2042 = vmatpush2.msra.mxu0 0.0
    %2043 = vmatprep.subr.mxu0 0.0
    %2044 = vmatpush2.msra.mxu0 0.0
    %2045 = vmatprep.mubr.f32.mxu0 0.0
    %2046 = vmatmul.mubr.f32.gmra.mxu0 %v1909
    %v2047 = vpop.f32.mrf.mxu0
    %v2048 = vadd.f32 %v1419, %v2047
    %v2049 = vpop.f32.mrf.mxu0
    %v2050 = vadd.f32 %v1423, %v2049
    %2051 = vdwg.mxu0
    %2052 = vmatprep.subr.mxu0 %v318
    %2053 = vmatpush1.msra.mxu0 %v317
    %2054 = vmatprep.subr.mxu0 %v314
    %2055 = vmatpush1.msra.mxu0 %v313
    %2056 = vmatprep.subr.mxu0 %v310
    %2057 = vmatpush1.msra.mxu0 %v309
    %2058 = vmatprep.subr.mxu0 %v306
    %2059 = vmatpush1.msra.mxu0 %v305
    %2060 = vmatprep.subr.mxu0 %v302
    %2061 = vmatpush1.msra.mxu0 %v301
    %2062 = vmatprep.subr.mxu0 %v298
    %2063 = vmatpush1.msra.mxu0 %v297
    %2064 = vmatprep.subr.mxu0 %v294
    %2065 = vmatpush1.msra.mxu0 %v293
    %2066 = vmatprep.subr.mxu0 %v290
    %2067 = vmatpush1.msra.mxu0 %v289
    %2068 = vmatprep.subr.mxu0 %v286
    %2069 = vmatpush1.msra.mxu0 %v285
    %2070 = vmatprep.subr.mxu0 %v282
    %2071 = vmatpush1.msra.mxu0 %v281
    %2072 = vmatprep.subr.mxu0 %v278
    %2073 = vmatpush1.msra.mxu0 %v277
    %2074 = vmatprep.subr.mxu0 %v274
    %2075 = vmatpush1.msra.mxu0 %v273
    %2076 = vmatprep.subr.mxu0 %v270
    %2077 = vmatpush1.msra.mxu0 %v269
    %2078 = vmatprep.subr.mxu0 %v266
    %2079 = vmatpush1.msra.mxu0 %v265
    %2080 = vmatprep.subr.mxu0 %v262
    %2081 = vmatpush1.msra.mxu0 %v261
    %2082 = vmatprep.subr.mxu0 %v258
    %2083 = vmatpush1.msra.mxu0 %v257
    %2084 = vmatprep.subr.mxu0 0.0
    %2085 = vmatpush2.msra.mxu0 0.0
    %2086 = vmatprep.subr.mxu0 0.0
    %2087 = vmatpush2.msra.mxu0 0.0
    %2088 = vmatprep.subr.mxu0 0.0
    %2089 = vmatpush2.msra.mxu0 0.0
    %2090 = vmatprep.subr.mxu0 0.0
    %2091 = vmatpush2.msra.mxu0 0.0
    %2092 = vmatprep.subr.mxu0 0.0
    %2093 = vmatpush2.msra.mxu0 0.0
    %2094 = vmatprep.subr.mxu0 0.0
    %2095 = vmatpush2.msra.mxu0 0.0
    %2096 = vmatprep.subr.mxu0 0.0
    %2097 = vmatpush2.msra.mxu0 0.0
    %2098 = vmatprep.subr.mxu0 0.0
    %2099 = vmatpush2.msra.mxu0 0.0
    %2100 = vmatprep.subr.mxu0 0.0
    %2101 = vmatpush2.msra.mxu0 0.0
    %2102 = vmatprep.subr.mxu0 0.0
    %2103 = vmatpush2.msra.mxu0 0.0
    %2104 = vmatprep.subr.mxu0 0.0
    %2105 = vmatpush2.msra.mxu0 0.0
    %2106 = vmatprep.subr.mxu0 0.0
    %2107 = vmatpush2.msra.mxu0 0.0
    %2108 = vmatprep.subr.mxu0 0.0
    %2109 = vmatpush2.msra.mxu0 0.0
    %2110 = vmatprep.subr.mxu0 0.0
    %2111 = vmatpush2.msra.mxu0 0.0
    %2112 = vmatprep.subr.mxu0 0.0
    %2113 = vmatpush2.msra.mxu0 0.0
    %2114 = vmatprep.subr.mxu0 0.0
    %2115 = vmatpush2.msra.mxu0 0.0
    %2116 = vmatprep.mubr.f32.mxu0 0.0
    %2117 = vmatmul.mubr.f32.gmra.mxu0 %v1739
    %v2118 = vpop.f32.mrf.mxu0
    %v2119 = vadd.f32 0.0, %v2118
    %v2120 = vpop.f32.mrf.mxu0
    %v2121 = vadd.f32 0.0, %v2120
    %2122 = vdwg.mxu0
    %2123 = vmatprep.subr.mxu0 %v320
    %2124 = vmatpush1.msra.mxu0 %v319
    %2125 = vmatprep.subr.mxu0 %v316
    %2126 = vmatpush1.msra.mxu0 %v315
    %2127 = vmatprep.subr.mxu0 %v312
    %2128 = vmatpush1.msra.mxu0 %v311
    %2129 = vmatprep.subr.mxu0 %v308
    %2130 = vmatpush1.msra.mxu0 %v307
    %2131 = vmatprep.subr.mxu0 %v304
    %2132 = vmatpush1.msra.mxu0 %v303
    %2133 = vmatprep.subr.mxu0 %v300
    %2134 = vmatpush1.msra.mxu0 %v299
    %2135 = vmatprep.subr.mxu0 %v296
    %2136 = vmatpush1.msra.mxu0 %v295
    %2137 = vmatprep.subr.mxu0 %v292
    %2138 = vmatpush1.msra.mxu0 %v291
    %2139 = vmatprep.subr.mxu0 %v288
    %2140 = vmatpush1.msra.mxu0 %v287
    %2141 = vmatprep.subr.mxu0 %v284
    %2142 = vmatpush1.msra.mxu0 %v283
    %2143 = vmatprep.subr.mxu0 %v280
    %2144 = vmatpush1.msra.mxu0 %v279
    %2145 = vmatprep.subr.mxu0 %v276
    %2146 = vmatpush1.msra.mxu0 %v275
    %2147 = vmatprep.subr.mxu0 %v272
    %2148 = vmatpush1.msra.mxu0 %v271
    %2149 = vmatprep.subr.mxu0 %v268
    %2150 = vmatpush1.msra.mxu0 %v267
    %2151 = vmatprep.subr.mxu0 %v264
    %2152 = vmatpush1.msra.mxu0 %v263
    %2153 = vmatprep.subr.mxu0 %v260
    %2154 = vmatpush1.msra.mxu0 %v259
    %2155 = vmatprep.subr.mxu0 0.0
    %2156 = vmatpush2.msra.mxu0 0.0
    %2157 = vmatprep.subr.mxu0 0.0
    %2158 = vmatpush2.msra.mxu0 0.0
    %2159 = vmatprep.subr.mxu0 0.0
    %2160 = vmatpush2.msra.mxu0 0.0
    %2161 = vmatprep.subr.mxu0 0.0
    %2162 = vmatpush2.msra.mxu0 0.0
    %2163 = vmatprep.subr.mxu0 0.0
    %2164 = vmatpush2.msra.mxu0 0.0
    %2165 = vmatprep.subr.mxu0 0.0
    %2166 = vmatpush2.msra.mxu0 0.0
    %2167 = vmatprep.subr.mxu0 0.0
    %2168 = vmatpush2.msra.mxu0 0.0
    %2169 = vmatprep.subr.mxu0 0.0
    %2170 = vmatpush2.msra.mxu0 0.0
    %2171 = vmatprep.subr.mxu0 0.0
    %2172 = vmatpush2.msra.mxu0 0.0
    %2173 = vmatprep.subr.mxu0 0.0
    %2174 = vmatpush2.msra.mxu0 0.0
    %2175 = vmatprep.subr.mxu0 0.0
    %2176 = vmatpush2.msra.mxu0 0.0
    %2177 = vmatprep.subr.mxu0 0.0
    %2178 = vmatpush2.msra.mxu0 0.0
    %2179 = vmatprep.subr.mxu0 0.0
    %2180 = vmatpush2.msra.mxu0 0.0
    %2181 = vmatprep.subr.mxu0 0.0
    %2182 = vmatpush2.msra.mxu0 0.0
    %2183 = vmatprep.subr.mxu0 0.0
    %2184 = vmatpush2.msra.mxu0 0.0
    %2185 = vmatprep.subr.mxu0 0.0
    %2186 = vmatpush2.msra.mxu0 0.0
    %2187 = vmatprep.mubr.f32.mxu0 0.0
    %2188 = vmatmul.mubr.f32.gmra.mxu0 %v1739
    %v2189 = vpop.f32.mrf.mxu0
    %v2190 = vadd.f32 0.0, %v2189
    %v2191 = vpop.f32.mrf.mxu0
    %v2192 = vadd.f32 0.0, %v2191
    %2193 = vdwg.mxu0
    %v2194 = vadd.f32 %v1977, %v2119
    %v2195 = vadd.f32 %v1979, %v2121
    %v2196 = vadd.f32 %v2048, %v2190
    %v2197 = vadd.f32 %v2050, %v2192
    %v2198 = vxor.u32 %v2194, 2147483648
    %v2199 = vmul.f32 %v2198, 1.442695
    %v2200 = vpow.pop %v2199
    %v2201 = vadd.f32 %v2200, 1.0
    %v2202 = vrcp.pop %v2201
    %v2203 = vmul.f32 1.0, %v2202
    %v2204 = vxor.u32 %v2195, 2147483648
    %v2205 = vmul.f32 %v2204, 1.442695
    %v2206 = vpow.pop %v2205
    %v2207 = vadd.f32 %v2206, 1.0
    %v2208 = vrcp.pop %v2207
    %v2209 = vmul.f32 1.0, %v2208
    %v2210 = vtanh.pop %v2196
    %v2211 = vxor.u32 %v2197, 2147483648
    %v2212 = vmul.f32 %v2211, 1.442695
    %v2213 = vpow.pop %v2212
    %v2214 = vadd.f32 %v2213, 1.0
    %v2215 = vrcp.pop %v2214
    %v2216 = vmul.f32 1.0, %v2215
    %v2217 = vmul.f32 %v2209, %v1737
    %v2218 = vmul.f32 %v2203, %v2210
    %v2219 = vadd.f32 %v2217, %v2218
    %v2220 = vtanh.pop %v2219
    %v2221 = vmul.f32 %v2216, %v2220
    %2222 = vmatprep.subr.mxu0 %v189
    %2223 = vmatpush1.msra.mxu0 %v188
    %2224 = vmatprep.subr.mxu0 %v185
    %2225 = vmatpush1.msra.mxu0 %v184
    %2226 = vmatprep.subr.mxu0 %v181
    %2227 = vmatpush1.msra.mxu0 %v180
    %2228 = vmatprep.subr.mxu0 %v177
    %2229 = vmatpush1.msra.mxu0 %v176
    %2230 = vmatprep.subr.mxu0 %v173
    %2231 = vmatpush1.msra.mxu0 %v172
    %2232 = vmatprep.subr.mxu0 %v169
    %2233 = vmatpush1.msra.mxu0 %v168
    %2234 = vmatprep.subr.mxu0 %v165
    %2235 = vmatpush1.msra.mxu0 %v164
    %2236 = vmatprep.subr.mxu0 %v161
    %2237 = vmatpush1.msra.mxu0 %v160
    %2238 = vmatprep.subr.mxu0 %v157
    %2239 = vmatpush1.msra.mxu0 %v156
    %2240 = vmatprep.subr.mxu0 %v153
    %2241 = vmatpush1.msra.mxu0 %v152
    %2242 = vmatprep.subr.mxu0 %v149
    %2243 = vmatpush1.msra.mxu0 %v148
    %2244 = vmatprep.subr.mxu0 %v145
    %2245 = vmatpush1.msra.mxu0 %v144
    %2246 = vmatprep.subr.mxu0 %v141
    %2247 = vmatpush1.msra.mxu0 %v140
    %2248 = vmatprep.subr.mxu0 %v137
    %2249 = vmatpush1.msra.mxu0 %v136
    %2250 = vmatprep.subr.mxu0 %v133
    %2251 = vmatpush1.msra.mxu0 %v132
    %2252 = vmatprep.subr.mxu0 %v129
    %2253 = vmatpush1.msra.mxu0 %v128
    %2254 = vmatprep.subr.mxu0 0.0
    %2255 = vmatpush2.msra.mxu0 0.0
    %2256 = vmatprep.subr.mxu0 0.0
    %2257 = vmatpush2.msra.mxu0 0.0
    %2258 = vmatprep.subr.mxu0 0.0
    %2259 = vmatpush2.msra.mxu0 0.0
    %2260 = vmatprep.subr.mxu0 0.0
    %2261 = vmatpush2.msra.mxu0 0.0
    %2262 = vmatprep.subr.mxu0 0.0
    %2263 = vmatpush2.msra.mxu0 0.0
    %2264 = vmatprep.subr.mxu0 0.0
    %2265 = vmatpush2.msra.mxu0 0.0
    %2266 = vmatprep.subr.mxu0 0.0
    %2267 = vmatpush2.msra.mxu0 0.0
    %2268 = vmatprep.subr.mxu0 0.0
    %2269 = vmatpush2.msra.mxu0 0.0
    %2270 = vmatprep.subr.mxu0 0.0
    %2271 = vmatpush2.msra.mxu0 0.0
    %2272 = vmatprep.subr.mxu0 0.0
    %2273 = vmatpush2.msra.mxu0 0.0
    %2274 = vmatprep.subr.mxu0 0.0
    %2275 = vmatpush2.msra.mxu0 0.0
    %2276 = vmatprep.subr.mxu0 0.0
    %2277 = vmatpush2.msra.mxu0 0.0
    %2278 = vmatprep.subr.mxu0 0.0
    %2279 = vmatpush2.msra.mxu0 0.0
    %2280 = vmatprep.subr.mxu0 0.0
    %2281 = vmatpush2.msra.mxu0 0.0
    %2282 = vmatprep.subr.mxu0 0.0
    %2283 = vmatpush2.msra.mxu0 0.0
    %2284 = vmatprep.subr.mxu0 0.0
    %2285 = vmatpush2.msra.mxu0 0.0
    %2286 = vmatprep.mubr.f32.mxu0 0.0
    %2287 = vmatmul.mubr.f32.gmra.mxu0 %v1909
    %v2288 = vpop.f32.mrf.mxu0
    %v2289 = vadd.f32 0.0, %v2288
    %v2290 = vpop.f32.mrf.mxu0
    %v2291 = vadd.f32 0.0, %v2290
    %2292 = vdwg.mxu0
    %2293 = vmatprep.subr.mxu0 %v191
    %2294 = vmatpush1.msra.mxu0 %v190
    %2295 = vmatprep.subr.mxu0 %v187
    %2296 = vmatpush1.msra.mxu0 %v186
    %2297 = vmatprep.subr.mxu0 %v183
    %2298 = vmatpush1.msra.mxu0 %v182
    %2299 = vmatprep.subr.mxu0 %v179
    %2300 = vmatpush1.msra.mxu0 %v178
    %2301 = vmatprep.subr.mxu0 %v175
    %2302 = vmatpush1.msra.mxu0 %v174
    %2303 = vmatprep.subr.mxu0 %v171
    %2304 = vmatpush1.msra.mxu0 %v170
    %2305 = vmatprep.subr.mxu0 %v167
    %2306 = vmatpush1.msra.mxu0 %v166
    %2307 = vmatprep.subr.mxu0 %v163
    %2308 = vmatpush1.msra.mxu0 %v162
    %2309 = vmatprep.subr.mxu0 %v159
    %2310 = vmatpush1.msra.mxu0 %v158
    %2311 = vmatprep.subr.mxu0 %v155
    %2312 = vmatpush1.msra.mxu0 %v154
    %2313 = vmatprep.subr.mxu0 %v151
    %2314 = vmatpush1.msra.mxu0 %v150
    %2315 = vmatprep.subr.mxu0 %v147
    %2316 = vmatpush1.msra.mxu0 %v146
    %2317 = vmatprep.subr.mxu0 %v143
    %2318 = vmatpush1.msra.mxu0 %v142
    %2319 = vmatprep.subr.mxu0 %v139
    %2320 = vmatpush1.msra.mxu0 %v138
    %2321 = vmatprep.subr.mxu0 %v135
    %2322 = vmatpush1.msra.mxu0 %v134
    %2323 = vmatprep.subr.mxu0 %v131
    %2324 = vmatpush1.msra.mxu0 %v130
    %2325 = vmatprep.subr.mxu0 0.0
    %2326 = vmatpush2.msra.mxu0 0.0
    %2327 = vmatprep.subr.mxu0 0.0
    %2328 = vmatpush2.msra.mxu0 0.0
    %2329 = vmatprep.subr.mxu0 0.0
    %2330 = vmatpush2.msra.mxu0 0.0
    %2331 = vmatprep.subr.mxu0 0.0
    %2332 = vmatpush2.msra.mxu0 0.0
    %2333 = vmatprep.subr.mxu0 0.0
    %2334 = vmatpush2.msra.mxu0 0.0
    %2335 = vmatprep.subr.mxu0 0.0
    %2336 = vmatpush2.msra.mxu0 0.0
    %2337 = vmatprep.subr.mxu0 0.0
    %2338 = vmatpush2.msra.mxu0 0.0
    %2339 = vmatprep.subr.mxu0 0.0
    %2340 = vmatpush2.msra.mxu0 0.0
    %2341 = vmatprep.subr.mxu0 0.0
    %2342 = vmatpush2.msra.mxu0 0.0
    %2343 = vmatprep.subr.mxu0 0.0
    %2344 = vmatpush2.msra.mxu0 0.0
    %2345 = vmatprep.subr.mxu0 0.0
    %2346 = vmatpush2.msra.mxu0 0.0
    %2347 = vmatprep.subr.mxu0 0.0
    %2348 = vmatpush2.msra.mxu0 0.0
    %2349 = vmatprep.subr.mxu0 0.0
    %2350 = vmatpush2.msra.mxu0 0.0
    %2351 = vmatprep.subr.mxu0 0.0
    %2352 = vmatpush2.msra.mxu0 0.0
    %2353 = vmatprep.subr.mxu0 0.0
    %2354 = vmatpush2.msra.mxu0 0.0
    %2355 = vmatprep.subr.mxu0 0.0
    %2356 = vmatpush2.msra.mxu0 0.0
    %2357 = vmatprep.mubr.f32.mxu0 0.0
    %2358 = vmatmul.mubr.f32.gmra.mxu0 %v1909
    %v2359 = vpop.f32.mrf.mxu0
    %v2360 = vadd.f32 0.0, %v2359
    %v2361 = vpop.f32.mrf.mxu0
    %v2362 = vadd.f32 0.0, %v2361
    %2363 = vdwg.mxu0
    %v2364 = vadd.f32 %v868, %v2289
    %v2365 = vadd.f32 %v870, %v2291
    %v2366 = vadd.f32 %v939, %v2360
    %v2367 = vadd.f32 %v941, %v2362
    %v2368 = vxor.u32 %v2364, 2147483648
    %v2369 = vmul.f32 %v2368, 1.442695
    %v2370 = vpow.pop %v2369
    %v2371 = vadd.f32 %v2370, 1.0
    %v2372 = vrcp.pop %v2371
    %v2373 = vmul.f32 1.0, %v2372
    %v2374 = vxor.u32 %v2365, 2147483648
    %v2375 = vmul.f32 %v2374, 1.442695
    %v2376 = vpow.pop %v2375
    %v2377 = vadd.f32 %v2376, 1.0
    %v2378 = vrcp.pop %v2377
    %v2379 = vmul.f32 1.0, %v2378
    %v2380 = vtanh.pop %v2366
    %v2381 = vxor.u32 %v2367, 2147483648
    %v2382 = vmul.f32 %v2381, 1.442695
    %v2383 = vpow.pop %v2382
    %v2384 = vadd.f32 %v2383, 1.0
    %v2385 = vrcp.pop %v2384
    %v2386 = vmul.f32 1.0, %v2385
    %v2387 = vmul.f32 %v2379, %v1907
    %v2388 = vmul.f32 %v2373, %v2380
    %v2389 = vadd.f32 %v2387, %v2388
    %v2390 = vtanh.pop %v2389
    %v2391 = vmul.f32 %v2386, %v2390
    %2392 = vmatprep.subr.mxu0 %v254
    %2393 = vmatpush1.msra.mxu0 %v253
    %2394 = vmatprep.subr.mxu0 %v250
    %2395 = vmatpush1.msra.mxu0 %v249
    %2396 = vmatprep.subr.mxu0 %v246
    %2397 = vmatpush1.msra.mxu0 %v245
    %2398 = vmatprep.subr.mxu0 %v242
    %2399 = vmatpush1.msra.mxu0 %v241
    %2400 = vmatprep.subr.mxu0 %v238
    %2401 = vmatpush1.msra.mxu0 %v237
    %2402 = vmatprep.subr.mxu0 %v234
    %2403 = vmatpush1.msra.mxu0 %v233
    %2404 = vmatprep.subr.mxu0 %v230
    %2405 = vmatpush1.msra.mxu0 %v229
    %2406 = vmatprep.subr.mxu0 %v226
    %2407 = vmatpush1.msra.mxu0 %v225
    %2408 = vmatprep.subr.mxu0 %v222
    %2409 = vmatpush1.msra.mxu0 %v221
    %2410 = vmatprep.subr.mxu0 %v218
    %2411 = vmatpush1.msra.mxu0 %v217
    %2412 = vmatprep.subr.mxu0 %v214
    %2413 = vmatpush1.msra.mxu0 %v213
    %2414 = vmatprep.subr.mxu0 %v210
    %2415 = vmatpush1.msra.mxu0 %v209
    %2416 = vmatprep.subr.mxu0 %v206
    %2417 = vmatpush1.msra.mxu0 %v205
    %2418 = vmatprep.subr.mxu0 %v202
    %2419 = vmatpush1.msra.mxu0 %v201
    %2420 = vmatprep.subr.mxu0 %v198
    %2421 = vmatpush1.msra.mxu0 %v197
    %2422 = vmatprep.subr.mxu0 %v194
    %2423 = vmatpush1.msra.mxu0 %v193
    %2424 = vmatprep.subr.mxu0 0.0
    %2425 = vmatpush2.msra.mxu0 0.0
    %2426 = vmatprep.subr.mxu0 0.0
    %2427 = vmatpush2.msra.mxu0 0.0
    %2428 = vmatprep.subr.mxu0 0.0
    %2429 = vmatpush2.msra.mxu0 0.0
    %2430 = vmatprep.subr.mxu0 0.0
    %2431 = vmatpush2.msra.mxu0 0.0
    %2432 = vmatprep.subr.mxu0 0.0
    %2433 = vmatpush2.msra.mxu0 0.0
    %2434 = vmatprep.subr.mxu0 0.0
    %2435 = vmatpush2.msra.mxu0 0.0
    %2436 = vmatprep.subr.mxu0 0.0
    %2437 = vmatpush2.msra.mxu0 0.0
    %2438 = vmatprep.subr.mxu0 0.0
    %2439 = vmatpush2.msra.mxu0 0.0
    %2440 = vmatprep.subr.mxu0 0.0
    %2441 = vmatpush2.msra.mxu0 0.0
    %2442 = vmatprep.subr.mxu0 0.0
    %2443 = vmatpush2.msra.mxu0 0.0
    %2444 = vmatprep.subr.mxu0 0.0
    %2445 = vmatpush2.msra.mxu0 0.0
    %2446 = vmatprep.subr.mxu0 0.0
    %2447 = vmatpush2.msra.mxu0 0.0
    %2448 = vmatprep.subr.mxu0 0.0
    %2449 = vmatpush2.msra.mxu0 0.0
    %2450 = vmatprep.subr.mxu0 0.0
    %2451 = vmatpush2.msra.mxu0 0.0
    %2452 = vmatprep.subr.mxu0 0.0
    %2453 = vmatpush2.msra.mxu0 0.0
    %2454 = vmatprep.subr.mxu0 0.0
    %2455 = vmatpush2.msra.mxu0 0.0
    %2456 = vmatprep.mubr.f32.mxu0 0.0
    %2457 = vmatmul.mubr.f32.gmra.mxu0 %v2391
    %v2458 = vpop.f32.mrf.mxu0
    %v2459 = vadd.f32 %v1411, %v2458
    %v2460 = vpop.f32.mrf.mxu0
    %v2461 = vadd.f32 %v1415, %v2460
    %2462 = vdwg.mxu0
    %2463 = vmatprep.subr.mxu0 %v256
    %2464 = vmatpush1.msra.mxu0 %v255
    %2465 = vmatprep.subr.mxu0 %v252
    %2466 = vmatpush1.msra.mxu0 %v251
    %2467 = vmatprep.subr.mxu0 %v248
    %2468 = vmatpush1.msra.mxu0 %v247
    %2469 = vmatprep.subr.mxu0 %v244
    %2470 = vmatpush1.msra.mxu0 %v243
    %2471 = vmatprep.subr.mxu0 %v240
    %2472 = vmatpush1.msra.mxu0 %v239
    %2473 = vmatprep.subr.mxu0 %v236
    %2474 = vmatpush1.msra.mxu0 %v235
    %2475 = vmatprep.subr.mxu0 %v232
    %2476 = vmatpush1.msra.mxu0 %v231
    %2477 = vmatprep.subr.mxu0 %v228
    %2478 = vmatpush1.msra.mxu0 %v227
    %2479 = vmatprep.subr.mxu0 %v224
    %2480 = vmatpush1.msra.mxu0 %v223
    %2481 = vmatprep.subr.mxu0 %v220
    %2482 = vmatpush1.msra.mxu0 %v219
    %2483 = vmatprep.subr.mxu0 %v216
    %2484 = vmatpush1.msra.mxu0 %v215
    %2485 = vmatprep.subr.mxu0 %v212
    %2486 = vmatpush1.msra.mxu0 %v211
    %2487 = vmatprep.subr.mxu0 %v208
    %2488 = vmatpush1.msra.mxu0 %v207
    %2489 = vmatprep.subr.mxu0 %v204
    %2490 = vmatpush1.msra.mxu0 %v203
    %2491 = vmatprep.subr.mxu0 %v200
    %2492 = vmatpush1.msra.mxu0 %v199
    %2493 = vmatprep.subr.mxu0 %v196
    %2494 = vmatpush1.msra.mxu0 %v195
    %2495 = vmatprep.subr.mxu0 0.0
    %2496 = vmatpush2.msra.mxu0 0.0
    %2497 = vmatprep.subr.mxu0 0.0
    %2498 = vmatpush2.msra.mxu0 0.0
    %2499 = vmatprep.subr.mxu0 0.0
    %2500 = vmatpush2.msra.mxu0 0.0
    %2501 = vmatprep.subr.mxu0 0.0
    %2502 = vmatpush2.msra.mxu0 0.0
    %2503 = vmatprep.subr.mxu0 0.0
    %2504 = vmatpush2.msra.mxu0 0.0
    %2505 = vmatprep.subr.mxu0 0.0
    %2506 = vmatpush2.msra.mxu0 0.0
    %2507 = vmatprep.subr.mxu0 0.0
    %2508 = vmatpush2.msra.mxu0 0.0
    %2509 = vmatprep.subr.mxu0 0.0
    %2510 = vmatpush2.msra.mxu0 0.0
    %2511 = vmatprep.subr.mxu0 0.0
    %2512 = vmatpush2.msra.mxu0 0.0
    %2513 = vmatprep.subr.mxu0 0.0
    %2514 = vmatpush2.msra.mxu0 0.0
    %2515 = vmatprep.subr.mxu0 0.0
    %2516 = vmatpush2.msra.mxu0 0.0
    %2517 = vmatprep.subr.mxu0 0.0
    %2518 = vmatpush2.msra.mxu0 0.0
    %2519 = vmatprep.subr.mxu0 0.0
    %2520 = vmatpush2.msra.mxu0 0.0
    %2521 = vmatprep.subr.mxu0 0.0
    %2522 = vmatpush2.msra.mxu0 0.0
    %2523 = vmatprep.subr.mxu0 0.0
    %2524 = vmatpush2.msra.mxu0 0.0
    %2525 = vmatprep.subr.mxu0 0.0
    %2526 = vmatpush2.msra.mxu0 0.0
    %2527 = vmatprep.mubr.f32.mxu0 0.0
    %2528 = vmatmul.mubr.f32.gmra.mxu0 %v2391
    %v2529 = vpop.f32.mrf.mxu0
    %v2530 = vadd.f32 %v1419, %v2529
    %v2531 = vpop.f32.mrf.mxu0
    %v2532 = vadd.f32 %v1423, %v2531
    %2533 = vdwg.mxu0
    %2534 = vmatprep.subr.mxu0 %v318
    %2535 = vmatpush1.msra.mxu0 %v317
    %2536 = vmatprep.subr.mxu0 %v314
    %2537 = vmatpush1.msra.mxu0 %v313
    %2538 = vmatprep.subr.mxu0 %v310
    %2539 = vmatpush1.msra.mxu0 %v309
    %2540 = vmatprep.subr.mxu0 %v306
    %2541 = vmatpush1.msra.mxu0 %v305
    %2542 = vmatprep.subr.mxu0 %v302
    %2543 = vmatpush1.msra.mxu0 %v301
    %2544 = vmatprep.subr.mxu0 %v298
    %2545 = vmatpush1.msra.mxu0 %v297
    %2546 = vmatprep.subr.mxu0 %v294
    %2547 = vmatpush1.msra.mxu0 %v293
    %2548 = vmatprep.subr.mxu0 %v290
    %2549 = vmatpush1.msra.mxu0 %v289
    %2550 = vmatprep.subr.mxu0 %v286
    %2551 = vmatpush1.msra.mxu0 %v285
    %2552 = vmatprep.subr.mxu0 %v282
    %2553 = vmatpush1.msra.mxu0 %v281
    %2554 = vmatprep.subr.mxu0 %v278
    %2555 = vmatpush1.msra.mxu0 %v277
    %2556 = vmatprep.subr.mxu0 %v274
    %2557 = vmatpush1.msra.mxu0 %v273
    %2558 = vmatprep.subr.mxu0 %v270
    %2559 = vmatpush1.msra.mxu0 %v269
    %2560 = vmatprep.subr.mxu0 %v266
    %2561 = vmatpush1.msra.mxu0 %v265
    %2562 = vmatprep.subr.mxu0 %v262
    %2563 = vmatpush1.msra.mxu0 %v261
    %2564 = vmatprep.subr.mxu0 %v258
    %2565 = vmatpush1.msra.mxu0 %v257
    %2566 = vmatprep.subr.mxu0 0.0
    %2567 = vmatpush2.msra.mxu0 0.0
    %2568 = vmatprep.subr.mxu0 0.0
    %2569 = vmatpush2.msra.mxu0 0.0
    %2570 = vmatprep.subr.mxu0 0.0
    %2571 = vmatpush2.msra.mxu0 0.0
    %2572 = vmatprep.subr.mxu0 0.0
    %2573 = vmatpush2.msra.mxu0 0.0
    %2574 = vmatprep.subr.mxu0 0.0
    %2575 = vmatpush2.msra.mxu0 0.0
    %2576 = vmatprep.subr.mxu0 0.0
    %2577 = vmatpush2.msra.mxu0 0.0
    %2578 = vmatprep.subr.mxu0 0.0
    %2579 = vmatpush2.msra.mxu0 0.0
    %2580 = vmatprep.subr.mxu0 0.0
    %2581 = vmatpush2.msra.mxu0 0.0
    %2582 = vmatprep.subr.mxu0 0.0
    %2583 = vmatpush2.msra.mxu0 0.0
    %2584 = vmatprep.subr.mxu0 0.0
    %2585 = vmatpush2.msra.mxu0 0.0
    %2586 = vmatprep.subr.mxu0 0.0
    %2587 = vmatpush2.msra.mxu0 0.0
    %2588 = vmatprep.subr.mxu0 0.0
    %2589 = vmatpush2.msra.mxu0 0.0
    %2590 = vmatprep.subr.mxu0 0.0
    %2591 = vmatpush2.msra.mxu0 0.0
    %2592 = vmatprep.subr.mxu0 0.0
    %2593 = vmatpush2.msra.mxu0 0.0
    %2594 = vmatprep.subr.mxu0 0.0
    %2595 = vmatpush2.msra.mxu0 0.0
    %2596 = vmatprep.subr.mxu0 0.0
    %2597 = vmatpush2.msra.mxu0 0.0
    %2598 = vmatprep.mubr.f32.mxu0 0.0
    %2599 = vmatmul.mubr.f32.gmra.mxu0 %v2221
    %v2600 = vpop.f32.mrf.mxu0
    %v2601 = vadd.f32 0.0, %v2600
    %v2602 = vpop.f32.mrf.mxu0
    %v2603 = vadd.f32 0.0, %v2602
    %2604 = vdwg.mxu0
    %2605 = vmatprep.subr.mxu0 %v320
    %2606 = vmatpush1.msra.mxu0 %v319
    %2607 = vmatprep.subr.mxu0 %v316
    %2608 = vmatpush1.msra.mxu0 %v315
    %2609 = vmatprep.subr.mxu0 %v312
    %2610 = vmatpush1.msra.mxu0 %v311
    %2611 = vmatprep.subr.mxu0 %v308
    %2612 = vmatpush1.msra.mxu0 %v307
    %2613 = vmatprep.subr.mxu0 %v304
    %2614 = vmatpush1.msra.mxu0 %v303
    %2615 = vmatprep.subr.mxu0 %v300
    %2616 = vmatpush1.msra.mxu0 %v299
    %2617 = vmatprep.subr.mxu0 %v296
    %2618 = vmatpush1.msra.mxu0 %v295
    %2619 = vmatprep.subr.mxu0 %v292
    %2620 = vmatpush1.msra.mxu0 %v291
    %2621 = vmatprep.subr.mxu0 %v288
    %2622 = vmatpush1.msra.mxu0 %v287
    %2623 = vmatprep.subr.mxu0 %v284
    %2624 = vmatpush1.msra.mxu0 %v283
    %2625 = vmatprep.subr.mxu0 %v280
    %2626 = vmatpush1.msra.mxu0 %v279
    %2627 = vmatprep.subr.mxu0 %v276
    %2628 = vmatpush1.msra.mxu0 %v275
    %2629 = vmatprep.subr.mxu0 %v272
    %2630 = vmatpush1.msra.mxu0 %v271
    %2631 = vmatprep.subr.mxu0 %v268
    %2632 = vmatpush1.msra.mxu0 %v267
    %2633 = vmatprep.subr.mxu0 %v264
    %2634 = vmatpush1.msra.mxu0 %v263
    %2635 = vmatprep.subr.mxu0 %v260
    %2636 = vmatpush1.msra.mxu0 %v259
    %2637 = vmatprep.subr.mxu0 0.0
    %2638 = vmatpush2.msra.mxu0 0.0
    %2639 = vmatprep.subr.mxu0 0.0
    %2640 = vmatpush2.msra.mxu0 0.0
    %2641 = vmatprep.subr.mxu0 0.0
    %2642 = vmatpush2.msra.mxu0 0.0
    %2643 = vmatprep.subr.mxu0 0.0
    %2644 = vmatpush2.msra.mxu0 0.0
    %2645 = vmatprep.subr.mxu0 0.0
    %2646 = vmatpush2.msra.mxu0 0.0
    %2647 = vmatprep.subr.mxu0 0.0
    %2648 = vmatpush2.msra.mxu0 0.0
    %2649 = vmatprep.subr.mxu0 0.0
    %2650 = vmatpush2.msra.mxu0 0.0
    %2651 = vmatprep.subr.mxu0 0.0
    %2652 = vmatpush2.msra.mxu0 0.0
    %2653 = vmatprep.subr.mxu0 0.0
    %2654 = vmatpush2.msra.mxu0 0.0
    %2655 = vmatprep.subr.mxu0 0.0
    %2656 = vmatpush2.msra.mxu0 0.0
    %2657 = vmatprep.subr.mxu0 0.0
    %2658 = vmatpush2.msra.mxu0 0.0
    %2659 = vmatprep.subr.mxu0 0.0
    %2660 = vmatpush2.msra.mxu0 0.0
    %2661 = vmatprep.subr.mxu0 0.0
    %2662 = vmatpush2.msra.mxu0 0.0
    %2663 = vmatprep.subr.mxu0 0.0
    %2664 = vmatpush2.msra.mxu0 0.0
    %2665 = vmatprep.subr.mxu0 0.0
    %2666 = vmatpush2.msra.mxu0 0.0
    %2667 = vmatprep.subr.mxu0 0.0
    %2668 = vmatpush2.msra.mxu0 0.0
    %2669 = vmatprep.mubr.f32.mxu0 0.0
    %2670 = vmatmul.mubr.f32.gmra.mxu0 %v2221
    %v2671 = vpop.f32.mrf.mxu0
    %v2672 = vadd.f32 0.0, %v2671
    %v2673 = vpop.f32.mrf.mxu0
    %v2674 = vadd.f32 0.0, %v2673
    %2675 = vdwg.mxu0
    %v2676 = vadd.f32 %v2459, %v2601
    %v2677 = vadd.f32 %v2461, %v2603
    %v2678 = vadd.f32 %v2530, %v2672
    %v2679 = vadd.f32 %v2532, %v2674
    %v2680 = vxor.u32 %v2676, 2147483648
    %v2681 = vmul.f32 %v2680, 1.442695
    %v2682 = vpow.pop %v2681
    %v2683 = vadd.f32 %v2682, 1.0
    %v2684 = vrcp.pop %v2683
    %v2685 = vmul.f32 1.0, %v2684
    %v2686 = vxor.u32 %v2677, 2147483648
    %v2687 = vmul.f32 %v2686, 1.442695
    %v2688 = vpow.pop %v2687
    %v2689 = vadd.f32 %v2688, 1.0
    %v2690 = vrcp.pop %v2689
    %v2691 = vmul.f32 1.0, %v2690
    %v2692 = vtanh.pop %v2678
    %v2693 = vxor.u32 %v2679, 2147483648
    %v2694 = vmul.f32 %v2693, 1.442695
    %v2695 = vpow.pop %v2694
    %v2696 = vadd.f32 %v2695, 1.0
    %v2697 = vrcp.pop %v2696
    %v2698 = vmul.f32 1.0, %v2697
    %v2699 = vmul.f32 %v2691, %v2219
    %v2700 = vmul.f32 %v2685, %v2692
    %v2701 = vadd.f32 %v2699, %v2700
    %v2702 = vtanh.pop %v2701
    %v2703 = vmul.f32 %v2698, %v2702
    %2704 = vmatprep.subr.mxu0 %v189
    %2705 = vmatpush1.msra.mxu0 %v188
    %2706 = vmatprep.subr.mxu0 %v185
    %2707 = vmatpush1.msra.mxu0 %v184
    %2708 = vmatprep.subr.mxu0 %v181
    %2709 = vmatpush1.msra.mxu0 %v180
    %2710 = vmatprep.subr.mxu0 %v177
    %2711 = vmatpush1.msra.mxu0 %v176
    %2712 = vmatprep.subr.mxu0 %v173
    %2713 = vmatpush1.msra.mxu0 %v172
    %2714 = vmatprep.subr.mxu0 %v169
    %2715 = vmatpush1.msra.mxu0 %v168
    %2716 = vmatprep.subr.mxu0 %v165
    %2717 = vmatpush1.msra.mxu0 %v164
    %2718 = vmatprep.subr.mxu0 %v161
    %2719 = vmatpush1.msra.mxu0 %v160
    %2720 = vmatprep.subr.mxu0 %v157
    %2721 = vmatpush1.msra.mxu0 %v156
    %2722 = vmatprep.subr.mxu0 %v153
    %2723 = vmatpush1.msra.mxu0 %v152
    %2724 = vmatprep.subr.mxu0 %v149
    %2725 = vmatpush1.msra.mxu0 %v148
    %2726 = vmatprep.subr.mxu0 %v145
    %2727 = vmatpush1.msra.mxu0 %v144
    %2728 = vmatprep.subr.mxu0 %v141
    %2729 = vmatpush1.msra.mxu0 %v140
    %2730 = vmatprep.subr.mxu0 %v137
    %2731 = vmatpush1.msra.mxu0 %v136
    %2732 = vmatprep.subr.mxu0 %v133
    %2733 = vmatpush1.msra.mxu0 %v132
    %2734 = vmatprep.subr.mxu0 %v129
    %2735 = vmatpush1.msra.mxu0 %v128
    %2736 = vmatprep.subr.mxu0 0.0
    %2737 = vmatpush2.msra.mxu0 0.0
    %2738 = vmatprep.subr.mxu0 0.0
    %2739 = vmatpush2.msra.mxu0 0.0
    %2740 = vmatprep.subr.mxu0 0.0
    %2741 = vmatpush2.msra.mxu0 0.0
    %2742 = vmatprep.subr.mxu0 0.0
    %2743 = vmatpush2.msra.mxu0 0.0
    %2744 = vmatprep.subr.mxu0 0.0
    %2745 = vmatpush2.msra.mxu0 0.0
    %2746 = vmatprep.subr.mxu0 0.0
    %2747 = vmatpush2.msra.mxu0 0.0
    %2748 = vmatprep.subr.mxu0 0.0
    %2749 = vmatpush2.msra.mxu0 0.0
    %2750 = vmatprep.subr.mxu0 0.0
    %2751 = vmatpush2.msra.mxu0 0.0
    %2752 = vmatprep.subr.mxu0 0.0
    %2753 = vmatpush2.msra.mxu0 0.0
    %2754 = vmatprep.subr.mxu0 0.0
    %2755 = vmatpush2.msra.mxu0 0.0
    %2756 = vmatprep.subr.mxu0 0.0
    %2757 = vmatpush2.msra.mxu0 0.0
    %2758 = vmatprep.subr.mxu0 0.0
    %2759 = vmatpush2.msra.mxu0 0.0
    %2760 = vmatprep.subr.mxu0 0.0
    %2761 = vmatpush2.msra.mxu0 0.0
    %2762 = vmatprep.subr.mxu0 0.0
    %2763 = vmatpush2.msra.mxu0 0.0
    %2764 = vmatprep.subr.mxu0 0.0
    %2765 = vmatpush2.msra.mxu0 0.0
    %2766 = vmatprep.subr.mxu0 0.0
    %2767 = vmatpush2.msra.mxu0 0.0
    %2768 = vmatprep.mubr.f32.mxu0 0.0
    %2769 = vmatmul.mubr.f32.gmra.mxu0 %v2391
    %v2770 = vpop.f32.mrf.mxu0
    %v2771 = vadd.f32 0.0, %v2770
    %v2772 = vpop.f32.mrf.mxu0
    %v2773 = vadd.f32 0.0, %v2772
    %2774 = vdwg.mxu0
    %2775 = vmatprep.subr.mxu0 %v191
    %2776 = vmatpush1.msra.mxu0 %v190
    %2777 = vmatprep.subr.mxu0 %v187
    %2778 = vmatpush1.msra.mxu0 %v186
    %2779 = vmatprep.subr.mxu0 %v183
    %2780 = vmatpush1.msra.mxu0 %v182
    %2781 = vmatprep.subr.mxu0 %v179
    %2782 = vmatpush1.msra.mxu0 %v178
    %2783 = vmatprep.subr.mxu0 %v175
    %2784 = vmatpush1.msra.mxu0 %v174
    %2785 = vmatprep.subr.mxu0 %v171
    %2786 = vmatpush1.msra.mxu0 %v170
    %2787 = vmatprep.subr.mxu0 %v167
    %2788 = vmatpush1.msra.mxu0 %v166
    %2789 = vmatprep.subr.mxu0 %v163
    %2790 = vmatpush1.msra.mxu0 %v162
    %2791 = vmatprep.subr.mxu0 %v159
    %2792 = vmatpush1.msra.mxu0 %v158
    %2793 = vmatprep.subr.mxu0 %v155
    %2794 = vmatpush1.msra.mxu0 %v154
    %2795 = vmatprep.subr.mxu0 %v151
    %2796 = vmatpush1.msra.mxu0 %v150
    %2797 = vmatprep.subr.mxu0 %v147
    %2798 = vmatpush1.msra.mxu0 %v146
    %2799 = vmatprep.subr.mxu0 %v143
    %2800 = vmatpush1.msra.mxu0 %v142
    %2801 = vmatprep.subr.mxu0 %v139
    %2802 = vmatpush1.msra.mxu0 %v138
    %2803 = vmatprep.subr.mxu0 %v135
    %2804 = vmatpush1.msra.mxu0 %v134
    %2805 = vmatprep.subr.mxu0 %v131
    %2806 = vmatpush1.msra.mxu0 %v130
    %2807 = vmatprep.subr.mxu0 0.0
    %2808 = vmatpush2.msra.mxu0 0.0
    %2809 = vmatprep.subr.mxu0 0.0
    %2810 = vmatpush2.msra.mxu0 0.0
    %2811 = vmatprep.subr.mxu0 0.0
    %2812 = vmatpush2.msra.mxu0 0.0
    %2813 = vmatprep.subr.mxu0 0.0
    %2814 = vmatpush2.msra.mxu0 0.0
    %2815 = vmatprep.subr.mxu0 0.0
    %2816 = vmatpush2.msra.mxu0 0.0
    %2817 = vmatprep.subr.mxu0 0.0
    %2818 = vmatpush2.msra.mxu0 0.0
    %2819 = vmatprep.subr.mxu0 0.0
    %2820 = vmatpush2.msra.mxu0 0.0
    %2821 = vmatprep.subr.mxu0 0.0
    %2822 = vmatpush2.msra.mxu0 0.0
    %2823 = vmatprep.subr.mxu0 0.0
    %2824 = vmatpush2.msra.mxu0 0.0
    %2825 = vmatprep.subr.mxu0 0.0
    %2826 = vmatpush2.msra.mxu0 0.0
    %2827 = vmatprep.subr.mxu0 0.0
    %2828 = vmatpush2.msra.mxu0 0.0
    %2829 = vmatprep.subr.mxu0 0.0
    %2830 = vmatpush2.msra.mxu0 0.0
    %2831 = vmatprep.subr.mxu0 0.0
    %2832 = vmatpush2.msra.mxu0 0.0
    %2833 = vmatprep.subr.mxu0 0.0
    %2834 = vmatpush2.msra.mxu0 0.0
    %2835 = vmatprep.subr.mxu0 0.0
    %2836 = vmatpush2.msra.mxu0 0.0
    %2837 = vmatprep.subr.mxu0 0.0
    %2838 = vmatpush2.msra.mxu0 0.0
    %2839 = vmatprep.mubr.f32.mxu0 0.0
    %2840 = vmatmul.mubr.f32.gmra.mxu0 %v2391
    %v2841 = vpop.f32.mrf.mxu0
    %v2842 = vadd.f32 0.0, %v2841
    %v2843 = vpop.f32.mrf.mxu0
    %v2844 = vadd.f32 0.0, %v2843
    %2845 = vdwg.mxu0
    %v2846 = vadd.f32 %v1015, %v2771
    %v2847 = vadd.f32 %v1017, %v2773
    %v2848 = vadd.f32 %v1086, %v2842
    %v2849 = vadd.f32 %v1088, %v2844
    %v2850 = vxor.u32 %v2846, 2147483648
    %v2851 = vmul.f32 %v2850, 1.442695
    %v2852 = vpow.pop %v2851
    %v2853 = vadd.f32 %v2852, 1.0
    %v2854 = vrcp.pop %v2853
    %v2855 = vmul.f32 1.0, %v2854
    %v2856 = vxor.u32 %v2847, 2147483648
    %v2857 = vmul.f32 %v2856, 1.442695
    %v2858 = vpow.pop %v2857
    %v2859 = vadd.f32 %v2858, 1.0
    %v2860 = vrcp.pop %v2859
    %v2861 = vmul.f32 1.0, %v2860
    %v2862 = vtanh.pop %v2848
    %v2863 = vxor.u32 %v2849, 2147483648
    %v2864 = vmul.f32 %v2863, 1.442695
    %v2865 = vpow.pop %v2864
    %v2866 = vadd.f32 %v2865, 1.0
    %v2867 = vrcp.pop %v2866
    %v2868 = vmul.f32 1.0, %v2867
    %v2869 = vmul.f32 %v2861, %v2389
    %v2870 = vmul.f32 %v2855, %v2862
    %v2871 = vadd.f32 %v2869, %v2870
    %v2872 = vtanh.pop %v2871
    %v2873 = vmul.f32 %v2868, %v2872
    %2874 = vmatprep.subr.mxu0 %v254
    %2875 = vmatpush1.msra.mxu0 %v253
    %2876 = vmatprep.subr.mxu0 %v250
    %2877 = vmatpush1.msra.mxu0 %v249
    %2878 = vmatprep.subr.mxu0 %v246
    %2879 = vmatpush1.msra.mxu0 %v245
    %2880 = vmatprep.subr.mxu0 %v242
    %2881 = vmatpush1.msra.mxu0 %v241
    %2882 = vmatprep.subr.mxu0 %v238
    %2883 = vmatpush1.msra.mxu0 %v237
    %2884 = vmatprep.subr.mxu0 %v234
    %2885 = vmatpush1.msra.mxu0 %v233
    %2886 = vmatprep.subr.mxu0 %v230
    %2887 = vmatpush1.msra.mxu0 %v229
    %2888 = vmatprep.subr.mxu0 %v226
    %2889 = vmatpush1.msra.mxu0 %v225
    %2890 = vmatprep.subr.mxu0 %v222
    %2891 = vmatpush1.msra.mxu0 %v221
    %2892 = vmatprep.subr.mxu0 %v218
    %2893 = vmatpush1.msra.mxu0 %v217
    %2894 = vmatprep.subr.mxu0 %v214
    %2895 = vmatpush1.msra.mxu0 %v213
    %2896 = vmatprep.subr.mxu0 %v210
    %2897 = vmatpush1.msra.mxu0 %v209
    %2898 = vmatprep.subr.mxu0 %v206
    %2899 = vmatpush1.msra.mxu0 %v205
    %2900 = vmatprep.subr.mxu0 %v202
    %2901 = vmatpush1.msra.mxu0 %v201
    %2902 = vmatprep.subr.mxu0 %v198
    %2903 = vmatpush1.msra.mxu0 %v197
    %2904 = vmatprep.subr.mxu0 %v194
    %2905 = vmatpush1.msra.mxu0 %v193
    %2906 = vmatprep.subr.mxu0 0.0
    %2907 = vmatpush2.msra.mxu0 0.0
    %2908 = vmatprep.subr.mxu0 0.0
    %2909 = vmatpush2.msra.mxu0 0.0
    %2910 = vmatprep.subr.mxu0 0.0
    %2911 = vmatpush2.msra.mxu0 0.0
    %2912 = vmatprep.subr.mxu0 0.0
    %2913 = vmatpush2.msra.mxu0 0.0
    %2914 = vmatprep.subr.mxu0 0.0
    %2915 = vmatpush2.msra.mxu0 0.0
    %2916 = vmatprep.subr.mxu0 0.0
    %2917 = vmatpush2.msra.mxu0 0.0
    %2918 = vmatprep.subr.mxu0 0.0
    %2919 = vmatpush2.msra.mxu0 0.0
    %2920 = vmatprep.subr.mxu0 0.0
    %2921 = vmatpush2.msra.mxu0 0.0
    %2922 = vmatprep.subr.mxu0 0.0
    %2923 = vmatpush2.msra.mxu0 0.0
    %2924 = vmatprep.subr.mxu0 0.0
    %2925 = vmatpush2.msra.mxu0 0.0
    %2926 = vmatprep.subr.mxu0 0.0
    %2927 = vmatpush2.msra.mxu0 0.0
    %2928 = vmatprep.subr.mxu0 0.0
    %2929 = vmatpush2.msra.mxu0 0.0
    %2930 = vmatprep.subr.mxu0 0.0
    %2931 = vmatpush2.msra.mxu0 0.0
    %2932 = vmatprep.subr.mxu0 0.0
    %2933 = vmatpush2.msra.mxu0 0.0
    %2934 = vmatprep.subr.mxu0 0.0
    %2935 = vmatpush2.msra.mxu0 0.0
    %2936 = vmatprep.subr.mxu0 0.0
    %2937 = vmatpush2.msra.mxu0 0.0
    %2938 = vmatprep.mubr.f32.mxu0 0.0
    %2939 = vmatmul.mubr.f32.gmra.mxu0 %v2873
    %v2940 = vpop.f32.mrf.mxu0
    %v2941 = vadd.f32 %v1411, %v2940
    %v2942 = vpop.f32.mrf.mxu0
    %v2943 = vadd.f32 %v1415, %v2942
    %2944 = vdwg.mxu0
    %2945 = vmatprep.subr.mxu0 %v256
    %2946 = vmatpush1.msra.mxu0 %v255
    %2947 = vmatprep.subr.mxu0 %v252
    %2948 = vmatpush1.msra.mxu0 %v251
    %2949 = vmatprep.subr.mxu0 %v248
    %2950 = vmatpush1.msra.mxu0 %v247
    %2951 = vmatprep.subr.mxu0 %v244
    %2952 = vmatpush1.msra.mxu0 %v243
    %2953 = vmatprep.subr.mxu0 %v240
    %2954 = vmatpush1.msra.mxu0 %v239
    %2955 = vmatprep.subr.mxu0 %v236
    %2956 = vmatpush1.msra.mxu0 %v235
    %2957 = vmatprep.subr.mxu0 %v232
    %2958 = vmatpush1.msra.mxu0 %v231
    %2959 = vmatprep.subr.mxu0 %v228
    %2960 = vmatpush1.msra.mxu0 %v227
    %2961 = vmatprep.subr.mxu0 %v224
    %2962 = vmatpush1.msra.mxu0 %v223
    %2963 = vmatprep.subr.mxu0 %v220
    %2964 = vmatpush1.msra.mxu0 %v219
    %2965 = vmatprep.subr.mxu0 %v216
    %2966 = vmatpush1.msra.mxu0 %v215
    %2967 = vmatprep.subr.mxu0 %v212
    %2968 = vmatpush1.msra.mxu0 %v211
    %2969 = vmatprep.subr.mxu0 %v208
    %2970 = vmatpush1.msra.mxu0 %v207
    %2971 = vmatprep.subr.mxu0 %v204
    %2972 = vmatpush1.msra.mxu0 %v203
    %2973 = vmatprep.subr.mxu0 %v200
    %2974 = vmatpush1.msra.mxu0 %v199
    %2975 = vmatprep.subr.mxu0 %v196
    %2976 = vmatpush1.msra.mxu0 %v195
    %2977 = vmatprep.subr.mxu0 0.0
    %2978 = vmatpush2.msra.mxu0 0.0
    %2979 = vmatprep.subr.mxu0 0.0
    %2980 = vmatpush2.msra.mxu0 0.0
    %2981 = vmatprep.subr.mxu0 0.0
    %2982 = vmatpush2.msra.mxu0 0.0
    %2983 = vmatprep.subr.mxu0 0.0
    %2984 = vmatpush2.msra.mxu0 0.0
    %2985 = vmatprep.subr.mxu0 0.0
    %2986 = vmatpush2.msra.mxu0 0.0
    %2987 = vmatprep.subr.mxu0 0.0
    %2988 = vmatpush2.msra.mxu0 0.0
    %2989 = vmatprep.subr.mxu0 0.0
    %2990 = vmatpush2.msra.mxu0 0.0
    %2991 = vmatprep.subr.mxu0 0.0
    %2992 = vmatpush2.msra.mxu0 0.0
    %2993 = vmatprep.subr.mxu0 0.0
    %2994 = vmatpush2.msra.mxu0 0.0
    %2995 = vmatprep.subr.mxu0 0.0
    %2996 = vmatpush2.msra.mxu0 0.0
    %2997 = vmatprep.subr.mxu0 0.0
    %2998 = vmatpush2.msra.mxu0 0.0
    %2999 = vmatprep.subr.mxu0 0.0
    %3000 = vmatpush2.msra.mxu0 0.0
    %3001 = vmatprep.subr.mxu0 0.0
    %3002 = vmatpush2.msra.mxu0 0.0
    %3003 = vmatprep.subr.mxu0 0.0
    %3004 = vmatpush2.msra.mxu0 0.0
    %3005 = vmatprep.subr.mxu0 0.0
    %3006 = vmatpush2.msra.mxu0 0.0
    %3007 = vmatprep.subr.mxu0 0.0
    %3008 = vmatpush2.msra.mxu0 0.0
    %3009 = vmatprep.mubr.f32.mxu0 0.0
    %3010 = vmatmul.mubr.f32.gmra.mxu0 %v2873
    %v3011 = vpop.f32.mrf.mxu0
    %v3012 = vadd.f32 %v1419, %v3011
    %v3013 = vpop.f32.mrf.mxu0
    %v3014 = vadd.f32 %v1423, %v3013
    %3015 = vdwg.mxu0
    %3016 = vmatprep.subr.mxu0 %v318
    %3017 = vmatpush1.msra.mxu0 %v317
    %3018 = vmatprep.subr.mxu0 %v314
    %3019 = vmatpush1.msra.mxu0 %v313
    %3020 = vmatprep.subr.mxu0 %v310
    %3021 = vmatpush1.msra.mxu0 %v309
    %3022 = vmatprep.subr.mxu0 %v306
    %3023 = vmatpush1.msra.mxu0 %v305
    %3024 = vmatprep.subr.mxu0 %v302
    %3025 = vmatpush1.msra.mxu0 %v301
    %3026 = vmatprep.subr.mxu0 %v298
    %3027 = vmatpush1.msra.mxu0 %v297
    %3028 = vmatprep.subr.mxu0 %v294
    %3029 = vmatpush1.msra.mxu0 %v293
    %3030 = vmatprep.subr.mxu0 %v290
    %3031 = vmatpush1.msra.mxu0 %v289
    %3032 = vmatprep.subr.mxu0 %v286
    %3033 = vmatpush1.msra.mxu0 %v285
    %3034 = vmatprep.subr.mxu0 %v282
    %3035 = vmatpush1.msra.mxu0 %v281
    %3036 = vmatprep.subr.mxu0 %v278
    %3037 = vmatpush1.msra.mxu0 %v277
    %3038 = vmatprep.subr.mxu0 %v274
    %3039 = vmatpush1.msra.mxu0 %v273
    %3040 = vmatprep.subr.mxu0 %v270
    %3041 = vmatpush1.msra.mxu0 %v269
    %3042 = vmatprep.subr.mxu0 %v266
    %3043 = vmatpush1.msra.mxu0 %v265
    %3044 = vmatprep.subr.mxu0 %v262
    %3045 = vmatpush1.msra.mxu0 %v261
    %3046 = vmatprep.subr.mxu0 %v258
    %3047 = vmatpush1.msra.mxu0 %v257
    %3048 = vmatprep.subr.mxu0 0.0
    %3049 = vmatpush2.msra.mxu0 0.0
    %3050 = vmatprep.subr.mxu0 0.0
    %3051 = vmatpush2.msra.mxu0 0.0
    %3052 = vmatprep.subr.mxu0 0.0
    %3053 = vmatpush2.msra.mxu0 0.0
    %3054 = vmatprep.subr.mxu0 0.0
    %3055 = vmatpush2.msra.mxu0 0.0
    %3056 = vmatprep.subr.mxu0 0.0
    %3057 = vmatpush2.msra.mxu0 0.0
    %3058 = vmatprep.subr.mxu0 0.0
    %3059 = vmatpush2.msra.mxu0 0.0
    %3060 = vmatprep.subr.mxu0 0.0
    %3061 = vmatpush2.msra.mxu0 0.0
    %3062 = vmatprep.subr.mxu0 0.0
    %3063 = vmatpush2.msra.mxu0 0.0
    %3064 = vmatprep.subr.mxu0 0.0
    %3065 = vmatpush2.msra.mxu0 0.0
    %3066 = vmatprep.subr.mxu0 0.0
    %3067 = vmatpush2.msra.mxu0 0.0
    %3068 = vmatprep.subr.mxu0 0.0
    %3069 = vmatpush2.msra.mxu0 0.0
    %3070 = vmatprep.subr.mxu0 0.0
    %3071 = vmatpush2.msra.mxu0 0.0
    %3072 = vmatprep.subr.mxu0 0.0
    %3073 = vmatpush2.msra.mxu0 0.0
    %3074 = vmatprep.subr.mxu0 0.0
    %3075 = vmatpush2.msra.mxu0 0.0
    %3076 = vmatprep.subr.mxu0 0.0
    %3077 = vmatpush2.msra.mxu0 0.0
    %3078 = vmatprep.subr.mxu0 0.0
    %3079 = vmatpush2.msra.mxu0 0.0
    %3080 = vmatprep.mubr.f32.mxu0 0.0
    %3081 = vmatmul.mubr.f32.gmra.mxu0 %v2703
    %v3082 = vpop.f32.mrf.mxu0
    %v3083 = vadd.f32 0.0, %v3082
    %v3084 = vpop.f32.mrf.mxu0
    %v3085 = vadd.f32 0.0, %v3084
    %3086 = vdwg.mxu0
    %3087 = vmatprep.subr.mxu0 %v320
    %3088 = vmatpush1.msra.mxu0 %v319
    %3089 = vmatprep.subr.mxu0 %v316
    %3090 = vmatpush1.msra.mxu0 %v315
    %3091 = vmatprep.subr.mxu0 %v312
    %3092 = vmatpush1.msra.mxu0 %v311
    %3093 = vmatprep.subr.mxu0 %v308
    %3094 = vmatpush1.msra.mxu0 %v307
    %3095 = vmatprep.subr.mxu0 %v304
    %3096 = vmatpush1.msra.mxu0 %v303
    %3097 = vmatprep.subr.mxu0 %v300
    %3098 = vmatpush1.msra.mxu0 %v299
    %3099 = vmatprep.subr.mxu0 %v296
    %3100 = vmatpush1.msra.mxu0 %v295
    %3101 = vmatprep.subr.mxu0 %v292
    %3102 = vmatpush1.msra.mxu0 %v291
    %3103 = vmatprep.subr.mxu0 %v288
    %3104 = vmatpush1.msra.mxu0 %v287
    %3105 = vmatprep.subr.mxu0 %v284
    %3106 = vmatpush1.msra.mxu0 %v283
    %3107 = vmatprep.subr.mxu0 %v280
    %3108 = vmatpush1.msra.mxu0 %v279
    %3109 = vmatprep.subr.mxu0 %v276
    %3110 = vmatpush1.msra.mxu0 %v275
    %3111 = vmatprep.subr.mxu0 %v272
    %3112 = vmatpush1.msra.mxu0 %v271
    %3113 = vmatprep.subr.mxu0 %v268
    %3114 = vmatpush1.msra.mxu0 %v267
    %3115 = vmatprep.subr.mxu0 %v264
    %3116 = vmatpush1.msra.mxu0 %v263
    %3117 = vmatprep.subr.mxu0 %v260
    %3118 = vmatpush1.msra.mxu0 %v259
    %3119 = vmatprep.subr.mxu0 0.0
    %3120 = vmatpush2.msra.mxu0 0.0
    %3121 = vmatprep.subr.mxu0 0.0
    %3122 = vmatpush2.msra.mxu0 0.0
    %3123 = vmatprep.subr.mxu0 0.0
    %3124 = vmatpush2.msra.mxu0 0.0
    %3125 = vmatprep.subr.mxu0 0.0
    %3126 = vmatpush2.msra.mxu0 0.0
    %3127 = vmatprep.subr.mxu0 0.0
    %3128 = vmatpush2.msra.mxu0 0.0
    %3129 = vmatprep.subr.mxu0 0.0
    %3130 = vmatpush2.msra.mxu0 0.0
    %3131 = vmatprep.subr.mxu0 0.0
    %3132 = vmatpush2.msra.mxu0 0.0
    %3133 = vmatprep.subr.mxu0 0.0
    %3134 = vmatpush2.msra.mxu0 0.0
    %3135 = vmatprep.subr.mxu0 0.0
    %3136 = vmatpush2.msra.mxu0 0.0
    %3137 = vmatprep.subr.mxu0 0.0
    %3138 = vmatpush2.msra.mxu0 0.0
    %3139 = vmatprep.subr.mxu0 0.0
    %3140 = vmatpush2.msra.mxu0 0.0
    %3141 = vmatprep.subr.mxu0 0.0
    %3142 = vmatpush2.msra.mxu0 0.0
    %3143 = vmatprep.subr.mxu0 0.0
    %3144 = vmatpush2.msra.mxu0 0.0
    %3145 = vmatprep.subr.mxu0 0.0
    %3146 = vmatpush2.msra.mxu0 0.0
    %3147 = vmatprep.subr.mxu0 0.0
    %3148 = vmatpush2.msra.mxu0 0.0
    %3149 = vmatprep.subr.mxu0 0.0
    %3150 = vmatpush2.msra.mxu0 0.0
    %3151 = vmatprep.mubr.f32.mxu0 0.0
    %3152 = vmatmul.mubr.f32.gmra.mxu0 %v2703
    %v3153 = vpop.f32.mrf.mxu0
    %v3154 = vadd.f32 0.0, %v3153
    %v3155 = vpop.f32.mrf.mxu0
    %v3156 = vadd.f32 0.0, %v3155
    %3157 = vdwg.mxu0
    %v3158 = vadd.f32 %v2941, %v3083
    %v3159 = vadd.f32 %v2943, %v3085
    %v3160 = vadd.f32 %v3012, %v3154
    %v3161 = vadd.f32 %v3014, %v3156
    %v3162 = vxor.u32 %v3158, 2147483648
    %v3163 = vmul.f32 %v3162, 1.442695
    %v3164 = vpow.pop %v3163
    %v3165 = vadd.f32 %v3164, 1.0
    %v3166 = vrcp.pop %v3165
    %v3167 = vmul.f32 1.0, %v3166
    %v3168 = vxor.u32 %v3159, 2147483648
    %v3169 = vmul.f32 %v3168, 1.442695
    %v3170 = vpow.pop %v3169
    %v3171 = vadd.f32 %v3170, 1.0
    %v3172 = vrcp.pop %v3171
    %v3173 = vmul.f32 1.0, %v3172
    %v3174 = vtanh.pop %v3160
    %v3175 = vxor.u32 %v3161, 2147483648
    %v3176 = vmul.f32 %v3175, 1.442695
    %v3177 = vpow.pop %v3176
    %v3178 = vadd.f32 %v3177, 1.0
    %v3179 = vrcp.pop %v3178
    %v3180 = vmul.f32 1.0, %v3179
    %v3181 = vmul.f32 %v3173, %v2701
    %v3182 = vmul.f32 %v3167, %v3174
    %v3183 = vadd.f32 %v3181, %v3182
    %v3184 = vtanh.pop %v3183
    %v3185 = vmul.f32 %v3180, %v3184
    %3186 = vmatprep.subr.mxu0 %v189
    %3187 = vmatpush1.msra.mxu0 %v188
    %3188 = vmatprep.subr.mxu0 %v185
    %3189 = vmatpush1.msra.mxu0 %v184
    %3190 = vmatprep.subr.mxu0 %v181
    %3191 = vmatpush1.msra.mxu0 %v180
    %3192 = vmatprep.subr.mxu0 %v177
    %3193 = vmatpush1.msra.mxu0 %v176
    %3194 = vmatprep.subr.mxu0 %v173
    %3195 = vmatpush1.msra.mxu0 %v172
    %3196 = vmatprep.subr.mxu0 %v169
    %3197 = vmatpush1.msra.mxu0 %v168
    %3198 = vmatprep.subr.mxu0 %v165
    %3199 = vmatpush1.msra.mxu0 %v164
    %3200 = vmatprep.subr.mxu0 %v161
    %3201 = vmatpush1.msra.mxu0 %v160
    %3202 = vmatprep.subr.mxu0 %v157
    %3203 = vmatpush1.msra.mxu0 %v156
    %3204 = vmatprep.subr.mxu0 %v153
    %3205 = vmatpush1.msra.mxu0 %v152
    %3206 = vmatprep.subr.mxu0 %v149
    %3207 = vmatpush1.msra.mxu0 %v148
    %3208 = vmatprep.subr.mxu0 %v145
    %3209 = vmatpush1.msra.mxu0 %v144
    %3210 = vmatprep.subr.mxu0 %v141
    %3211 = vmatpush1.msra.mxu0 %v140
    %3212 = vmatprep.subr.mxu0 %v137
    %3213 = vmatpush1.msra.mxu0 %v136
    %3214 = vmatprep.subr.mxu0 %v133
    %3215 = vmatpush1.msra.mxu0 %v132
    %3216 = vmatprep.subr.mxu0 %v129
    %3217 = vmatpush1.msra.mxu0 %v128
    %3218 = vmatprep.subr.mxu0 0.0
    %3219 = vmatpush2.msra.mxu0 0.0
    %3220 = vmatprep.subr.mxu0 0.0
    %3221 = vmatpush2.msra.mxu0 0.0
    %3222 = vmatprep.subr.mxu0 0.0
    %3223 = vmatpush2.msra.mxu0 0.0
    %3224 = vmatprep.subr.mxu0 0.0
    %3225 = vmatpush2.msra.mxu0 0.0
    %3226 = vmatprep.subr.mxu0 0.0
    %3227 = vmatpush2.msra.mxu0 0.0
    %3228 = vmatprep.subr.mxu0 0.0
    %3229 = vmatpush2.msra.mxu0 0.0
    %3230 = vmatprep.subr.mxu0 0.0
    %3231 = vmatpush2.msra.mxu0 0.0
    %3232 = vmatprep.subr.mxu0 0.0
    %3233 = vmatpush2.msra.mxu0 0.0
    %3234 = vmatprep.subr.mxu0 0.0
    %3235 = vmatpush2.msra.mxu0 0.0
    %3236 = vmatprep.subr.mxu0 0.0
    %3237 = vmatpush2.msra.mxu0 0.0
    %3238 = vmatprep.subr.mxu0 0.0
    %3239 = vmatpush2.msra.mxu0 0.0
    %3240 = vmatprep.subr.mxu0 0.0
    %3241 = vmatpush2.msra.mxu0 0.0
    %3242 = vmatprep.subr.mxu0 0.0
    %3243 = vmatpush2.msra.mxu0 0.0
    %3244 = vmatprep.subr.mxu0 0.0
    %3245 = vmatpush2.msra.mxu0 0.0
    %3246 = vmatprep.subr.mxu0 0.0
    %3247 = vmatpush2.msra.mxu0 0.0
    %3248 = vmatprep.subr.mxu0 0.0
    %3249 = vmatpush2.msra.mxu0 0.0
    %3250 = vmatprep.mubr.f32.mxu0 0.0
    %3251 = vmatmul.mubr.f32.gmra.mxu0 %v2873
    %v3252 = vpop.f32.mrf.mxu0
    %v3253 = vadd.f32 0.0, %v3252
    %v3254 = vpop.f32.mrf.mxu0
    %v3255 = vadd.f32 0.0, %v3254
    %3256 = vdwg.mxu0
    %3257 = vmatprep.subr.mxu0 %v191
    %3258 = vmatpush1.msra.mxu0 %v190
    %3259 = vmatprep.subr.mxu0 %v187
    %3260 = vmatpush1.msra.mxu0 %v186
    %3261 = vmatprep.subr.mxu0 %v183
    %3262 = vmatpush1.msra.mxu0 %v182
    %3263 = vmatprep.subr.mxu0 %v179
    %3264 = vmatpush1.msra.mxu0 %v178
    %3265 = vmatprep.subr.mxu0 %v175
    %3266 = vmatpush1.msra.mxu0 %v174
    %3267 = vmatprep.subr.mxu0 %v171
    %3268 = vmatpush1.msra.mxu0 %v170
    %3269 = vmatprep.subr.mxu0 %v167
    %3270 = vmatpush1.msra.mxu0 %v166
    %3271 = vmatprep.subr.mxu0 %v163
    %3272 = vmatpush1.msra.mxu0 %v162
    %3273 = vmatprep.subr.mxu0 %v159
    %3274 = vmatpush1.msra.mxu0 %v158
    %3275 = vmatprep.subr.mxu0 %v155
    %3276 = vmatpush1.msra.mxu0 %v154
    %3277 = vmatprep.subr.mxu0 %v151
    %3278 = vmatpush1.msra.mxu0 %v150
    %3279 = vmatprep.subr.mxu0 %v147
    %3280 = vmatpush1.msra.mxu0 %v146
    %3281 = vmatprep.subr.mxu0 %v143
    %3282 = vmatpush1.msra.mxu0 %v142
    %3283 = vmatprep.subr.mxu0 %v139
    %3284 = vmatpush1.msra.mxu0 %v138
    %3285 = vmatprep.subr.mxu0 %v135
    %3286 = vmatpush1.msra.mxu0 %v134
    %3287 = vmatprep.subr.mxu0 %v131
    %3288 = vmatpush1.msra.mxu0 %v130
    %3289 = vmatprep.subr.mxu0 0.0
    %3290 = vmatpush2.msra.mxu0 0.0
    %3291 = vmatprep.subr.mxu0 0.0
    %3292 = vmatpush2.msra.mxu0 0.0
    %3293 = vmatprep.subr.mxu0 0.0
    %3294 = vmatpush2.msra.mxu0 0.0
    %3295 = vmatprep.subr.mxu0 0.0
    %3296 = vmatpush2.msra.mxu0 0.0
    %3297 = vmatprep.subr.mxu0 0.0
    %3298 = vmatpush2.msra.mxu0 0.0
    %3299 = vmatprep.subr.mxu0 0.0
    %3300 = vmatpush2.msra.mxu0 0.0
    %3301 = vmatprep.subr.mxu0 0.0
    %3302 = vmatpush2.msra.mxu0 0.0
    %3303 = vmatprep.subr.mxu0 0.0
    %3304 = vmatpush2.msra.mxu0 0.0
    %3305 = vmatprep.subr.mxu0 0.0
    %3306 = vmatpush2.msra.mxu0 0.0
    %3307 = vmatprep.subr.mxu0 0.0
    %3308 = vmatpush2.msra.mxu0 0.0
    %3309 = vmatprep.subr.mxu0 0.0
    %3310 = vmatpush2.msra.mxu0 0.0
    %3311 = vmatprep.subr.mxu0 0.0
    %3312 = vmatpush2.msra.mxu0 0.0
    %3313 = vmatprep.subr.mxu0 0.0
    %3314 = vmatpush2.msra.mxu0 0.0
    %3315 = vmatprep.subr.mxu0 0.0
    %3316 = vmatpush2.msra.mxu0 0.0
    %3317 = vmatprep.subr.mxu0 0.0
    %3318 = vmatpush2.msra.mxu0 0.0
    %3319 = vmatprep.subr.mxu0 0.0
    %3320 = vmatpush2.msra.mxu0 0.0
    %3321 = vmatprep.mubr.f32.mxu0 0.0
    %3322 = vmatmul.mubr.f32.gmra.mxu0 %v2873
    %v3323 = vpop.f32.mrf.mxu0
    %v3324 = vadd.f32 0.0, %v3323
    %v3325 = vpop.f32.mrf.mxu0
    %v3326 = vadd.f32 0.0, %v3325
    %3327 = vdwg.mxu0
    %v3328 = vadd.f32 %v1162, %v3253
    %v3329 = vadd.f32 %v1164, %v3255
    %v3330 = vadd.f32 %v1233, %v3324
    %v3331 = vadd.f32 %v1235, %v3326
    %v3332 = vxor.u32 %v3328, 2147483648
    %v3333 = vmul.f32 %v3332, 1.442695
    %v3334 = vpow.pop %v3333
    %v3335 = vadd.f32 %v3334, 1.0
    %v3336 = vrcp.pop %v3335
    %v3337 = vmul.f32 1.0, %v3336
    %v3338 = vxor.u32 %v3329, 2147483648
    %v3339 = vmul.f32 %v3338, 1.442695
    %v3340 = vpow.pop %v3339
    %v3341 = vadd.f32 %v3340, 1.0
    %v3342 = vrcp.pop %v3341
    %v3343 = vmul.f32 1.0, %v3342
    %v3344 = vtanh.pop %v3330
    %v3345 = vxor.u32 %v3331, 2147483648
    %v3346 = vmul.f32 %v3345, 1.442695
    %v3347 = vpow.pop %v3346
    %v3348 = vadd.f32 %v3347, 1.0
    %v3349 = vrcp.pop %v3348
    %v3350 = vmul.f32 1.0, %v3349
    %v3351 = vmul.f32 %v3343, %v2871
    %v3352 = vmul.f32 %v3337, %v3344
    %v3353 = vadd.f32 %v3351, %v3352
    %v3354 = vtanh.pop %v3353
    %v3355 = vmul.f32 %v3350, %v3354
    %3356 = vmatprep.subr.mxu0 %v254
    %3357 = vmatpush1.msra.mxu0 %v253
    %3358 = vmatprep.subr.mxu0 %v250
    %3359 = vmatpush1.msra.mxu0 %v249
    %3360 = vmatprep.subr.mxu0 %v246
    %3361 = vmatpush1.msra.mxu0 %v245
    %3362 = vmatprep.subr.mxu0 %v242
    %3363 = vmatpush1.msra.mxu0 %v241
    %3364 = vmatprep.subr.mxu0 %v238
    %3365 = vmatpush1.msra.mxu0 %v237
    %3366 = vmatprep.subr.mxu0 %v234
    %3367 = vmatpush1.msra.mxu0 %v233
    %3368 = vmatprep.subr.mxu0 %v230
    %3369 = vmatpush1.msra.mxu0 %v229
    %3370 = vmatprep.subr.mxu0 %v226
    %3371 = vmatpush1.msra.mxu0 %v225
    %3372 = vmatprep.subr.mxu0 %v222
    %3373 = vmatpush1.msra.mxu0 %v221
    %3374 = vmatprep.subr.mxu0 %v218
    %3375 = vmatpush1.msra.mxu0 %v217
    %3376 = vmatprep.subr.mxu0 %v214
    %3377 = vmatpush1.msra.mxu0 %v213
    %3378 = vmatprep.subr.mxu0 %v210
    %3379 = vmatpush1.msra.mxu0 %v209
    %3380 = vmatprep.subr.mxu0 %v206
    %3381 = vmatpush1.msra.mxu0 %v205
    %3382 = vmatprep.subr.mxu0 %v202
    %3383 = vmatpush1.msra.mxu0 %v201
    %3384 = vmatprep.subr.mxu0 %v198
    %3385 = vmatpush1.msra.mxu0 %v197
    %3386 = vmatprep.subr.mxu0 %v194
    %3387 = vmatpush1.msra.mxu0 %v193
    %3388 = vmatprep.subr.mxu0 0.0
    %3389 = vmatpush2.msra.mxu0 0.0
    %3390 = vmatprep.subr.mxu0 0.0
    %3391 = vmatpush2.msra.mxu0 0.0
    %3392 = vmatprep.subr.mxu0 0.0
    %3393 = vmatpush2.msra.mxu0 0.0
    %3394 = vmatprep.subr.mxu0 0.0
    %3395 = vmatpush2.msra.mxu0 0.0
    %3396 = vmatprep.subr.mxu0 0.0
    %3397 = vmatpush2.msra.mxu0 0.0
    %3398 = vmatprep.subr.mxu0 0.0
    %3399 = vmatpush2.msra.mxu0 0.0
    %3400 = vmatprep.subr.mxu0 0.0
    %3401 = vmatpush2.msra.mxu0 0.0
    %3402 = vmatprep.subr.mxu0 0.0
    %3403 = vmatpush2.msra.mxu0 0.0
    %3404 = vmatprep.subr.mxu0 0.0
    %3405 = vmatpush2.msra.mxu0 0.0
    %3406 = vmatprep.subr.mxu0 0.0
    %3407 = vmatpush2.msra.mxu0 0.0
    %3408 = vmatprep.subr.mxu0 0.0
    %3409 = vmatpush2.msra.mxu0 0.0
    %3410 = vmatprep.subr.mxu0 0.0
    %3411 = vmatpush2.msra.mxu0 0.0
    %3412 = vmatprep.subr.mxu0 0.0
    %3413 = vmatpush2.msra.mxu0 0.0
    %3414 = vmatprep.subr.mxu0 0.0
    %3415 = vmatpush2.msra.mxu0 0.0
    %3416 = vmatprep.subr.mxu0 0.0
    %3417 = vmatpush2.msra.mxu0 0.0
    %3418 = vmatprep.subr.mxu0 0.0
    %3419 = vmatpush2.msra.mxu0 0.0
    %3420 = vmatprep.mubr.f32.mxu0 0.0
    %3421 = vmatmul.mubr.f32.gmra.mxu0 %v3355
    %v3422 = vpop.f32.mrf.mxu0
    %v3423 = vadd.f32 %v1411, %v3422
    %v3424 = vpop.f32.mrf.mxu0
    %v3425 = vadd.f32 %v1415, %v3424
    %3426 = vdwg.mxu0
    %3427 = vmatprep.subr.mxu0 %v256
    %3428 = vmatpush1.msra.mxu0 %v255
    %3429 = vmatprep.subr.mxu0 %v252
    %3430 = vmatpush1.msra.mxu0 %v251
    %3431 = vmatprep.subr.mxu0 %v248
    %3432 = vmatpush1.msra.mxu0 %v247
    %3433 = vmatprep.subr.mxu0 %v244
    %3434 = vmatpush1.msra.mxu0 %v243
    %3435 = vmatprep.subr.mxu0 %v240
    %3436 = vmatpush1.msra.mxu0 %v239
    %3437 = vmatprep.subr.mxu0 %v236
    %3438 = vmatpush1.msra.mxu0 %v235
    %3439 = vmatprep.subr.mxu0 %v232
    %3440 = vmatpush1.msra.mxu0 %v231
    %3441 = vmatprep.subr.mxu0 %v228
    %3442 = vmatpush1.msra.mxu0 %v227
    %3443 = vmatprep.subr.mxu0 %v224
    %3444 = vmatpush1.msra.mxu0 %v223
    %3445 = vmatprep.subr.mxu0 %v220
    %3446 = vmatpush1.msra.mxu0 %v219
    %3447 = vmatprep.subr.mxu0 %v216
    %3448 = vmatpush1.msra.mxu0 %v215
    %3449 = vmatprep.subr.mxu0 %v212
    %3450 = vmatpush1.msra.mxu0 %v211
    %3451 = vmatprep.subr.mxu0 %v208
    %3452 = vmatpush1.msra.mxu0 %v207
    %3453 = vmatprep.subr.mxu0 %v204
    %3454 = vmatpush1.msra.mxu0 %v203
    %3455 = vmatprep.subr.mxu0 %v200
    %3456 = vmatpush1.msra.mxu0 %v199
    %3457 = vmatprep.subr.mxu0 %v196
    %3458 = vmatpush1.msra.mxu0 %v195
    %3459 = vmatprep.subr.mxu0 0.0
    %3460 = vmatpush2.msra.mxu0 0.0
    %3461 = vmatprep.subr.mxu0 0.0
    %3462 = vmatpush2.msra.mxu0 0.0
    %3463 = vmatprep.subr.mxu0 0.0
    %3464 = vmatpush2.msra.mxu0 0.0
    %3465 = vmatprep.subr.mxu0 0.0
    %3466 = vmatpush2.msra.mxu0 0.0
    %3467 = vmatprep.subr.mxu0 0.0
    %3468 = vmatpush2.msra.mxu0 0.0
    %3469 = vmatprep.subr.mxu0 0.0
    %3470 = vmatpush2.msra.mxu0 0.0
    %3471 = vmatprep.subr.mxu0 0.0
    %3472 = vmatpush2.msra.mxu0 0.0
    %3473 = vmatprep.subr.mxu0 0.0
    %3474 = vmatpush2.msra.mxu0 0.0
    %3475 = vmatprep.subr.mxu0 0.0
    %3476 = vmatpush2.msra.mxu0 0.0
    %3477 = vmatprep.subr.mxu0 0.0
    %3478 = vmatpush2.msra.mxu0 0.0
    %3479 = vmatprep.subr.mxu0 0.0
    %3480 = vmatpush2.msra.mxu0 0.0
    %3481 = vmatprep.subr.mxu0 0.0
    %3482 = vmatpush2.msra.mxu0 0.0
    %3483 = vmatprep.subr.mxu0 0.0
    %3484 = vmatpush2.msra.mxu0 0.0
    %3485 = vmatprep.subr.mxu0 0.0
    %3486 = vmatpush2.msra.mxu0 0.0
    %3487 = vmatprep.subr.mxu0 0.0
    %3488 = vmatpush2.msra.mxu0 0.0
    %3489 = vmatprep.subr.mxu0 0.0
    %3490 = vmatpush2.msra.mxu0 0.0
    %3491 = vmatprep.mubr.f32.mxu0 0.0
    %3492 = vmatmul.mubr.f32.gmra.mxu0 %v3355
    %v3493 = vpop.f32.mrf.mxu0
    %v3494 = vadd.f32 %v1419, %v3493
    %v3495 = vpop.f32.mrf.mxu0
    %v3496 = vadd.f32 %v1423, %v3495
    %3497 = vdwg.mxu0
    %3498 = vmatprep.subr.mxu0 %v318
    %3499 = vmatpush1.msra.mxu0 %v317
    %3500 = vmatprep.subr.mxu0 %v314
    %3501 = vmatpush1.msra.mxu0 %v313
    %3502 = vmatprep.subr.mxu0 %v310
    %3503 = vmatpush1.msra.mxu0 %v309
    %3504 = vmatprep.subr.mxu0 %v306
    %3505 = vmatpush1.msra.mxu0 %v305
    %3506 = vmatprep.subr.mxu0 %v302
    %3507 = vmatpush1.msra.mxu0 %v301
    %3508 = vmatprep.subr.mxu0 %v298
    %3509 = vmatpush1.msra.mxu0 %v297
    %3510 = vmatprep.subr.mxu0 %v294
    %3511 = vmatpush1.msra.mxu0 %v293
    %3512 = vmatprep.subr.mxu0 %v290
    %3513 = vmatpush1.msra.mxu0 %v289
    %3514 = vmatprep.subr.mxu0 %v286
    %3515 = vmatpush1.msra.mxu0 %v285
    %3516 = vmatprep.subr.mxu0 %v282
    %3517 = vmatpush1.msra.mxu0 %v281
    %3518 = vmatprep.subr.mxu0 %v278
    %3519 = vmatpush1.msra.mxu0 %v277
    %3520 = vmatprep.subr.mxu0 %v274
    %3521 = vmatpush1.msra.mxu0 %v273
    %3522 = vmatprep.subr.mxu0 %v270
    %3523 = vmatpush1.msra.mxu0 %v269
    %3524 = vmatprep.subr.mxu0 %v266
    %3525 = vmatpush1.msra.mxu0 %v265
    %3526 = vmatprep.subr.mxu0 %v262
    %3527 = vmatpush1.msra.mxu0 %v261
    %3528 = vmatprep.subr.mxu0 %v258
    %3529 = vmatpush1.msra.mxu0 %v257
    %3530 = vmatprep.subr.mxu0 0.0
    %3531 = vmatpush2.msra.mxu0 0.0
    %3532 = vmatprep.subr.mxu0 0.0
    %3533 = vmatpush2.msra.mxu0 0.0
    %3534 = vmatprep.subr.mxu0 0.0
    %3535 = vmatpush2.msra.mxu0 0.0
    %3536 = vmatprep.subr.mxu0 0.0
    %3537 = vmatpush2.msra.mxu0 0.0
    %3538 = vmatprep.subr.mxu0 0.0
    %3539 = vmatpush2.msra.mxu0 0.0
    %3540 = vmatprep.subr.mxu0 0.0
    %3541 = vmatpush2.msra.mxu0 0.0
    %3542 = vmatprep.subr.mxu0 0.0
    %3543 = vmatpush2.msra.mxu0 0.0
    %3544 = vmatprep.subr.mxu0 0.0
    %3545 = vmatpush2.msra.mxu0 0.0
    %3546 = vmatprep.subr.mxu0 0.0
    %3547 = vmatpush2.msra.mxu0 0.0
    %3548 = vmatprep.subr.mxu0 0.0
    %3549 = vmatpush2.msra.mxu0 0.0
    %3550 = vmatprep.subr.mxu0 0.0
    %3551 = vmatpush2.msra.mxu0 0.0
    %3552 = vmatprep.subr.mxu0 0.0
    %3553 = vmatpush2.msra.mxu0 0.0
    %3554 = vmatprep.subr.mxu0 0.0
    %3555 = vmatpush2.msra.mxu0 0.0
    %3556 = vmatprep.subr.mxu0 0.0
    %3557 = vmatpush2.msra.mxu0 0.0
    %3558 = vmatprep.subr.mxu0 0.0
    %3559 = vmatpush2.msra.mxu0 0.0
    %3560 = vmatprep.subr.mxu0 0.0
    %3561 = vmatpush2.msra.mxu0 0.0
    %3562 = vmatprep.mubr.f32.mxu0 0.0
    %3563 = vmatmul.mubr.f32.gmra.mxu0 %v3185
    %v3564 = vpop.f32.mrf.mxu0
    %v3565 = vadd.f32 0.0, %v3564
    %v3566 = vpop.f32.mrf.mxu0
    %v3567 = vadd.f32 0.0, %v3566
    %3568 = vdwg.mxu0
    %3569 = vmatprep.subr.mxu0 %v320
    %3570 = vmatpush1.msra.mxu0 %v319
    %3571 = vmatprep.subr.mxu0 %v316
    %3572 = vmatpush1.msra.mxu0 %v315
    %3573 = vmatprep.subr.mxu0 %v312
    %3574 = vmatpush1.msra.mxu0 %v311
    %3575 = vmatprep.subr.mxu0 %v308
    %3576 = vmatpush1.msra.mxu0 %v307
    %3577 = vmatprep.subr.mxu0 %v304
    %3578 = vmatpush1.msra.mxu0 %v303
    %3579 = vmatprep.subr.mxu0 %v300
    %3580 = vmatpush1.msra.mxu0 %v299
    %3581 = vmatprep.subr.mxu0 %v296
    %3582 = vmatpush1.msra.mxu0 %v295
    %3583 = vmatprep.subr.mxu0 %v292
    %3584 = vmatpush1.msra.mxu0 %v291
    %3585 = vmatprep.subr.mxu0 %v288
    %3586 = vmatpush1.msra.mxu0 %v287
    %3587 = vmatprep.subr.mxu0 %v284
    %3588 = vmatpush1.msra.mxu0 %v283
    %3589 = vmatprep.subr.mxu0 %v280
    %3590 = vmatpush1.msra.mxu0 %v279
    %3591 = vmatprep.subr.mxu0 %v276
    %3592 = vmatpush1.msra.mxu0 %v275
    %3593 = vmatprep.subr.mxu0 %v272
    %3594 = vmatpush1.msra.mxu0 %v271
    %3595 = vmatprep.subr.mxu0 %v268
    %3596 = vmatpush1.msra.mxu0 %v267
    %3597 = vmatprep.subr.mxu0 %v264
    %3598 = vmatpush1.msra.mxu0 %v263
    %3599 = vmatprep.subr.mxu0 %v260
    %3600 = vmatpush1.msra.mxu0 %v259
    %3601 = vmatprep.subr.mxu0 0.0
    %3602 = vmatpush2.msra.mxu0 0.0
    %3603 = vmatprep.subr.mxu0 0.0
    %3604 = vmatpush2.msra.mxu0 0.0
    %3605 = vmatprep.subr.mxu0 0.0
    %3606 = vmatpush2.msra.mxu0 0.0
    %3607 = vmatprep.subr.mxu0 0.0
    %3608 = vmatpush2.msra.mxu0 0.0
    %3609 = vmatprep.subr.mxu0 0.0
    %3610 = vmatpush2.msra.mxu0 0.0
    %3611 = vmatprep.subr.mxu0 0.0
    %3612 = vmatpush2.msra.mxu0 0.0
    %3613 = vmatprep.subr.mxu0 0.0
    %3614 = vmatpush2.msra.mxu0 0.0
    %3615 = vmatprep.subr.mxu0 0.0
    %3616 = vmatpush2.msra.mxu0 0.0
    %3617 = vmatprep.subr.mxu0 0.0
    %3618 = vmatpush2.msra.mxu0 0.0
    %3619 = vmatprep.subr.mxu0 0.0
    %3620 = vmatpush2.msra.mxu0 0.0
    %3621 = vmatprep.subr.mxu0 0.0
    %3622 = vmatpush2.msra.mxu0 0.0
    %3623 = vmatprep.subr.mxu0 0.0
    %3624 = vmatpush2.msra.mxu0 0.0
    %3625 = vmatprep.subr.mxu0 0.0
    %3626 = vmatpush2.msra.mxu0 0.0
    %3627 = vmatprep.subr.mxu0 0.0
    %3628 = vmatpush2.msra.mxu0 0.0
    %3629 = vmatprep.subr.mxu0 0.0
    %3630 = vmatpush2.msra.mxu0 0.0
    %3631 = vmatprep.subr.mxu0 0.0
    %3632 = vmatpush2.msra.mxu0 0.0
    %3633 = vmatprep.mubr.f32.mxu0 0.0
    %3634 = vmatmul.mubr.f32.gmra.mxu0 %v3185
    %v3635 = vpop.f32.mrf.mxu0
    %v3636 = vadd.f32 0.0, %v3635
    %v3637 = vpop.f32.mrf.mxu0
    %v3638 = vadd.f32 0.0, %v3637
    %3639 = vdwg.mxu0
    %v3640 = vadd.f32 %v3423, %v3565
    %v3641 = vadd.f32 %v3425, %v3567
    %v3642 = vadd.f32 %v3494, %v3636
    %v3643 = vadd.f32 %v3496, %v3638
    %v3644 = vxor.u32 %v3640, 2147483648
    %v3645 = vmul.f32 %v3644, 1.442695
    %v3646 = vpow.pop %v3645
    %v3647 = vadd.f32 %v3646, 1.0
    %v3648 = vrcp.pop %v3647
    %v3649 = vmul.f32 1.0, %v3648
    %v3650 = vxor.u32 %v3641, 2147483648
    %v3651 = vmul.f32 %v3650, 1.442695
    %v3652 = vpow.pop %v3651
    %v3653 = vadd.f32 %v3652, 1.0
    %v3654 = vrcp.pop %v3653
    %v3655 = vmul.f32 1.0, %v3654
    %v3656 = vtanh.pop %v3642
    %v3657 = vxor.u32 %v3643, 2147483648
    %v3658 = vmul.f32 %v3657, 1.442695
    %v3659 = vpow.pop %v3658
    %v3660 = vadd.f32 %v3659, 1.0
    %v3661 = vrcp.pop %v3660
    %v3662 = vmul.f32 1.0, %v3661
    %v3663 = vmul.f32 %v3655, %v3183
    %v3664 = vmul.f32 %v3649, %v3656
    %v3665 = vadd.f32 %v3663, %v3664
    %v3666 = vtanh.pop %v3665
    %v3667 = vmul.f32 %v3662, %v3666
    %vm3668 = vcmask 58368
    %3669 = vst.msk [vmem:[#allocation11] sm:$0x3] %vm3668, %v3667
    %v3671 = vlaneseq
    %v3672 = vshrl.u32 %v3671, 7
    %v3673 = vsub.s32 0, %v3672
    %v3674 = vrot.slane %v450, %v3673
    %v3675 = vlaneseq
    %v3676 = vshrl.u32 %v3675, 7
    %v3677 = vsub.s32 1, %v3676
    %v3678 = vrot.slane %v450, %v3677
    %v3679 = vlaneseq
    %v3680 = vshrl.u32 %v3679, 7
    %v3681 = vsub.s32 2, %v3680
    %v3682 = vrot.slane %v450, %v3681
    %v3683 = vlaneseq
    %v3684 = vshrl.u32 %v3683, 7
    %v3685 = vsub.s32 3, %v3684
    %v3686 = vrot.slane %v450, %v3685
    %3691 = vmatprep.subr.mxu0 %v383
    %3692 = vmatpush1.msra.mxu0 %v382
    %3693 = vmatprep.subr.mxu0 %v379
    %3694 = vmatpush1.msra.mxu0 %v378
    %3695 = vmatprep.subr.mxu0 %v375
    %3696 = vmatpush1.msra.mxu0 %v374
    %3697 = vmatprep.subr.mxu0 %v371
    %3698 = vmatpush1.msra.mxu0 %v370
    %3699 = vmatprep.subr.mxu0 %v367
    %3700 = vmatpush1.msra.mxu0 %v366
    %3701 = vmatprep.subr.mxu0 %v363
    %3702 = vmatpush1.msra.mxu0 %v362
    %3703 = vmatprep.subr.mxu0 %v359
    %3704 = vmatpush1.msra.mxu0 %v358
    %3705 = vmatprep.subr.mxu0 %v355
    %3706 = vmatpush1.msra.mxu0 %v354
    %3707 = vmatprep.subr.mxu0 %v351
    %3708 = vmatpush1.msra.mxu0 %v350
    %3709 = vmatprep.subr.mxu0 %v347
    %3710 = vmatpush1.msra.mxu0 %v346
    %3711 = vmatprep.subr.mxu0 %v343
    %3712 = vmatpush1.msra.mxu0 %v342
    %3713 = vmatprep.subr.mxu0 %v339
    %3714 = vmatpush1.msra.mxu0 %v338
    %3715 = vmatprep.subr.mxu0 %v335
    %3716 = vmatpush1.msra.mxu0 %v334
    %3717 = vmatprep.subr.mxu0 %v331
    %3718 = vmatpush1.msra.mxu0 %v330
    %3719 = vmatprep.subr.mxu0 %v327
    %3720 = vmatpush1.msra.mxu0 %v326
    %3721 = vmatprep.subr.mxu0 %v323
    %3722 = vmatpush1.msra.mxu0 %v322
    %3723 = vmatprep.subr.mxu0 0.0
    %3724 = vmatpush2.msra.mxu0 0.0
    %3725 = vmatprep.subr.mxu0 0.0
    %3726 = vmatpush2.msra.mxu0 0.0
    %3727 = vmatprep.subr.mxu0 0.0
    %3728 = vmatpush2.msra.mxu0 0.0
    %3729 = vmatprep.subr.mxu0 0.0
    %3730 = vmatpush2.msra.mxu0 0.0
    %3731 = vmatprep.subr.mxu0 0.0
    %3732 = vmatpush2.msra.mxu0 0.0
    %3733 = vmatprep.subr.mxu0 0.0
    %3734 = vmatpush2.msra.mxu0 0.0
    %3735 = vmatprep.subr.mxu0 0.0
    %3736 = vmatpush2.msra.mxu0 0.0
    %3737 = vmatprep.subr.mxu0 0.0
    %3738 = vmatpush2.msra.mxu0 0.0
    %3739 = vmatprep.subr.mxu0 0.0
    %3740 = vmatpush2.msra.mxu0 0.0
    %3741 = vmatprep.subr.mxu0 0.0
    %3742 = vmatpush2.msra.mxu0 0.0
    %3743 = vmatprep.subr.mxu0 0.0
    %3744 = vmatpush2.msra.mxu0 0.0
    %3745 = vmatprep.subr.mxu0 0.0
    %3746 = vmatpush2.msra.mxu0 0.0
    %3747 = vmatprep.subr.mxu0 0.0
    %3748 = vmatpush2.msra.mxu0 0.0
    %3749 = vmatprep.subr.mxu0 0.0
    %3750 = vmatpush2.msra.mxu0 0.0
    %3751 = vmatprep.subr.mxu0 0.0
    %3752 = vmatpush2.msra.mxu0 0.0
    %3753 = vmatprep.subr.mxu0 0.0
    %3754 = vmatpush2.msra.mxu0 0.0
    %3755 = vmatprep.mubr.f32.mxu0 0.0
    %3756 = vmatmul.mubr.f32.gmra.mxu0 %v3667
    %v3757 = vpop.f32.mrf.mxu0
    %v3758 = vadd.f32 %v3674, %v3757
    %v3759 = vpop.f32.mrf.mxu0
    %v3760 = vadd.f32 %v3678, %v3759
    %3761 = vdwg.mxu0
    %3762 = vmatprep.subr.mxu0 %v385
    %3763 = vmatpush1.msra.mxu0 %v384
    %3764 = vmatprep.subr.mxu0 %v381
    %3765 = vmatpush1.msra.mxu0 %v380
    %3766 = vmatprep.subr.mxu0 %v377
    %3767 = vmatpush1.msra.mxu0 %v376
    %3768 = vmatprep.subr.mxu0 %v373
    %3769 = vmatpush1.msra.mxu0 %v372
    %3770 = vmatprep.subr.mxu0 %v369
    %3771 = vmatpush1.msra.mxu0 %v368
    %3772 = vmatprep.subr.mxu0 %v365
    %3773 = vmatpush1.msra.mxu0 %v364
    %3774 = vmatprep.subr.mxu0 %v361
    %3775 = vmatpush1.msra.mxu0 %v360
    %3776 = vmatprep.subr.mxu0 %v357
    %3777 = vmatpush1.msra.mxu0 %v356
    %3778 = vmatprep.subr.mxu0 %v353
    %3779 = vmatpush1.msra.mxu0 %v352
    %3780 = vmatprep.subr.mxu0 %v349
    %3781 = vmatpush1.msra.mxu0 %v348
    %3782 = vmatprep.subr.mxu0 %v345
    %3783 = vmatpush1.msra.mxu0 %v344
    %3784 = vmatprep.subr.mxu0 %v341
    %3785 = vmatpush1.msra.mxu0 %v340
    %3786 = vmatprep.subr.mxu0 %v337
    %3787 = vmatpush1.msra.mxu0 %v336
    %3788 = vmatprep.subr.mxu0 %v333
    %3789 = vmatpush1.msra.mxu0 %v332
    %3790 = vmatprep.subr.mxu0 %v329
    %3791 = vmatpush1.msra.mxu0 %v328
    %3792 = vmatprep.subr.mxu0 %v325
    %3793 = vmatpush1.msra.mxu0 %v324
    %3794 = vmatprep.subr.mxu0 0.0
    %3795 = vmatpush2.msra.mxu0 0.0
    %3796 = vmatprep.subr.mxu0 0.0
    %3797 = vmatpush2.msra.mxu0 0.0
    %3798 = vmatprep.subr.mxu0 0.0
    %3799 = vmatpush2.msra.mxu0 0.0
    %3800 = vmatprep.subr.mxu0 0.0
    %3801 = vmatpush2.msra.mxu0 0.0
    %3802 = vmatprep.subr.mxu0 0.0
    %3803 = vmatpush2.msra.mxu0 0.0
    %3804 = vmatprep.subr.mxu0 0.0
    %3805 = vmatpush2.msra.mxu0 0.0
    %3806 = vmatprep.subr.mxu0 0.0
    %3807 = vmatpush2.msra.mxu0 0.0
    %3808 = vmatprep.subr.mxu0 0.0
    %3809 = vmatpush2.msra.mxu0 0.0
    %3810 = vmatprep.subr.mxu0 0.0
    %3811 = vmatpush2.msra.mxu0 0.0
    %3812 = vmatprep.subr.mxu0 0.0
    %3813 = vmatpush2.msra.mxu0 0.0
    %3814 = vmatprep.subr.mxu0 0.0
    %3815 = vmatpush2.msra.mxu0 0.0
    %3816 = vmatprep.subr.mxu0 0.0
    %3817 = vmatpush2.msra.mxu0 0.0
    %3818 = vmatprep.subr.mxu0 0.0
    %3819 = vmatpush2.msra.mxu0 0.0
    %3820 = vmatprep.subr.mxu0 0.0
    %3821 = vmatpush2.msra.mxu0 0.0
    %3822 = vmatprep.subr.mxu0 0.0
    %3823 = vmatpush2.msra.mxu0 0.0
    %3824 = vmatprep.subr.mxu0 0.0
    %3825 = vmatpush2.msra.mxu0 0.0
    %3826 = vmatprep.mubr.f32.mxu0 0.0
    %3827 = vmatmul.mubr.f32.gmra.mxu0 %v3667
    %v3828 = vpop.f32.mrf.mxu0
    %v3829 = vadd.f32 %v3682, %v3828
    %v3830 = vpop.f32.mrf.mxu0
    %v3831 = vadd.f32 %v3686, %v3830
    %3832 = vdwg.mxu0
    %3833 = vmatprep.subr.mxu0 %v447
    %3834 = vmatpush1.msra.mxu0 %v446
    %3835 = vmatprep.subr.mxu0 %v443
    %3836 = vmatpush1.msra.mxu0 %v442
    %3837 = vmatprep.subr.mxu0 %v439
    %3838 = vmatpush1.msra.mxu0 %v438
    %3839 = vmatprep.subr.mxu0 %v435
    %3840 = vmatpush1.msra.mxu0 %v434
    %3841 = vmatprep.subr.mxu0 %v431
    %3842 = vmatpush1.msra.mxu0 %v430
    %3843 = vmatprep.subr.mxu0 %v427
    %3844 = vmatpush1.msra.mxu0 %v426
    %3845 = vmatprep.subr.mxu0 %v423
    %3846 = vmatpush1.msra.mxu0 %v422
    %3847 = vmatprep.subr.mxu0 %v419
    %3848 = vmatpush1.msra.mxu0 %v418
    %3849 = vmatprep.subr.mxu0 %v415
    %3850 = vmatpush1.msra.mxu0 %v414
    %3851 = vmatprep.subr.mxu0 %v411
    %3852 = vmatpush1.msra.mxu0 %v410
    %3853 = vmatprep.subr.mxu0 %v407
    %3854 = vmatpush1.msra.mxu0 %v406
    %3855 = vmatprep.subr.mxu0 %v403
    %3856 = vmatpush1.msra.mxu0 %v402
    %3857 = vmatprep.subr.mxu0 %v399
    %3858 = vmatpush1.msra.mxu0 %v398
    %3859 = vmatprep.subr.mxu0 %v395
    %3860 = vmatpush1.msra.mxu0 %v394
    %3861 = vmatprep.subr.mxu0 %v391
    %3862 = vmatpush1.msra.mxu0 %v390
    %3863 = vmatprep.subr.mxu0 %v387
    %3864 = vmatpush1.msra.mxu0 %v386
    %3865 = vmatprep.subr.mxu0 0.0
    %3866 = vmatpush2.msra.mxu0 0.0
    %3867 = vmatprep.subr.mxu0 0.0
    %3868 = vmatpush2.msra.mxu0 0.0
    %3869 = vmatprep.subr.mxu0 0.0
    %3870 = vmatpush2.msra.mxu0 0.0
    %3871 = vmatprep.subr.mxu0 0.0
    %3872 = vmatpush2.msra.mxu0 0.0
    %3873 = vmatprep.subr.mxu0 0.0
    %3874 = vmatpush2.msra.mxu0 0.0
    %3875 = vmatprep.subr.mxu0 0.0
    %3876 = vmatpush2.msra.mxu0 0.0
    %3877 = vmatprep.subr.mxu0 0.0
    %3878 = vmatpush2.msra.mxu0 0.0
    %3879 = vmatprep.subr.mxu0 0.0
    %3880 = vmatpush2.msra.mxu0 0.0
    %3881 = vmatprep.subr.mxu0 0.0
    %3882 = vmatpush2.msra.mxu0 0.0
    %3883 = vmatprep.subr.mxu0 0.0
    %3884 = vmatpush2.msra.mxu0 0.0
    %3885 = vmatprep.subr.mxu0 0.0
    %3886 = vmatpush2.msra.mxu0 0.0
    %3887 = vmatprep.subr.mxu0 0.0
    %3888 = vmatpush2.msra.mxu0 0.0
    %3889 = vmatprep.subr.mxu0 0.0
    %3890 = vmatpush2.msra.mxu0 0.0
    %3891 = vmatprep.subr.mxu0 0.0
    %3892 = vmatpush2.msra.mxu0 0.0
    %3893 = vmatprep.subr.mxu0 0.0
    %3894 = vmatpush2.msra.mxu0 0.0
    %3895 = vmatprep.subr.mxu0 0.0
    %3896 = vmatpush2.msra.mxu0 0.0
    %3897 = vmatprep.mubr.f32.mxu0 0.0
    %3898 = vmatmul.mubr.f32.gmra.mxu0 0.0
    %v3899 = vpop.f32.mrf.mxu0
    %v3900 = vadd.f32 0.0, %v3899
    %v3901 = vpop.f32.mrf.mxu0
    %v3902 = vadd.f32 0.0, %v3901
    %3903 = vdwg.mxu0
    %3904 = vmatprep.subr.mxu0 %v449
    %3905 = vmatpush1.msra.mxu0 %v448
    %3906 = vmatprep.subr.mxu0 %v445
    %3907 = vmatpush1.msra.mxu0 %v444
    %3908 = vmatprep.subr.mxu0 %v441
    %3909 = vmatpush1.msra.mxu0 %v440
    %3910 = vmatprep.subr.mxu0 %v437
    %3911 = vmatpush1.msra.mxu0 %v436
    %3912 = vmatprep.subr.mxu0 %v433
    %3913 = vmatpush1.msra.mxu0 %v432
    %3914 = vmatprep.subr.mxu0 %v429
    %3915 = vmatpush1.msra.mxu0 %v428
    %3916 = vmatprep.subr.mxu0 %v425
    %3917 = vmatpush1.msra.mxu0 %v424
    %3918 = vmatprep.subr.mxu0 %v421
    %3919 = vmatpush1.msra.mxu0 %v420
    %3920 = vmatprep.subr.mxu0 %v417
    %3921 = vmatpush1.msra.mxu0 %v416
    %3922 = vmatprep.subr.mxu0 %v413
    %3923 = vmatpush1.msra.mxu0 %v412
    %3924 = vmatprep.subr.mxu0 %v409
    %3925 = vmatpush1.msra.mxu0 %v408
    %3926 = vmatprep.subr.mxu0 %v405
    %3927 = vmatpush1.msra.mxu0 %v404
    %3928 = vmatprep.subr.mxu0 %v401
    %3929 = vmatpush1.msra.mxu0 %v400
    %3930 = vmatprep.subr.mxu0 %v397
    %3931 = vmatpush1.msra.mxu0 %v396
    %3932 = vmatprep.subr.mxu0 %v393
    %3933 = vmatpush1.msra.mxu0 %v392
    %3934 = vmatprep.subr.mxu0 %v389
    %3935 = vmatpush1.msra.mxu0 %v388
    %3936 = vmatprep.subr.mxu0 0.0
    %3937 = vmatpush2.msra.mxu0 0.0
    %3938 = vmatprep.subr.mxu0 0.0
    %3939 = vmatpush2.msra.mxu0 0.0
    %3940 = vmatprep.subr.mxu0 0.0
    %3941 = vmatpush2.msra.mxu0 0.0
    %3942 = vmatprep.subr.mxu0 0.0
    %3943 = vmatpush2.msra.mxu0 0.0
    %3944 = vmatprep.subr.mxu0 0.0
    %3945 = vmatpush2.msra.mxu0 0.0
    %3946 = vmatprep.subr.mxu0 0.0
    %3947 = vmatpush2.msra.mxu0 0.0
    %3948 = vmatprep.subr.mxu0 0.0
    %3949 = vmatpush2.msra.mxu0 0.0
    %3950 = vmatprep.subr.mxu0 0.0
    %3951 = vmatpush2.msra.mxu0 0.0
    %3952 = vmatprep.subr.mxu0 0.0
    %3953 = vmatpush2.msra.mxu0 0.0
    %3954 = vmatprep.subr.mxu0 0.0
    %3955 = vmatpush2.msra.mxu0 0.0
    %3956 = vmatprep.subr.mxu0 0.0
    %3957 = vmatpush2.msra.mxu0 0.0
    %3958 = vmatprep.subr.mxu0 0.0
    %3959 = vmatpush2.msra.mxu0 0.0
    %3960 = vmatprep.subr.mxu0 0.0
    %3961 = vmatpush2.msra.mxu0 0.0
    %3962 = vmatprep.subr.mxu0 0.0
    %3963 = vmatpush2.msra.mxu0 0.0
    %3964 = vmatprep.subr.mxu0 0.0
    %3965 = vmatpush2.msra.mxu0 0.0
    %3966 = vmatprep.subr.mxu0 0.0
    %3967 = vmatpush2.msra.mxu0 0.0
    %3968 = vmatprep.mubr.f32.mxu0 0.0
    %3969 = vmatmul.mubr.f32.gmra.mxu0 0.0
    %v3970 = vpop.f32.mrf.mxu0
    %v3971 = vadd.f32 0.0, %v3970
    %v3972 = vpop.f32.mrf.mxu0
    %v3973 = vadd.f32 0.0, %v3972
    %3974 = vdwg.mxu0
    %v3975 = vlaneseq
    %v3976 = vshrl.u32 %v3975, 7
    %v3977 = vsub.s32 0, %v3976
    %v3978 = vrot.slane %v3758, %v3977
    %v3979 = vlaneseq
    %v3980 = vshrl.u32 %v3979, 7
    %v3981 = vsub.s32 0, %v3980
    %v3982 = vrot.slane %v3760, %v3981
    %v3983 = vlaneseq
    %v3984 = vshrl.u32 %v3983, 7
    %v3985 = vsub.s32 0, %v3984
    %v3986 = vrot.slane %v3829, %v3985
    %v3987 = vlaneseq
    %v3988 = vshrl.u32 %v3987, 7
    %v3989 = vsub.s32 0, %v3988
    %v3990 = vrot.slane %v3831, %v3989
    %v3991 = vadd.f32 %v3978, %v3900
    %v3992 = vadd.f32 %v3982, %v3902
    %v3993 = vadd.f32 %v3986, %v3971
    %v3994 = vadd.f32 %v3990, %v3973
    %v3995 = vxor.u32 %v3991, 2147483648
    %v3996 = vmul.f32 %v3995, 1.442695
    %v3997 = vpow.pop %v3996
    %v3998 = vadd.f32 %v3997, 1.0
    %v3999 = vrcp.pop %v3998
    %v4000 = vmul.f32 1.0, %v3999
    %v4001 = vxor.u32 %v3992, 2147483648
    %v4002 = vmul.f32 %v4001, 1.442695
    %v4003 = vpow.pop %v4002
    %v4004 = vadd.f32 %v4003, 1.0
    %v4005 = vrcp.pop %v4004
    %v4006 = vmul.f32 1.0, %v4005
    %v4007 = vtanh.pop %v3993
    %v4008 = vxor.u32 %v3994, 2147483648
    %v4009 = vmul.f32 %v4008, 1.442695
    %v4010 = vpow.pop %v4009
    %v4011 = vadd.f32 %v4010, 1.0
    %v4012 = vrcp.pop %v4011
    %v4013 = vmul.f32 1.0, %v4012
    %v4014 = vmul.f32 %v4006, 0.0
    %v4015 = vmul.f32 %v4000, %v4007
    %v4016 = vadd.f32 %v4014, %v4015
    %v4017 = vtanh.pop %v4016
    %v4018 = vmul.f32 %v4013, %v4017
    %v4020 = vlaneseq
    %v4021 = vshrl.u32 %v4020, 7
    %v4022 = vsub.s32 0, %v4021
    %v4023 = vrot.slane %v467, %v4022
    %4025 = vmatprep.subr.mxu0 0.0
    %4026 = vmatpush1.msra.mxu0 %v466
    %4027 = vmatprep.subr.mxu0 0.0
    %4028 = vmatpush1.msra.mxu0 %v465
    %4029 = vmatprep.subr.mxu0 0.0
    %4030 = vmatpush1.msra.mxu0 %v464
    %4031 = vmatprep.subr.mxu0 0.0
    %4032 = vmatpush1.msra.mxu0 %v463
    %4033 = vmatprep.subr.mxu0 0.0
    %4034 = vmatpush1.msra.mxu0 %v462
    %4035 = vmatprep.subr.mxu0 0.0
    %4036 = vmatpush1.msra.mxu0 %v461
    %4037 = vmatprep.subr.mxu0 0.0
    %4038 = vmatpush1.msra.mxu0 %v460
    %4039 = vmatprep.subr.mxu0 0.0
    %4040 = vmatpush1.msra.mxu0 %v459
    %4041 = vmatprep.subr.mxu0 0.0
    %4042 = vmatpush1.msra.mxu0 %v458
    %4043 = vmatprep.subr.mxu0 0.0
    %4044 = vmatpush1.msra.mxu0 %v457
    %4045 = vmatprep.subr.mxu0 0.0
    %4046 = vmatpush1.msra.mxu0 %v456
    %4047 = vmatprep.subr.mxu0 0.0
    %4048 = vmatpush1.msra.mxu0 %v455
    %4049 = vmatprep.subr.mxu0 0.0
    %4050 = vmatpush1.msra.mxu0 %v454
    %4051 = vmatprep.subr.mxu0 0.0
    %4052 = vmatpush1.msra.mxu0 %v453
    %4053 = vmatprep.subr.mxu0 0.0
    %4054 = vmatpush1.msra.mxu0 %v452
    %4055 = vmatprep.subr.mxu0 0.0
    %4056 = vmatpush1.msra.mxu0 %v451
    %4057 = vmatprep.subr.mxu0 0.0
    %4058 = vmatpush2.msra.mxu0 0.0
    %4059 = vmatprep.subr.mxu0 0.0
    %4060 = vmatpush2.msra.mxu0 0.0
    %4061 = vmatprep.subr.mxu0 0.0
    %4062 = vmatpush2.msra.mxu0 0.0
    %4063 = vmatprep.subr.mxu0 0.0
    %4064 = vmatpush2.msra.mxu0 0.0
    %4065 = vmatprep.subr.mxu0 0.0
    %4066 = vmatpush2.msra.mxu0 0.0
    %4067 = vmatprep.subr.mxu0 0.0
    %4068 = vmatpush2.msra.mxu0 0.0
    %4069 = vmatprep.subr.mxu0 0.0
    %4070 = vmatpush2.msra.mxu0 0.0
    %4071 = vmatprep.subr.mxu0 0.0
    %4072 = vmatpush2.msra.mxu0 0.0
    %4073 = vmatprep.subr.mxu0 0.0
    %4074 = vmatpush2.msra.mxu0 0.0
    %4075 = vmatprep.subr.mxu0 0.0
    %4076 = vmatpush2.msra.mxu0 0.0
    %4077 = vmatprep.subr.mxu0 0.0
    %4078 = vmatpush2.msra.mxu0 0.0
    %4079 = vmatprep.subr.mxu0 0.0
    %4080 = vmatpush2.msra.mxu0 0.0
    %4081 = vmatprep.subr.mxu0 0.0
    %4082 = vmatpush2.msra.mxu0 0.0
    %4083 = vmatprep.subr.mxu0 0.0
    %4084 = vmatpush2.msra.mxu0 0.0
    %4085 = vmatprep.subr.mxu0 0.0
    %4086 = vmatpush2.msra.mxu0 0.0
    %4087 = vmatprep.subr.mxu0 0.0
    %4088 = vmatpush2.msra.mxu0 0.0
    %4089 = vmatprep.mubr.f32.mxu0 0.0
    %4090 = vmatmul.mubr.f32.gmra.mxu0 %v4018
    %v4091 = vpop.f32.mrf.mxu0
    %v4092 = vadd.f32 %v4023, %v4091
    %v4093 = vpop.f32.mrf.mxu0
    %4094 = vdwg.mxu0
    %vm4095 = vcmask 208896
    %4096 = vst.msk [vmem:[%s13] sm:$0x1f] %vm4095, %v4092
    %4097 = vmatprep.subr.mxu0 %v447
    %4098 = vmatpush1.msra.mxu0 %v446
    %4099 = vmatprep.subr.mxu0 %v443
    %4100 = vmatpush1.msra.mxu0 %v442
    %4101 = vmatprep.subr.mxu0 %v439
    %4102 = vmatpush1.msra.mxu0 %v438
    %4103 = vmatprep.subr.mxu0 %v435
    %4104 = vmatpush1.msra.mxu0 %v434
    %4105 = vmatprep.subr.mxu0 %v431
    %4106 = vmatpush1.msra.mxu0 %v430
    %4107 = vmatprep.subr.mxu0 %v427
    %4108 = vmatpush1.msra.mxu0 %v426
    %4109 = vmatprep.subr.mxu0 %v423
    %4110 = vmatpush1.msra.mxu0 %v422
    %4111 = vmatprep.subr.mxu0 %v419
    %4112 = vmatpush1.msra.mxu0 %v418
    %4113 = vmatprep.subr.mxu0 %v415
    %4114 = vmatpush1.msra.mxu0 %v414
    %4115 = vmatprep.subr.mxu0 %v411
    %4116 = vmatpush1.msra.mxu0 %v410
    %4117 = vmatprep.subr.mxu0 %v407
    %4118 = vmatpush1.msra.mxu0 %v406
    %4119 = vmatprep.subr.mxu0 %v403
    %4120 = vmatpush1.msra.mxu0 %v402
    %4121 = vmatprep.subr.mxu0 %v399
    %4122 = vmatpush1.msra.mxu0 %v398
    %4123 = vmatprep.subr.mxu0 %v395
    %4124 = vmatpush1.msra.mxu0 %v394
    %4125 = vmatprep.subr.mxu0 %v391
    %4126 = vmatpush1.msra.mxu0 %v390
    %4127 = vmatprep.subr.mxu0 %v387
    %4128 = vmatpush1.msra.mxu0 %v386
    %4129 = vmatprep.subr.mxu0 0.0
    %4130 = vmatpush2.msra.mxu0 0.0
    %4131 = vmatprep.subr.mxu0 0.0
    %4132 = vmatpush2.msra.mxu0 0.0
    %4133 = vmatprep.subr.mxu0 0.0
    %4134 = vmatpush2.msra.mxu0 0.0
    %4135 = vmatprep.subr.mxu0 0.0
    %4136 = vmatpush2.msra.mxu0 0.0
    %4137 = vmatprep.subr.mxu0 0.0
    %4138 = vmatpush2.msra.mxu0 0.0
    %4139 = vmatprep.subr.mxu0 0.0
    %4140 = vmatpush2.msra.mxu0 0.0
    %4141 = vmatprep.subr.mxu0 0.0
    %4142 = vmatpush2.msra.mxu0 0.0
    %4143 = vmatprep.subr.mxu0 0.0
    %4144 = vmatpush2.msra.mxu0 0.0
    %4145 = vmatprep.subr.mxu0 0.0
    %4146 = vmatpush2.msra.mxu0 0.0
    %4147 = vmatprep.subr.mxu0 0.0
    %4148 = vmatpush2.msra.mxu0 0.0
    %4149 = vmatprep.subr.mxu0 0.0
    %4150 = vmatpush2.msra.mxu0 0.0
    %4151 = vmatprep.subr.mxu0 0.0
    %4152 = vmatpush2.msra.mxu0 0.0
    %4153 = vmatprep.subr.mxu0 0.0
    %4154 = vmatpush2.msra.mxu0 0.0
    %4155 = vmatprep.subr.mxu0 0.0
    %4156 = vmatpush2.msra.mxu0 0.0
    %4157 = vmatprep.subr.mxu0 0.0
    %4158 = vmatpush2.msra.mxu0 0.0
    %4159 = vmatprep.subr.mxu0 0.0
    %4160 = vmatpush2.msra.mxu0 0.0
    %4161 = vmatprep.mubr.f32.mxu0 0.0
    %4162 = vmatmul.mubr.f32.gmra.mxu0 %v4018
    %v4163 = vpop.f32.mrf.mxu0
    %v4164 = vadd.f32 0.0, %v4163
    %v4165 = vpop.f32.mrf.mxu0
    %v4166 = vadd.f32 0.0, %v4165
    %4167 = vdwg.mxu0
    %4168 = vmatprep.subr.mxu0 %v449
    %4169 = vmatpush1.msra.mxu0 %v448
    %4170 = vmatprep.subr.mxu0 %v445
    %4171 = vmatpush1.msra.mxu0 %v444
    %4172 = vmatprep.subr.mxu0 %v441
    %4173 = vmatpush1.msra.mxu0 %v440
    %4174 = vmatprep.subr.mxu0 %v437
    %4175 = vmatpush1.msra.mxu0 %v436
    %4176 = vmatprep.subr.mxu0 %v433
    %4177 = vmatpush1.msra.mxu0 %v432
    %4178 = vmatprep.subr.mxu0 %v429
    %4179 = vmatpush1.msra.mxu0 %v428
    %4180 = vmatprep.subr.mxu0 %v425
    %4181 = vmatpush1.msra.mxu0 %v424
    %4182 = vmatprep.subr.mxu0 %v421
    %4183 = vmatpush1.msra.mxu0 %v420
    %4184 = vmatprep.subr.mxu0 %v417
    %4185 = vmatpush1.msra.mxu0 %v416
    %4186 = vmatprep.subr.mxu0 %v413
    %4187 = vmatpush1.msra.mxu0 %v412
    %4188 = vmatprep.subr.mxu0 %v409
    %4189 = vmatpush1.msra.mxu0 %v408
    %4190 = vmatprep.subr.mxu0 %v405
    %4191 = vmatpush1.msra.mxu0 %v404
    %4192 = vmatprep.subr.mxu0 %v401
    %4193 = vmatpush1.msra.mxu0 %v400
    %4194 = vmatprep.subr.mxu0 %v397
    %4195 = vmatpush1.msra.mxu0 %v396
    %4196 = vmatprep.subr.mxu0 %v393
    %4197 = vmatpush1.msra.mxu0 %v392
    %4198 = vmatprep.subr.mxu0 %v389
    %4199 = vmatpush1.msra.mxu0 %v388
    %4200 = vmatprep.subr.mxu0 0.0
    %4201 = vmatpush2.msra.mxu0 0.0
    %4202 = vmatprep.subr.mxu0 0.0
    %4203 = vmatpush2.msra.mxu0 0.0
    %4204 = vmatprep.subr.mxu0 0.0
    %4205 = vmatpush2.msra.mxu0 0.0
    %4206 = vmatprep.subr.mxu0 0.0
    %4207 = vmatpush2.msra.mxu0 0.0
    %4208 = vmatprep.subr.mxu0 0.0
    %4209 = vmatpush2.msra.mxu0 0.0
    %4210 = vmatprep.subr.mxu0 0.0
    %4211 = vmatpush2.msra.mxu0 0.0
    %4212 = vmatprep.subr.mxu0 0.0
    %4213 = vmatpush2.msra.mxu0 0.0
    %4214 = vmatprep.subr.mxu0 0.0
    %4215 = vmatpush2.msra.mxu0 0.0
    %4216 = vmatprep.subr.mxu0 0.0
    %4217 = vmatpush2.msra.mxu0 0.0
    %4218 = vmatprep.subr.mxu0 0.0
    %4219 = vmatpush2.msra.mxu0 0.0
    %4220 = vmatprep.subr.mxu0 0.0
    %4221 = vmatpush2.msra.mxu0 0.0
    %4222 = vmatprep.subr.mxu0 0.0
    %4223 = vmatpush2.msra.mxu0 0.0
    %4224 = vmatprep.subr.mxu0 0.0
    %4225 = vmatpush2.msra.mxu0 0.0
    %4226 = vmatprep.subr.mxu0 0.0
    %4227 = vmatpush2.msra.mxu0 0.0
    %4228 = vmatprep.subr.mxu0 0.0
    %4229 = vmatpush2.msra.mxu0 0.0
    %4230 = vmatprep.subr.mxu0 0.0
    %4231 = vmatpush2.msra.mxu0 0.0
    %4232 = vmatprep.mubr.f32.mxu0 0.0
    %4233 = vmatmul.mubr.f32.gmra.mxu0 %v4018
    %v4234 = vpop.f32.mrf.mxu0
    %v4235 = vadd.f32 0.0, %v4234
    %v4236 = vpop.f32.mrf.mxu0
    %v4237 = vadd.f32 0.0, %v4236
    %4238 = vdwg.mxu0
    %v4239 = vlaneseq
    %v4240 = vshrl.u32 %v4239, 7
    %v4241 = vsub.s32 1, %v4240
    %v4242 = vrot.slane %v3758, %v4241
    %v4243 = vlaneseq
    %v4244 = vshrl.u32 %v4243, 7
    %v4245 = vsub.s32 1, %v4244
    %v4246 = vrot.slane %v3760, %v4245
    %v4247 = vlaneseq
    %v4248 = vshrl.u32 %v4247, 7
    %v4249 = vsub.s32 1, %v4248
    %v4250 = vrot.slane %v3829, %v4249
    %v4251 = vlaneseq
    %v4252 = vshrl.u32 %v4251, 7
    %v4253 = vsub.s32 1, %v4252
    %v4254 = vrot.slane %v3831, %v4253
    %v4255 = vadd.f32 %v4242, %v4164
    %v4256 = vadd.f32 %v4246, %v4166
    %v4257 = vadd.f32 %v4250, %v4235
    %v4258 = vadd.f32 %v4254, %v4237
    %v4259 = vxor.u32 %v4255, 2147483648
    %v4260 = vmul.f32 %v4259, 1.442695
    %v4261 = vpow.pop %v4260
    %v4262 = vadd.f32 %v4261, 1.0
    %v4263 = vrcp.pop %v4262
    %v4264 = vmul.f32 1.0, %v4263
    %v4265 = vxor.u32 %v4256, 2147483648
    %v4266 = vmul.f32 %v4265, 1.442695
    %v4267 = vpow.pop %v4266
    %v4268 = vadd.f32 %v4267, 1.0
    %v4269 = vrcp.pop %v4268
    %v4270 = vmul.f32 1.0, %v4269
    %v4271 = vtanh.pop %v4257
    %v4272 = vxor.u32 %v4258, 2147483648
    %v4273 = vmul.f32 %v4272, 1.442695
    %v4274 = vpow.pop %v4273
    %v4275 = vadd.f32 %v4274, 1.0
    %v4276 = vrcp.pop %v4275
    %v4277 = vmul.f32 1.0, %v4276
    %v4278 = vmul.f32 %v4270, %v4016
    %v4279 = vmul.f32 %v4264, %v4271
    %v4280 = vadd.f32 %v4278, %v4279
    %v4281 = vtanh.pop %v4280
    %v4282 = vmul.f32 %v4277, %v4281
    %4283 = vmatprep.subr.mxu0 0.0
    %4284 = vmatpush1.msra.mxu0 %v466
    %4285 = vmatprep.subr.mxu0 0.0
    %4286 = vmatpush1.msra.mxu0 %v465
    %4287 = vmatprep.subr.mxu0 0.0
    %4288 = vmatpush1.msra.mxu0 %v464
    %4289 = vmatprep.subr.mxu0 0.0
    %4290 = vmatpush1.msra.mxu0 %v463
    %4291 = vmatprep.subr.mxu0 0.0
    %4292 = vmatpush1.msra.mxu0 %v462
    %4293 = vmatprep.subr.mxu0 0.0
    %4294 = vmatpush1.msra.mxu0 %v461
    %4295 = vmatprep.subr.mxu0 0.0
    %4296 = vmatpush1.msra.mxu0 %v460
    %4297 = vmatprep.subr.mxu0 0.0
    %4298 = vmatpush1.msra.mxu0 %v459
    %4299 = vmatprep.subr.mxu0 0.0
    %4300 = vmatpush1.msra.mxu0 %v458
    %4301 = vmatprep.subr.mxu0 0.0
    %4302 = vmatpush1.msra.mxu0 %v457
    %4303 = vmatprep.subr.mxu0 0.0
    %4304 = vmatpush1.msra.mxu0 %v456
    %4305 = vmatprep.subr.mxu0 0.0
    %4306 = vmatpush1.msra.mxu0 %v455
    %4307 = vmatprep.subr.mxu0 0.0
    %4308 = vmatpush1.msra.mxu0 %v454
    %4309 = vmatprep.subr.mxu0 0.0
    %4310 = vmatpush1.msra.mxu0 %v453
    %4311 = vmatprep.subr.mxu0 0.0
    %4312 = vmatpush1.msra.mxu0 %v452
    %4313 = vmatprep.subr.mxu0 0.0
    %4314 = vmatpush1.msra.mxu0 %v451
    %4315 = vmatprep.subr.mxu0 0.0
    %4316 = vmatpush2.msra.mxu0 0.0
    %4317 = vmatprep.subr.mxu0 0.0
    %4318 = vmatpush2.msra.mxu0 0.0
    %4319 = vmatprep.subr.mxu0 0.0
    %4320 = vmatpush2.msra.mxu0 0.0
    %4321 = vmatprep.subr.mxu0 0.0
    %4322 = vmatpush2.msra.mxu0 0.0
    %4323 = vmatprep.subr.mxu0 0.0
    %4324 = vmatpush2.msra.mxu0 0.0
    %4325 = vmatprep.subr.mxu0 0.0
    %4326 = vmatpush2.msra.mxu0 0.0
    %4327 = vmatprep.subr.mxu0 0.0
    %4328 = vmatpush2.msra.mxu0 0.0
    %4329 = vmatprep.subr.mxu0 0.0
    %4330 = vmatpush2.msra.mxu0 0.0
    %4331 = vmatprep.subr.mxu0 0.0
    %4332 = vmatpush2.msra.mxu0 0.0
    %4333 = vmatprep.subr.mxu0 0.0
    %4334 = vmatpush2.msra.mxu0 0.0
    %4335 = vmatprep.subr.mxu0 0.0
    %4336 = vmatpush2.msra.mxu0 0.0
    %4337 = vmatprep.subr.mxu0 0.0
    %4338 = vmatpush2.msra.mxu0 0.0
    %4339 = vmatprep.subr.mxu0 0.0
    %4340 = vmatpush2.msra.mxu0 0.0
    %4341 = vmatprep.subr.mxu0 0.0
    %4342 = vmatpush2.msra.mxu0 0.0
    %4343 = vmatprep.subr.mxu0 0.0
    %4344 = vmatpush2.msra.mxu0 0.0
    %4345 = vmatprep.subr.mxu0 0.0
    %4346 = vmatpush2.msra.mxu0 0.0
    %4347 = vmatprep.mubr.f32.mxu0 0.0
    %4348 = vmatmul.mubr.f32.gmra.mxu0 %v4282
    %v4349 = vpop.f32.mrf.mxu0
    %v4350 = vadd.f32 %v4023, %v4349
    %v4351 = vpop.f32.mrf.mxu0
    %4352 = vdwg.mxu0
    %s4353 = scalar_lea.vmem %s13, 8
    %4354 = vst.msk [vmem:[%s4353] sm:$0x1f] %vm4095, %v4350
    // Predicated region
    $region70: #{autoencoder_forward.1} parent=1 // pred_check
      _
    $region71: #{autoencoder_forward.1} parent=1 // pred_check_branch
      %4356 = sbr.rel (0) target = $region73
    $region72: #{autoencoder_forward.1} parent=1 // pred_region
      %s4358 = ssub.s32 32, 32
      %4359 = vsyncadd [#allocation4], %s4358
      %s4361 = sshll.u32 [#allocation11], 4
      %s4362 = int_to_ptr.vmem [resolvable:$true] %s4361
      %4364 = dma.vmem_to_hbm [thread:$0]  %s4362, 32, %s12, [#allocation4]
    $region73: #{autoencoder_forward.1} parent=1 // pred_fallthru
      _
    // Predicated region
    $region74: #{autoencoder_forward.1} parent=1 // pred_check
      _
    $region75: #{autoencoder_forward.1} parent=1 // pred_check_branch
      %4366 = sbr.rel (0) target = $region77
    $region76: #{autoencoder_forward.1} parent=1 // pred_region
      _
    $region77: #{autoencoder_forward.1} parent=1 // pred_fallthru
      _
    // Predicated region
    $region78: #{autoencoder_forward.1} parent=1 // pred_check
      _
    $region79: #{autoencoder_forward.1} parent=1 // pred_check_branch
      %4368 = sbr.rel (0) target = $region81
    $region80: #{autoencoder_forward.1} parent=1 // pred_region
      %4369 = dma.done [#allocation4], 32
    $region81: #{autoencoder_forward.1} parent=1 // pred_fallthru
      _
    // Predicated region
    $region82: #{autoencoder_forward.1} parent=1 // pred_check
      _
    $region83: #{autoencoder_forward.1} parent=1 // pred_check_branch
      %4371 = sbr.rel (0) target = $region85
    $region84: #{autoencoder_forward.1} parent=1 // pred_region
      _
    $region85: #{autoencoder_forward.1} parent=1 // pred_fallthru
      _
    %4372 = vsyncpa [#allocation3], 1
    %4373 = vsyncpa [#allocation6], 1
    %4374 = vsyncpa [#allocation9], 1
    %4375 = vsyncpa [#allocation4], 1

</llo_original>
